<compile_context>
chip_gen: v7x
topology: tpu7x:2x2x1
jax: 0.10.0
libtpu: 0.0.40
codegen_flags: <defaults>
</compile_context>

<pallas_src>
import functools

import jax
import jax.numpy as jnp
from jax.experimental import pallas as pl
from jax.experimental.pallas import tpu as pltpu

IN_FEATURES = 32 * 32 * 3   # 3072 (already a multiple of 128)
H1, H2, OUT = 500, 100, 10
# Lane-aligned padded feature dims (multiples of 128).
H1_PAD, H2_PAD, OUT_PAD = 512, 128, 128

# Max rows per grid step. 512 keeps per-step VMEM (~2x 6 MiB f32 x-tile +
# ~6.6 MiB double-buffered bf16 weights + intermediates) well under v7x's
# 64 MiB/TC while amortizing the ~0.35us/step pipeline overhead.
BATCH_TILE = 512
SUBLANE = 16  # bf16 minimum tile is (16, 128): use 16-row floor for batch tiles


def _fcnet_kernel(x_ref, w1_ref, b1_ref, w2_ref, b2_ref, w3_ref, b3_ref, o_ref,
                  *, activation):
    # x arrives as f32 (cheapest end-to-end HBM path); cast to bf16 here to
    # feed the MXU. All dots accumulate in f32; bias add + activation stay in
    # f32 (correct for v5e, which has no bf16 VPU/EUP), then cast back to bf16
    # for the next matmul.
    x = x_ref[...].astype(jnp.bfloat16)

    h1 = jnp.dot(x, w1_ref[...], preferred_element_type=jnp.float32)
    h1 = activation(h1 + b1_ref[...]).astype(jnp.bfloat16)

    h2 = jnp.dot(h1, w2_ref[...], preferred_element_type=jnp.float32)
    h2 = activation(h2 + b2_ref[...]).astype(jnp.bfloat16)

    h3 = jnp.dot(h2, w3_ref[...], preferred_element_type=jnp.float32)
    o_ref[...] = (h3 + b3_ref[...]).astype(o_ref.dtype)


def _pad_to(a, shape):
    return jnp.pad(a, [(0, t - s) for s, t in zip(a.shape, shape)])


def _round_up(x, m):
    return -(-x // m) * m


def prepare_params(params):
    """Pad + cast weights ONCE (hoisted out of the per-call hot path).

    Zero-padded weight rows/cols keep the math exact: padded hidden columns
    only ever multiply zero weight rows (true even for sigmoid, whose 0.5
    values hit zero rows of the next weight matrix). Padded batch rows are
    sliced away in the wrapper.
    """
    return {
        "w1": _pad_to(params["w1"], (IN_FEATURES, H1_PAD)).astype(jnp.bfloat16),
        "w2": _pad_to(params["w2"], (H1_PAD, H2_PAD)).astype(jnp.bfloat16),
        "w3": _pad_to(params["w3"], (H2_PAD, OUT_PAD)).astype(jnp.bfloat16),
        "b1": _pad_to(params["b1"], (1, H1_PAD)).astype(jnp.float32),
        "b2": _pad_to(params["b2"], (1, H2_PAD)).astype(jnp.float32),
        "b3": _pad_to(params["b3"], (1, OUT_PAD)).astype(jnp.float32),
    }


def _batch_tiling(b):
    """Pick (batch_tile, padded_batch) minimizing padding, grid >= 2 if possible."""
    # Enough steps to bound the tile at BATCH_TILE; at least 2 steps whenever
    # the batch can be split into two >= SUBLANE tiles (v7x megacore sharding).
    n_steps = max(pl.cdiv(b, BATCH_TILE), 2 if b > SUBLANE else 1)
    tb = _round_up(pl.cdiv(b, n_steps), SUBLANE)
    b_pad = _round_up(b, tb)
    return tb, b_pad


def fcnet_forward(x_nchw, prepared_params, activation_function_name="relu"):
    """Forward pass of FCNet.

    x_nchw: (B, 3, 32, 32) float32, NCHW like PyTorch.
    prepared_params: output of prepare_params() (padded bf16 weights, f32 biases).
    """
    if activation_function_name == "relu":
        act = lambda v: jnp.maximum(v, 0.0)
    elif activation_function_name == "sigmoid":
        act = jax.nn.sigmoid
    else:
        raise ValueError(activation_function_name)

    p = prepared_params
    b = x_nchw.shape[0]
    x_flat = x_nchw.reshape(b, -1).astype(jnp.float32)  # same order as torch .view on NCHW
    assert x_flat.shape[1] == IN_FEATURES

    tb, b_pad = _batch_tiling(b)
    x_p = x_flat if b_pad == b else _pad_to(x_flat, (b_pad, IN_FEATURES))

    kernel = functools.partial(_fcnet_kernel, activation=act)

    flops = 2 * b_pad * (IN_FEATURES * H1_PAD + H1_PAD * H2_PAD + H2_PAD * OUT_PAD)
    transcendentals = (b_pad * (H1_PAD + H2_PAD)
                       if activation_function_name == "sigmoid" else 0)
    bytes_accessed = (
        x_p.size * 4                                         # f32 input stream
        + (p["w1"].size + p["w2"].size + p["w3"].size) * 2   # bf16 weights (once)
        + (p["b1"].size + p["b2"].size + p["b3"].size) * 4   # f32 biases (once)
        + b_pad * OUT_PAD * 2                                # bf16 output slab
    )

    out_padded = pl.pallas_call(
        kernel,
        out_shape=jax.ShapeDtypeStruct((b_pad, OUT_PAD), jnp.bfloat16),
        grid=(b_pad // tb,),
        in_specs=[
            pl.BlockSpec((tb, IN_FEATURES), lambda i: (i, 0)),      # x tile (pipelined, f32)
            pl.BlockSpec((IN_FEATURES, H1_PAD), lambda i: (0, 0)),  # W1 (DMA'd once, resident)
            pl.BlockSpec((1, H1_PAD), lambda i: (0, 0)),            # b1
            pl.BlockSpec((H1_PAD, H2_PAD), lambda i: (0, 0)),       # W2
            pl.BlockSpec((1, H2_PAD), lambda i: (0, 0)),            # b2
            pl.BlockSpec((H2_PAD, OUT_PAD), lambda i: (0, 0)),      # W3
            pl.BlockSpec((1, OUT_PAD), lambda i: (0, 0)),           # b3
        ],
        out_specs=pl.BlockSpec((tb, OUT_PAD), lambda i: (i, 0)),
        compiler_params=pltpu.CompilerParams(
            dimension_semantics=("parallel",),   # megacore sharding over batch tiles
            vmem_limit_bytes=48 << 20,           # headroom; actual use ~22 MiB at tb=512
        ),
        cost_estimate=pl.CostEstimate(
            flops=flops,
            transcendentals=transcendentals,
            bytes_accessed=bytes_accessed,
        ),
    )(x_p, p["w1"], p["b1"], p["w2"], p["b2"], p["w3"], p["b3"])

    # Slice away batch padding and padded output columns -> (B, 10) f32.
    return out_padded[:b, :OUT].astype(jnp.float32)


def init_params(key):
    """Deterministic init mimicking nn.Linear's U(-1/sqrt(fan_in), 1/sqrt(fan_in))."""
    k = jax.random.split(key, 6)

    def linear(kw, kb, fan_in, fan_out):
        bound = 1.0 / jnp.sqrt(fan_in)
        w = jax.random.uniform(kw, (fan_in, fan_out), jnp.float32, -bound, bound)
        bvec = jax.random.uniform(kb, (1, fan_out), jnp.float32, -bound, bound)
        return w, bvec

    w1, b1 = linear(k[0], k[1], IN_FEATURES, H1)
    w2, b2 = linear(k[2], k[3], H1, H2)
    w3, b3 = linear(k[4], k[5], H2, OUT)
    return {"w1": w1, "b1": b1, "w2": w2, "b2": b2, "w3": w3, "b3": b3}


def _reference(x_nchw, params, activation_function_name="relu"):
    act = (lambda v: jnp.maximum(v, 0.0)) if activation_function_name == "relu" \
        else jax.nn.sigmoid
    x = x_nchw.reshape(x_nchw.shape[0], -1)
    h = act(x @ params["w1"] + params["b1"])
    h = act(h @ params["w2"] + params["b2"])
    return h @ params["w3"] + params["b3"]


if __name__ == "__main__":
    key = jax.random.PRNGKey(0)
    kx, kp = jax.random.split(key)

    # FCNet expects 32*32*3 = 3072 flattened features -> input (B, 3, 32, 32).
    x = jax.random.normal(kx, (4, 3, 32, 32), jnp.float32)
    params = init_params(kp)
    prepared = jax.block_until_ready(prepare_params(params))  # one-time prep

    for act_name in ("relu", "sigmoid"):
        out = jax.block_until_ready(fcnet_forward(x, prepared, act_name))
        ref = _reference(x, params, act_name)
        assert out.shape == (4, OUT), out.shape
        # bf16 weights/inputs/output with f32 accumulation -> small drift vs f32 ref.
        err = float(jnp.max(jnp.abs(out - ref)))
        assert jnp.allclose(out, ref, atol=5e-2, rtol=5e-2), \
            f"{act_name}: max abs err {err}"

    print("KERNEL_OK")
</pallas_src>

<mosaic_0001>
module attributes {stable_mosaic.version = 11 : i64} {
  func.func @_fcnet_kernel(%arg0: i32, %arg1: memref<16x3072xf32, #tpu.memory_space<vmem>>, %arg2: memref<3072x512xbf16, #tpu.memory_space<vmem>>, %arg3: memref<1x512xf32, #tpu.memory_space<vmem>>, %arg4: memref<512x128xbf16, #tpu.memory_space<vmem>>, %arg5: memref<1x128xf32, #tpu.memory_space<vmem>>, %arg6: memref<128x128xbf16, #tpu.memory_space<vmem>>, %arg7: memref<1x128xf32, #tpu.memory_space<vmem>>, %arg8: memref<16x128xbf16, #tpu.memory_space<vmem>>) attributes {dimension_semantics = [#tpu.dimension_semantics<parallel>], iteration_bounds = array<i64: 1>, scalar_prefetch = 0 : i64, scratch_operands = 0 : i64, tpu.core_type = #tpu.core_type<tc>, window_params = [{transform_indices = @transform_0, window_bounds = array<i64: 16, 3072>}, {pipeline_mode = #tpu.pipeline_mode<synchronous>, transform_indices = @transform_1, window_bounds = array<i64: 3072, 512>}, {pipeline_mode = #tpu.pipeline_mode<synchronous>, transform_indices = @transform_2, window_bounds = array<i64: 1, 512>}, {pipeline_mode = #tpu.pipeline_mode<synchronous>, transform_indices = @transform_3, window_bounds = array<i64: 512, 128>}, {pipeline_mode = #tpu.pipeline_mode<synchronous>, transform_indices = @transform_4, window_bounds = array<i64: 1, 128>}, {pipeline_mode = #tpu.pipeline_mode<synchronous>, transform_indices = @transform_5, window_bounds = array<i64: 128, 128>}, {pipeline_mode = #tpu.pipeline_mode<synchronous>, transform_indices = @transform_6, window_bounds = array<i64: 1, 128>}, {transform_indices = @transform_7, window_bounds = array<i64: 16, 128>}]} {
    %c0 = arith.constant 0 : index
    %c0_0 = arith.constant 0 : index
    %0 = vector.load %arg1[%c0, %c0_0] : memref<16x3072xf32, #tpu.memory_space<vmem>>, vector<16x3072xf32>
    %1 = arith.truncf %0 : vector<16x3072xf32> to vector<16x3072xbf16>
    %c0_1 = arith.constant 0 : index
    %c0_2 = arith.constant 0 : index
    %2 = vector.load %arg2[%c0_1, %c0_2] : memref<3072x512xbf16, #tpu.memory_space<vmem>>, vector<3072x512xbf16>
    %cst = arith.constant dense<0.000000e+00> : vector<16x512xf32>
    %3 = tpu.matmul %1, %2, %cst {dimension_numbers = #tpu.dot_dimension_numbers<[1], [0], [0], [1], [0, 0, 1, 1], [], []>} : vector<16x3072xbf16>, vector<3072x512xbf16>, vector<16x512xf32> -> vector<16x512xf32>
    %c0_3 = arith.constant 0 : index
    %c0_4 = arith.constant 0 : index
    %4 = vector.load %arg3[%c0_3, %c0_4] : memref<1x512xf32, #tpu.memory_space<vmem>>, vector<1x512xf32>
    %5 = vector.broadcast %4 : vector<1x512xf32> to vector<16x512xf32>
    %6 = arith.addf %3, %5 : vector<16x512xf32>
    %cst_5 = arith.constant 0.000000e+00 : f32
    %7 = vector.broadcast %cst_5 : f32 to vector<16x512xf32>
    %8 = arith.maximumf %6, %7 : vector<16x512xf32>
    %9 = arith.truncf %8 : vector<16x512xf32> to vector<16x512xbf16>
    %c0_6 = arith.constant 0 : index
    %c0_7 = arith.constant 0 : index
    %10 = vector.load %arg4[%c0_6, %c0_7] : memref<512x128xbf16, #tpu.memory_space<vmem>>, vector<512x128xbf16>
    %cst_8 = arith.constant dense<0.000000e+00> : vector<16x128xf32>
    %11 = tpu.matmul %9, %10, %cst_8 {dimension_numbers = #tpu.dot_dimension_numbers<[1], [0], [0], [1], [0, 0, 1, 1], [], []>} : vector<16x512xbf16>, vector<512x128xbf16>, vector<16x128xf32> -> vector<16x128xf32>
    %c0_9 = arith.constant 0 : index
    %c0_10 = arith.constant 0 : index
    %12 = vector.load %arg5[%c0_9, %c0_10] : memref<1x128xf32, #tpu.memory_space<vmem>>, vector<1x128xf32>
    %13 = vector.broadcast %12 : vector<1x128xf32> to vector<16x128xf32>
    %14 = arith.addf %11, %13 : vector<16x128xf32>
    %cst_11 = arith.constant 0.000000e+00 : f32
    %15 = vector.broadcast %cst_11 : f32 to vector<16x128xf32>
    %16 = arith.maximumf %14, %15 : vector<16x128xf32>
    %17 = arith.truncf %16 : vector<16x128xf32> to vector<16x128xbf16>
    %c0_12 = arith.constant 0 : index
    %c0_13 = arith.constant 0 : index
    %18 = vector.load %arg6[%c0_12, %c0_13] : memref<128x128xbf16, #tpu.memory_space<vmem>>, vector<128x128xbf16>
    %cst_14 = arith.constant dense<0.000000e+00> : vector<16x128xf32>
    %19 = tpu.matmul %17, %18, %cst_14 {dimension_numbers = #tpu.dot_dimension_numbers<[1], [0], [0], [1], [0, 0, 1, 1], [], []>} : vector<16x128xbf16>, vector<128x128xbf16>, vector<16x128xf32> -> vector<16x128xf32>
    %c0_15 = arith.constant 0 : index
    %c0_16 = arith.constant 0 : index
    %20 = vector.load %arg7[%c0_15, %c0_16] : memref<1x128xf32, #tpu.memory_space<vmem>>, vector<1x128xf32>
    %21 = vector.broadcast %20 : vector<1x128xf32> to vector<16x128xf32>
    %22 = arith.addf %19, %21 : vector<16x128xf32>
    %23 = arith.truncf %22 : vector<16x128xf32> to vector<16x128xbf16>
    %c0_17 = arith.constant 0 : index
    %c0_18 = arith.constant 0 : index
    %24 = vector.load %arg8[%c0_17, %c0_18] : memref<16x128xbf16, #tpu.memory_space<vmem>>, vector<16x128xbf16>
    tpu.vector_store %arg8[%c0_17, %c0_18], %23 {strides = array<i32>} : memref<16x128xbf16, #tpu.memory_space<vmem>>, vector<16x128xbf16>,
    return
  }
  func.func @transform_0(%arg0: i32) -> (i32, i32) {
    %c0_i32 = arith.constant 0 : i32
    %c0_i32_0 = arith.constant 0 : i32
    return %arg0, %c0_i32 : i32, i32
  }
  func.func @transform_1(%arg0: i32) -> (i32, i32) {
    %c0_i32 = arith.constant 0 : i32
    %c0_i32_0 = arith.constant 0 : i32
    %c0_i32_1 = arith.constant 0 : i32
    return %c0_i32, %c0_i32_0 : i32, i32
  }
  func.func @transform_2(%arg0: i32) -> (i32, i32) {
    %c0_i32 = arith.constant 0 : i32
    %c0_i32_0 = arith.constant 0 : i32
    %c0_i32_1 = arith.constant 0 : i32
    return %c0_i32, %c0_i32_0 : i32, i32
  }
  func.func @transform_3(%arg0: i32) -> (i32, i32) {
    %c0_i32 = arith.constant 0 : i32
    %c0_i32_0 = arith.constant 0 : i32
    %c0_i32_1 = arith.constant 0 : i32
    return %c0_i32, %c0_i32_0 : i32, i32
  }
  func.func @transform_4(%arg0: i32) -> (i32, i32) {
    %c0_i32 = arith.constant 0 : i32
    %c0_i32_0 = arith.constant 0 : i32
    %c0_i32_1 = arith.constant 0 : i32
    return %c0_i32, %c0_i32_0 : i32, i32
  }
  func.func @transform_5(%arg0: i32) -> (i32, i32) {
    %c0_i32 = arith.constant 0 : i32
    %c0_i32_0 = arith.constant 0 : i32
    %c0_i32_1 = arith.constant 0 : i32
    return %c0_i32, %c0_i32_0 : i32, i32
  }
  func.func @transform_6(%arg0: i32) -> (i32, i32) {
    %c0_i32 = arith.constant 0 : i32
    %c0_i32_0 = arith.constant 0 : i32
    %c0_i32_1 = arith.constant 0 : i32
    return %c0_i32, %c0_i32_0 : i32, i32
  }
  func.func @transform_7(%arg0: i32) -> (i32, i32) {
    %c0_i32 = arith.constant 0 : i32
    %c0_i32_0 = arith.constant 0 : i32
    return %arg0, %c0_i32 : i32, i32
  }
}

</mosaic_0001>

<llo_original>
// kernel: tpu_custom_call.1
$region0: #{tpu_custom_call.1}
  #allocation0 [shape = 'u32[]', space=smem, size = 0x4, offset = 0x4, fixed_abs, tag = 'smem constant byte address 0x4 - core index']
  #allocation1 [shape = 'u32[144,128]{1,0:T(1,128)}', space=vmem, size = 0x12000, scoped, tag = 'internal scratch']
  %s0 = inlined_call_operand.hbm [shape: f32[16,3072], index: 0, kind: input, shape index: {}]
  %s1 = inlined_call_operand.hbm [shape: bf16[3072,512], index: 1, kind: input, shape index: {}]
  %s2 = inlined_call_operand.hbm [shape: f32[1,512], index: 2, kind: input, shape index: {}]
  %s3 = inlined_call_operand.hbm [shape: bf16[512,128], index: 3, kind: input, shape index: {}]
  %s4 = inlined_call_operand.hbm [shape: f32[1,128], index: 4, kind: input, shape index: {}]
  %s5 = inlined_call_operand.hbm [shape: bf16[128,128], index: 5, kind: input, shape index: {}]
  %s6 = inlined_call_operand.hbm [shape: f32[1,128], index: 6, kind: input, shape index: {}]
  %s7 = inlined_call_operand.hbm [shape: bf16[16,128], index: 7, kind: output, shape index: {}]
  %s8 = sld [smem:[#allocation0]]
  $region66: #{tpu_custom_call.1} parent=0
    _
  %s10 = ssub.s32 1, %s8
  %s11 = scalar_select 0, %s10, %s8
  $region1: #{tpu_custom_call.1} parent=0
    #allocation2 [shape = 'u8[196608]{0}', space=vmem, size = 0x30000, scoped, tag = 'input window, operand 0, single buffered']
    #allocation3 [shape = 's32[1]{0}', space=sflag, size = 0x4, scoped, tag = 'scoped memory for tpu_custom_call.1']
    #allocation4 [shape = 's32[1]{0}', space=sflag, size = 0x4, scoped, tag = 'scoped memory for tpu_custom_call.1']
    #allocation5 [shape = 'u8[3145728]{0}', space=vmem, size = 0x300000, scoped, tag = 'input window, operand 1, single buffered']
    #allocation6 [shape = 's32[1]{0}', space=sflag, size = 0x4, scoped, tag = 'scoped memory for tpu_custom_call.1']
    #allocation7 [shape = 'u8[2048]{0}', space=vmem, size = 0x800, scoped, tag = 'input window, operand 2, single buffered']
    #allocation8 [shape = 'u8[131072]{0}', space=vmem, size = 0x20000, scoped, tag = 'input window, operand 3, single buffered']
    #allocation9 [shape = 's32[1]{0}', space=sflag, size = 0x4, scoped, tag = 'scoped memory for tpu_custom_call.1']
    #allocation10 [shape = 'u8[512]{0}', space=vmem, size = 0x400, scoped, tag = 'input window, operand 4, single buffered']
    #allocation11 [shape = 'u8[32768]{0}', space=vmem, size = 0x8000, scoped, tag = 'input window, operand 5, single buffered']
    #allocation12 [shape = 's32[1]{0}', space=sflag, size = 0x4, scoped, tag = 'scoped memory for tpu_custom_call.1']
    #allocation13 [shape = 'u8[512]{0}', space=vmem, size = 0x400, scoped, tag = 'input window, operand 6, single buffered']
    #allocation14 [shape = 'u8[4096]{0}', space=vmem, size = 0x1000, scoped, tag = 'output window, operand 0, single buffered']
    %12 = vsyncpa [#allocation3], 0
    %13 = vsyncpa [#allocation6], 0
    %14 = vsyncpa [#allocation9], 0
    %15 = vsyncpa [#allocation12], 0
    %16 = vsyncpa [#allocation4], 0
    // Predicated region
    $region2: #{tpu_custom_call.1} parent=1 // pred_check
      _
    $region3: #{tpu_custom_call.1} parent=1 // pred_check_branch
      %18 = sbr.rel (0) target = $region5
    $region4: #{tpu_custom_call.1} parent=1 // pred_region
      %s20 = ssub.s32 6144, 6144
      %21 = vsyncadd [#allocation3], %s20
      %s22 = sshll.u32 [#allocation2], 4
      %s23 = int_to_ptr.vmem [resolvable:$true] %s22
      %28 = dma.hbm_to_vmem [thread:$0]  %s0, 6144, %s23, [#allocation3], 3072, 3072, 192
    $region5: #{tpu_custom_call.1} parent=1 // pred_fallthru
      _
    // Predicated region
    $region6: #{tpu_custom_call.1} parent=1 // pred_check
      _
    $region7: #{tpu_custom_call.1} parent=1 // pred_check_branch
      %30 = sbr.rel (0) target = $region9
    $region8: #{tpu_custom_call.1} parent=1 // pred_region
      %s32 = ssub.s32 98304, 98304
      %33 = vsyncadd [#allocation6], %s32
      %s34 = sshll.u32 [#allocation5], 4
      %s35 = int_to_ptr.vmem [resolvable:$true] %s34
      %40 = dma.hbm_to_vmem [thread:$0]  %s1, 98304, %s35, [#allocation6], 256, 256, 16
    $region9: #{tpu_custom_call.1} parent=1 // pred_fallthru
      _
    // Predicated region
    $region10: #{tpu_custom_call.1} parent=1 // pred_check
      _
    $region11: #{tpu_custom_call.1} parent=1 // pred_check_branch
      %42 = sbr.rel (0) target = $region13
    $region12: #{tpu_custom_call.1} parent=1 // pred_region
      %s44 = ssub.s32 64, 64
      %45 = vsyncadd [#allocation6], %s44
      %s47 = sshll.u32 [#allocation7], 4
      %s48 = int_to_ptr.vmem [resolvable:$true] %s47
      %50 = dma.hbm_to_vmem [thread:$0]  %s2, 64, %s48, [#allocation6]
    $region13: #{tpu_custom_call.1} parent=1 // pred_fallthru
      _
    // Predicated region
    $region14: #{tpu_custom_call.1} parent=1 // pred_check
      _
    $region15: #{tpu_custom_call.1} parent=1 // pred_check_branch
      %52 = sbr.rel (0) target = $region17
    $region16: #{tpu_custom_call.1} parent=1 // pred_region
      %s54 = ssub.s32 4096, 4096
      %55 = vsyncadd [#allocation9], %s54
      %s56 = sshll.u32 [#allocation8], 4
      %s57 = int_to_ptr.vmem [resolvable:$true] %s56
      %62 = dma.hbm_to_vmem [thread:$0]  %s3, 4096, %s57, [#allocation9], 64, 64, 4
    $region17: #{tpu_custom_call.1} parent=1 // pred_fallthru
      _
    // Predicated region
    $region18: #{tpu_custom_call.1} parent=1 // pred_check
      _
    $region19: #{tpu_custom_call.1} parent=1 // pred_check_branch
      %64 = sbr.rel (0) target = $region21
    $region20: #{tpu_custom_call.1} parent=1 // pred_region
      %s66 = ssub.s32 16, 16
      %67 = vsyncadd [#allocation9], %s66
      %s69 = sshll.u32 [#allocation10], 4
      %s70 = int_to_ptr.vmem [resolvable:$true] %s69
      %72 = dma.hbm_to_vmem [thread:$0]  %s4, 16, %s70, [#allocation9]
    $region21: #{tpu_custom_call.1} parent=1 // pred_fallthru
      _
    // Predicated region
    $region22: #{tpu_custom_call.1} parent=1 // pred_check
      _
    $region23: #{tpu_custom_call.1} parent=1 // pred_check_branch
      %74 = sbr.rel (0) target = $region25
    $region24: #{tpu_custom_call.1} parent=1 // pred_region
      %s76 = ssub.s32 1024, 1024
      %77 = vsyncadd [#allocation12], %s76
      %s78 = sshll.u32 [#allocation11], 4
      %s79 = int_to_ptr.vmem [resolvable:$true] %s78
      %84 = dma.hbm_to_vmem [thread:$0]  %s5, 1024, %s79, [#allocation12], 64, 64, 4
    $region25: #{tpu_custom_call.1} parent=1 // pred_fallthru
      _
    // Predicated region
    $region26: #{tpu_custom_call.1} parent=1 // pred_check
      _
    $region27: #{tpu_custom_call.1} parent=1 // pred_check_branch
      %86 = sbr.rel (0) target = $region29
    $region28: #{tpu_custom_call.1} parent=1 // pred_region
      %s88 = ssub.s32 16, 16
      %89 = vsyncadd [#allocation12], %s88
      %s91 = sshll.u32 [#allocation13], 4
      %s92 = int_to_ptr.vmem [resolvable:$true] %s91
      %94 = dma.hbm_to_vmem [thread:$0]  %s6, 16, %s92, [#allocation12]
    $region29: #{tpu_custom_call.1} parent=1 // pred_fallthru
      _
    // Predicated region
    $region30: #{tpu_custom_call.1} parent=1 // pred_check
      _
    $region31: #{tpu_custom_call.1} parent=1 // pred_check_branch
      %96 = sbr.rel (0) target = $region33
    $region32: #{tpu_custom_call.1} parent=1 // pred_region
      %97 = dma.done [#allocation3], 6144
    $region33: #{tpu_custom_call.1} parent=1 // pred_fallthru
      _
    // Predicated region
    $region34: #{tpu_custom_call.1} parent=1 // pred_check
      _
    $region35: #{tpu_custom_call.1} parent=1 // pred_check_branch
      %99 = sbr.rel (0) target = $region37
    $region36: #{tpu_custom_call.1} parent=1 // pred_region
      %100 = dma.done [#allocation6], 98304
    $region37: #{tpu_custom_call.1} parent=1 // pred_fallthru
      _
    // Predicated region
    $region38: #{tpu_custom_call.1} parent=1 // pred_check
      _
    $region39: #{tpu_custom_call.1} parent=1 // pred_check_branch
      %102 = sbr.rel (0) target = $region41
    $region40: #{tpu_custom_call.1} parent=1 // pred_region
      %103 = dma.done [#allocation6], 64
    $region41: #{tpu_custom_call.1} parent=1 // pred_fallthru
      _
    // Predicated region
    $region42: #{tpu_custom_call.1} parent=1 // pred_check
      _
    $region43: #{tpu_custom_call.1} parent=1 // pred_check_branch
      %105 = sbr.rel (0) target = $region45
    $region44: #{tpu_custom_call.1} parent=1 // pred_region
      %106 = dma.done [#allocation9], 4096
    $region45: #{tpu_custom_call.1} parent=1 // pred_fallthru
      _
    // Predicated region
    $region46: #{tpu_custom_call.1} parent=1 // pred_check
      _
    $region47: #{tpu_custom_call.1} parent=1 // pred_check_branch
      %108 = sbr.rel (0) target = $region49
    $region48: #{tpu_custom_call.1} parent=1 // pred_region
      %109 = dma.done [#allocation9], 16
    $region49: #{tpu_custom_call.1} parent=1 // pred_fallthru
      _
    // Predicated region
    $region50: #{tpu_custom_call.1} parent=1 // pred_check
      _
    $region51: #{tpu_custom_call.1} parent=1 // pred_check_branch
      %111 = sbr.rel (0) target = $region53
    $region52: #{tpu_custom_call.1} parent=1 // pred_region
      %112 = dma.done [#allocation12], 1024
    $region53: #{tpu_custom_call.1} parent=1 // pred_fallthru
      _
    // Predicated region
    $region54: #{tpu_custom_call.1} parent=1 // pred_check
      _
    $region55: #{tpu_custom_call.1} parent=1 // pred_check_branch
      %114 = sbr.rel (0) target = $region57
    $region56: #{tpu_custom_call.1} parent=1 // pred_region
      %115 = dma.done [#allocation12], 16
    $region57: #{tpu_custom_call.1} parent=1 // pred_fallthru
      _
    %v117 = vld [vmem:[#allocation2] sm:$0xff]
    %v118 = vld [vmem:[#allocation2 + $0x8] sm:$0xff]
    %v119 = vld [vmem:[#allocation2 + $0x10] sm:$0xff]
    %v120 = vld [vmem:[#allocation2 + $0x18] sm:$0xff]
    %v121 = vld [vmem:[#allocation2 + $0x20] sm:$0xff]
    %v122 = vld [vmem:[#allocation2 + $0x28] sm:$0xff]
    %v123 = vld [vmem:[#allocation2 + $0x30] sm:$0xff]
    %v124 = vld [vmem:[#allocation2 + $0x38] sm:$0xff]
    %v125 = vld [vmem:[#allocation2 + $0x40] sm:$0xff]
    %v126 = vld [vmem:[#allocation2 + $0x48] sm:$0xff]
    %v127 = vld [vmem:[#allocation2 + $0x50] sm:$0xff]
    %v128 = vld [vmem:[#allocation2 + $0x58] sm:$0xff]
    %v129 = vld [vmem:[#allocation2 + $0x60] sm:$0xff]
    %v130 = vld [vmem:[#allocation2 + $0x68] sm:$0xff]
    %v131 = vld [vmem:[#allocation2 + $0x70] sm:$0xff]
    %v132 = vld [vmem:[#allocation2 + $0x78] sm:$0xff]
    %v133 = vld [vmem:[#allocation2 + $0x80] sm:$0xff]
    %v134 = vld [vmem:[#allocation2 + $0x88] sm:$0xff]
    %v135 = vld [vmem:[#allocation2 + $0x90] sm:$0xff]
    %v136 = vld [vmem:[#allocation2 + $0x98] sm:$0xff]
    %v137 = vld [vmem:[#allocation2 + $0xa0] sm:$0xff]
    %v138 = vld [vmem:[#allocation2 + $0xa8] sm:$0xff]
    %v139 = vld [vmem:[#allocation2 + $0xb0] sm:$0xff]
    %v140 = vld [vmem:[#allocation2 + $0xb8] sm:$0xff]
    %v141 = vld [vmem:[#allocation2 + $0xc0] sm:$0xff]
    %v142 = vld [vmem:[#allocation2 + $0xc8] sm:$0xff]
    %v143 = vld [vmem:[#allocation2 + $0xd0] sm:$0xff]
    %v144 = vld [vmem:[#allocation2 + $0xd8] sm:$0xff]
    %v145 = vld [vmem:[#allocation2 + $0xe0] sm:$0xff]
    %v146 = vld [vmem:[#allocation2 + $0xe8] sm:$0xff]
    %v147 = vld [vmem:[#allocation2 + $0xf0] sm:$0xff]
    %v148 = vld [vmem:[#allocation2 + $0xf8] sm:$0xff]
    %v149 = vld [vmem:[#allocation2 + $0x100] sm:$0xff]
    %v150 = vld [vmem:[#allocation2 + $0x108] sm:$0xff]
    %v151 = vld [vmem:[#allocation2 + $0x110] sm:$0xff]
    %v152 = vld [vmem:[#allocation2 + $0x118] sm:$0xff]
    %v153 = vld [vmem:[#allocation2 + $0x120] sm:$0xff]
    %v154 = vld [vmem:[#allocation2 + $0x128] sm:$0xff]
    %v155 = vld [vmem:[#allocation2 + $0x130] sm:$0xff]
    %v156 = vld [vmem:[#allocation2 + $0x138] sm:$0xff]
    %v157 = vld [vmem:[#allocation2 + $0x140] sm:$0xff]
    %v158 = vld [vmem:[#allocation2 + $0x148] sm:$0xff]
    %v159 = vld [vmem:[#allocation2 + $0x150] sm:$0xff]
    %v160 = vld [vmem:[#allocation2 + $0x158] sm:$0xff]
    %v161 = vld [vmem:[#allocation2 + $0x160] sm:$0xff]
    %v162 = vld [vmem:[#allocation2 + $0x168] sm:$0xff]
    %v163 = vld [vmem:[#allocation2 + $0x170] sm:$0xff]
    %v164 = vld [vmem:[#allocation2 + $0x178] sm:$0xff]
    %v165 = vpack.c.bf16 %v141, %v117
    %v166 = vpack.c.bf16 %v142, %v118
    %v167 = vpack.c.bf16 %v143, %v119
    %v168 = vpack.c.bf16 %v144, %v120
    %v169 = vpack.c.bf16 %v145, %v121
    %v170 = vpack.c.bf16 %v146, %v122
    %v171 = vpack.c.bf16 %v147, %v123
    %v172 = vpack.c.bf16 %v148, %v124
    %v173 = vpack.c.bf16 %v149, %v125
    %v174 = vpack.c.bf16 %v150, %v126
    %v175 = vpack.c.bf16 %v151, %v127
    %v176 = vpack.c.bf16 %v152, %v128
    %v177 = vpack.c.bf16 %v153, %v129
    %v178 = vpack.c.bf16 %v154, %v130
    %v179 = vpack.c.bf16 %v155, %v131
    %v180 = vpack.c.bf16 %v156, %v132
    %v181 = vpack.c.bf16 %v157, %v133
    %v182 = vpack.c.bf16 %v158, %v134
    %v183 = vpack.c.bf16 %v159, %v135
    %v184 = vpack.c.bf16 %v160, %v136
    %v185 = vpack.c.bf16 %v161, %v137
    %v186 = vpack.c.bf16 %v162, %v138
    %v187 = vpack.c.bf16 %v163, %v139
    %v188 = vpack.c.bf16 %v164, %v140
    %v189 = vld [vmem:[#allocation5] sm:$0xff]
    %v190 = vld [vmem:[#allocation5 + $0x8] sm:$0xff]
    %v191 = vld [vmem:[#allocation5 + $0x10] sm:$0xff]
    %v192 = vld [vmem:[#allocation5 + $0x18] sm:$0xff]
    %v193 = vld [vmem:[#allocation5 + $0x20] sm:$0xff]
    %v194 = vld [vmem:[#allocation5 + $0x28] sm:$0xff]
    %v195 = vld [vmem:[#allocation5 + $0x30] sm:$0xff]
    %v196 = vld [vmem:[#allocation5 + $0x38] sm:$0xff]
    %v197 = vld [vmem:[#allocation5 + $0x40] sm:$0xff]
    %v198 = vld [vmem:[#allocation5 + $0x48] sm:$0xff]
    %v199 = vld [vmem:[#allocation5 + $0x50] sm:$0xff]
    %v200 = vld [vmem:[#allocation5 + $0x58] sm:$0xff]
    %v201 = vld [vmem:[#allocation5 + $0x60] sm:$0xff]
    %v202 = vld [vmem:[#allocation5 + $0x68] sm:$0xff]
    %v203 = vld [vmem:[#allocation5 + $0x70] sm:$0xff]
    %v204 = vld [vmem:[#allocation5 + $0x78] sm:$0xff]
    %v205 = vld [vmem:[#allocation5 + $0x80] sm:$0xff]
    %v206 = vld [vmem:[#allocation5 + $0x88] sm:$0xff]
    %v207 = vld [vmem:[#allocation5 + $0x90] sm:$0xff]
    %v208 = vld [vmem:[#allocation5 + $0x98] sm:$0xff]
    %v209 = vld [vmem:[#allocation5 + $0xa0] sm:$0xff]
    %v210 = vld [vmem:[#allocation5 + $0xa8] sm:$0xff]
    %v211 = vld [vmem:[#allocation5 + $0xb0] sm:$0xff]
    %v212 = vld [vmem:[#allocation5 + $0xb8] sm:$0xff]
    %v213 = vld [vmem:[#allocation5 + $0xc0] sm:$0xff]
    %v214 = vld [vmem:[#allocation5 + $0xc8] sm:$0xff]
    %v215 = vld [vmem:[#allocation5 + $0xd0] sm:$0xff]
    %v216 = vld [vmem:[#allocation5 + $0xd8] sm:$0xff]
    %v217 = vld [vmem:[#allocation5 + $0xe0] sm:$0xff]
    %v218 = vld [vmem:[#allocation5 + $0xe8] sm:$0xff]
    %v219 = vld [vmem:[#allocation5 + $0xf0] sm:$0xff]
    %v220 = vld [vmem:[#allocation5 + $0xf8] sm:$0xff]
    %v221 = vld [vmem:[#allocation5 + $0x100] sm:$0xff]
    %v222 = vld [vmem:[#allocation5 + $0x108] sm:$0xff]
    %v223 = vld [vmem:[#allocation5 + $0x110] sm:$0xff]
    %v224 = vld [vmem:[#allocation5 + $0x118] sm:$0xff]
    %v225 = vld [vmem:[#allocation5 + $0x120] sm:$0xff]
    %v226 = vld [vmem:[#allocation5 + $0x128] sm:$0xff]
    %v227 = vld [vmem:[#allocation5 + $0x130] sm:$0xff]
    %v228 = vld [vmem:[#allocation5 + $0x138] sm:$0xff]
    %v229 = vld [vmem:[#allocation5 + $0x140] sm:$0xff]
    %v230 = vld [vmem:[#allocation5 + $0x148] sm:$0xff]
    %v231 = vld [vmem:[#allocation5 + $0x150] sm:$0xff]
    %v232 = vld [vmem:[#allocation5 + $0x158] sm:$0xff]
    %v233 = vld [vmem:[#allocation5 + $0x160] sm:$0xff]
    %v234 = vld [vmem:[#allocation5 + $0x168] sm:$0xff]
    %v235 = vld [vmem:[#allocation5 + $0x170] sm:$0xff]
    %v236 = vld [vmem:[#allocation5 + $0x178] sm:$0xff]
    %v237 = vld [vmem:[#allocation5 + $0x180] sm:$0xff]
    %v238 = vld [vmem:[#allocation5 + $0x188] sm:$0xff]
    %v239 = vld [vmem:[#allocation5 + $0x190] sm:$0xff]
    %v240 = vld [vmem:[#allocation5 + $0x198] sm:$0xff]
    %v241 = vld [vmem:[#allocation5 + $0x1a0] sm:$0xff]
    %v242 = vld [vmem:[#allocation5 + $0x1a8] sm:$0xff]
    %v243 = vld [vmem:[#allocation5 + $0x1b0] sm:$0xff]
    %v244 = vld [vmem:[#allocation5 + $0x1b8] sm:$0xff]
    %v245 = vld [vmem:[#allocation5 + $0x1c0] sm:$0xff]
    %v246 = vld [vmem:[#allocation5 + $0x1c8] sm:$0xff]
    %v247 = vld [vmem:[#allocation5 + $0x1d0] sm:$0xff]
    %v248 = vld [vmem:[#allocation5 + $0x1d8] sm:$0xff]
    %v249 = vld [vmem:[#allocation5 + $0x1e0] sm:$0xff]
    %v250 = vld [vmem:[#allocation5 + $0x1e8] sm:$0xff]
    %v251 = vld [vmem:[#allocation5 + $0x1f0] sm:$0xff]
    %v252 = vld [vmem:[#allocation5 + $0x1f8] sm:$0xff]
    %v253 = vld [vmem:[#allocation5 + $0x200] sm:$0xff]
    %v254 = vld [vmem:[#allocation5 + $0x208] sm:$0xff]
    %v255 = vld [vmem:[#allocation5 + $0x210] sm:$0xff]
    %v256 = vld [vmem:[#allocation5 + $0x218] sm:$0xff]
    %v257 = vld [vmem:[#allocation5 + $0x220] sm:$0xff]
    %v258 = vld [vmem:[#allocation5 + $0x228] sm:$0xff]
    %v259 = vld [vmem:[#allocation5 + $0x230] sm:$0xff]
    %v260 = vld [vmem:[#allocation5 + $0x238] sm:$0xff]
    %v261 = vld [vmem:[#allocation5 + $0x240] sm:$0xff]
    %v262 = vld [vmem:[#allocation5 + $0x248] sm:$0xff]
    %v263 = vld [vmem:[#allocation5 + $0x250] sm:$0xff]
    %v264 = vld [vmem:[#allocation5 + $0x258] sm:$0xff]
    %v265 = vld [vmem:[#allocation5 + $0x260] sm:$0xff]
    %v266 = vld [vmem:[#allocation5 + $0x268] sm:$0xff]
    %v267 = vld [vmem:[#allocation5 + $0x270] sm:$0xff]
    %v268 = vld [vmem:[#allocation5 + $0x278] sm:$0xff]
    %v269 = vld [vmem:[#allocation5 + $0x280] sm:$0xff]
    %v270 = vld [vmem:[#allocation5 + $0x288] sm:$0xff]
    %v271 = vld [vmem:[#allocation5 + $0x290] sm:$0xff]
    %v272 = vld [vmem:[#allocation5 + $0x298] sm:$0xff]
    %v273 = vld [vmem:[#allocation5 + $0x2a0] sm:$0xff]
    %v274 = vld [vmem:[#allocation5 + $0x2a8] sm:$0xff]
    %v275 = vld [vmem:[#allocation5 + $0x2b0] sm:$0xff]
    %v276 = vld [vmem:[#allocation5 + $0x2b8] sm:$0xff]
    %v277 = vld [vmem:[#allocation5 + $0x2c0] sm:$0xff]
    %v278 = vld [vmem:[#allocation5 + $0x2c8] sm:$0xff]
    %v279 = vld [vmem:[#allocation5 + $0x2d0] sm:$0xff]
    %v280 = vld [vmem:[#allocation5 + $0x2d8] sm:$0xff]
    %v281 = vld [vmem:[#allocation5 + $0x2e0] sm:$0xff]
    %v282 = vld [vmem:[#allocation5 + $0x2e8] sm:$0xff]
    %v283 = vld [vmem:[#allocation5 + $0x2f0] sm:$0xff]
    %v284 = vld [vmem:[#allocation5 + $0x2f8] sm:$0xff]
    %v285 = vld [vmem:[#allocation5 + $0x300] sm:$0xff]
    %v286 = vld [vmem:[#allocation5 + $0x308] sm:$0xff]
    %v287 = vld [vmem:[#allocation5 + $0x310] sm:$0xff]
    %v288 = vld [vmem:[#allocation5 + $0x318] sm:$0xff]
    %v289 = vld [vmem:[#allocation5 + $0x320] sm:$0xff]
    %v290 = vld [vmem:[#allocation5 + $0x328] sm:$0xff]
    %v291 = vld [vmem:[#allocation5 + $0x330] sm:$0xff]
    %v292 = vld [vmem:[#allocation5 + $0x338] sm:$0xff]
    %v293 = vld [vmem:[#allocation5 + $0x340] sm:$0xff]
    %v294 = vld [vmem:[#allocation5 + $0x348] sm:$0xff]
    %v295 = vld [vmem:[#allocation5 + $0x350] sm:$0xff]
    %v296 = vld [vmem:[#allocation5 + $0x358] sm:$0xff]
    %v297 = vld [vmem:[#allocation5 + $0x360] sm:$0xff]
    %v298 = vld [vmem:[#allocation5 + $0x368] sm:$0xff]
    %v299 = vld [vmem:[#allocation5 + $0x370] sm:$0xff]
    %v300 = vld [vmem:[#allocation5 + $0x378] sm:$0xff]
    %v301 = vld [vmem:[#allocation5 + $0x380] sm:$0xff]
    %v302 = vld [vmem:[#allocation5 + $0x388] sm:$0xff]
    %v303 = vld [vmem:[#allocation5 + $0x390] sm:$0xff]
    %v304 = vld [vmem:[#allocation5 + $0x398] sm:$0xff]
    %v305 = vld [vmem:[#allocation5 + $0x3a0] sm:$0xff]
    %v306 = vld [vmem:[#allocation5 + $0x3a8] sm:$0xff]
    %v307 = vld [vmem:[#allocation5 + $0x3b0] sm:$0xff]
    %v308 = vld [vmem:[#allocation5 + $0x3b8] sm:$0xff]
    %v309 = vld [vmem:[#allocation5 + $0x3c0] sm:$0xff]
    %v310 = vld [vmem:[#allocation5 + $0x3c8] sm:$0xff]
    %v311 = vld [vmem:[#allocation5 + $0x3d0] sm:$0xff]
    %v312 = vld [vmem:[#allocation5 + $0x3d8] sm:$0xff]
    %v313 = vld [vmem:[#allocation5 + $0x3e0] sm:$0xff]
    %v314 = vld [vmem:[#allocation5 + $0x3e8] sm:$0xff]
    %v315 = vld [vmem:[#allocation5 + $0x3f0] sm:$0xff]
    %v316 = vld [vmem:[#allocation5 + $0x3f8] sm:$0xff]
    %v317 = vld [vmem:[#allocation5 + $0x400] sm:$0xff]
    %v318 = vld [vmem:[#allocation5 + $0x408] sm:$0xff]
    %v319 = vld [vmem:[#allocation5 + $0x410] sm:$0xff]
    %v320 = vld [vmem:[#allocation5 + $0x418] sm:$0xff]
    %v321 = vld [vmem:[#allocation5 + $0x420] sm:$0xff]
    %v322 = vld [vmem:[#allocation5 + $0x428] sm:$0xff]
    %v323 = vld [vmem:[#allocation5 + $0x430] sm:$0xff]
    %v324 = vld [vmem:[#allocation5 + $0x438] sm:$0xff]
    %v325 = vld [vmem:[#allocation5 + $0x440] sm:$0xff]
    %v326 = vld [vmem:[#allocation5 + $0x448] sm:$0xff]
    %v327 = vld [vmem:[#allocation5 + $0x450] sm:$0xff]
    %v328 = vld [vmem:[#allocation5 + $0x458] sm:$0xff]
    %v329 = vld [vmem:[#allocation5 + $0x460] sm:$0xff]
    %v330 = vld [vmem:[#allocation5 + $0x468] sm:$0xff]
    %v331 = vld [vmem:[#allocation5 + $0x470] sm:$0xff]
    %v332 = vld [vmem:[#allocation5 + $0x478] sm:$0xff]
    %v333 = vld [vmem:[#allocation5 + $0x480] sm:$0xff]
    %v334 = vld [vmem:[#allocation5 + $0x488] sm:$0xff]
    %v335 = vld [vmem:[#allocation5 + $0x490] sm:$0xff]
    %v336 = vld [vmem:[#allocation5 + $0x498] sm:$0xff]
    %v337 = vld [vmem:[#allocation5 + $0x4a0] sm:$0xff]
    %v338 = vld [vmem:[#allocation5 + $0x4a8] sm:$0xff]
    %v339 = vld [vmem:[#allocation5 + $0x4b0] sm:$0xff]
    %v340 = vld [vmem:[#allocation5 + $0x4b8] sm:$0xff]
    %v341 = vld [vmem:[#allocation5 + $0x4c0] sm:$0xff]
    %v342 = vld [vmem:[#allocation5 + $0x4c8] sm:$0xff]
    %v343 = vld [vmem:[#allocation5 + $0x4d0] sm:$0xff]
    %v344 = vld [vmem:[#allocation5 + $0x4d8] sm:$0xff]
    %v345 = vld [vmem:[#allocation5 + $0x4e0] sm:$0xff]
    %v346 = vld [vmem:[#allocation5 + $0x4e8] sm:$0xff]
    %v347 = vld [vmem:[#allocation5 + $0x4f0] sm:$0xff]
    %v348 = vld [vmem:[#allocation5 + $0x4f8] sm:$0xff]
    %v349 = vld [vmem:[#allocation5 + $0x500] sm:$0xff]
    %v350 = vld [vmem:[#allocation5 + $0x508] sm:$0xff]
    %v351 = vld [vmem:[#allocation5 + $0x510] sm:$0xff]
    %v352 = vld [vmem:[#allocation5 + $0x518] sm:$0xff]
    %v353 = vld [vmem:[#allocation5 + $0x520] sm:$0xff]
    %v354 = vld [vmem:[#allocation5 + $0x528] sm:$0xff]
    %v355 = vld [vmem:[#allocation5 + $0x530] sm:$0xff]
    %v356 = vld [vmem:[#allocation5 + $0x538] sm:$0xff]
    %v357 = vld [vmem:[#allocation5 + $0x540] sm:$0xff]
    %v358 = vld [vmem:[#allocation5 + $0x548] sm:$0xff]
    %v359 = vld [vmem:[#allocation5 + $0x550] sm:$0xff]
    %v360 = vld [vmem:[#allocation5 + $0x558] sm:$0xff]
    %v361 = vld [vmem:[#allocation5 + $0x560] sm:$0xff]
    %v362 = vld [vmem:[#allocation5 + $0x568] sm:$0xff]
    %v363 = vld [vmem:[#allocation5 + $0x570] sm:$0xff]
    %v364 = vld [vmem:[#allocation5 + $0x578] sm:$0xff]
    %v365 = vld [vmem:[#allocation5 + $0x580] sm:$0xff]
    %v366 = vld [vmem:[#allocation5 + $0x588] sm:$0xff]
    %v367 = vld [vmem:[#allocation5 + $0x590] sm:$0xff]
    %v368 = vld [vmem:[#allocation5 + $0x598] sm:$0xff]
    %v369 = vld [vmem:[#allocation5 + $0x5a0] sm:$0xff]
    %v370 = vld [vmem:[#allocation5 + $0x5a8] sm:$0xff]
    %v371 = vld [vmem:[#allocation5 + $0x5b0] sm:$0xff]
    %v372 = vld [vmem:[#allocation5 + $0x5b8] sm:$0xff]
    %v373 = vld [vmem:[#allocation5 + $0x5c0] sm:$0xff]
    %v374 = vld [vmem:[#allocation5 + $0x5c8] sm:$0xff]
    %v375 = vld [vmem:[#allocation5 + $0x5d0] sm:$0xff]
    %v376 = vld [vmem:[#allocation5 + $0x5d8] sm:$0xff]
    %v377 = vld [vmem:[#allocation5 + $0x5e0] sm:$0xff]
    %v378 = vld [vmem:[#allocation5 + $0x5e8] sm:$0xff]
    %v379 = vld [vmem:[#allocation5 + $0x5f0] sm:$0xff]
    %v380 = vld [vmem:[#allocation5 + $0x5f8] sm:$0xff]
    %v381 = vld [vmem:[#allocation5 + $0x600] sm:$0xff]
    %v382 = vld [vmem:[#allocation5 + $0x608] sm:$0xff]
    %v383 = vld [vmem:[#allocation5 + $0x610] sm:$0xff]
    %v384 = vld [vmem:[#allocation5 + $0x618] sm:$0xff]
    %v385 = vld [vmem:[#allocation5 + $0x620] sm:$0xff]
    %v386 = vld [vmem:[#allocation5 + $0x628] sm:$0xff]
    %v387 = vld [vmem:[#allocation5 + $0x630] sm:$0xff]
    %v388 = vld [vmem:[#allocation5 + $0x638] sm:$0xff]
    %v389 = vld [vmem:[#allocation5 + $0x640] sm:$0xff]
    %v390 = vld [vmem:[#allocation5 + $0x648] sm:$0xff]
    %v391 = vld [vmem:[#allocation5 + $0x650] sm:$0xff]
    %v392 = vld [vmem:[#allocation5 + $0x658] sm:$0xff]
    %v393 = vld [vmem:[#allocation5 + $0x660] sm:$0xff]
    %v394 = vld [vmem:[#allocation5 + $0x668] sm:$0xff]
    %v395 = vld [vmem:[#allocation5 + $0x670] sm:$0xff]
    %v396 = vld [vmem:[#allocation5 + $0x678] sm:$0xff]
    %v397 = vld [vmem:[#allocation5 + $0x680] sm:$0xff]
    %v398 = vld [vmem:[#allocation5 + $0x688] sm:$0xff]
    %v399 = vld [vmem:[#allocation5 + $0x690] sm:$0xff]
    %v400 = vld [vmem:[#allocation5 + $0x698] sm:$0xff]
    %v401 = vld [vmem:[#allocation5 + $0x6a0] sm:$0xff]
    %v402 = vld [vmem:[#allocation5 + $0x6a8] sm:$0xff]
    %v403 = vld [vmem:[#allocation5 + $0x6b0] sm:$0xff]
    %v404 = vld [vmem:[#allocation5 + $0x6b8] sm:$0xff]
    %v405 = vld [vmem:[#allocation5 + $0x6c0] sm:$0xff]
    %v406 = vld [vmem:[#allocation5 + $0x6c8] sm:$0xff]
    %v407 = vld [vmem:[#allocation5 + $0x6d0] sm:$0xff]
    %v408 = vld [vmem:[#allocation5 + $0x6d8] sm:$0xff]
    %v409 = vld [vmem:[#allocation5 + $0x6e0] sm:$0xff]
    %v410 = vld [vmem:[#allocation5 + $0x6e8] sm:$0xff]
    %v411 = vld [vmem:[#allocation5 + $0x6f0] sm:$0xff]
    %v412 = vld [vmem:[#allocation5 + $0x6f8] sm:$0xff]
    %v413 = vld [vmem:[#allocation5 + $0x700] sm:$0xff]
    %v414 = vld [vmem:[#allocation5 + $0x708] sm:$0xff]
    %v415 = vld [vmem:[#allocation5 + $0x710] sm:$0xff]
    %v416 = vld [vmem:[#allocation5 + $0x718] sm:$0xff]
    %v417 = vld [vmem:[#allocation5 + $0x720] sm:$0xff]
    %v418 = vld [vmem:[#allocation5 + $0x728] sm:$0xff]
    %v419 = vld [vmem:[#allocation5 + $0x730] sm:$0xff]
    %v420 = vld [vmem:[#allocation5 + $0x738] sm:$0xff]
    %v421 = vld [vmem:[#allocation5 + $0x740] sm:$0xff]
    %v422 = vld [vmem:[#allocation5 + $0x748] sm:$0xff]
    %v423 = vld [vmem:[#allocation5 + $0x750] sm:$0xff]
    %v424 = vld [vmem:[#allocation5 + $0x758] sm:$0xff]
    %v425 = vld [vmem:[#allocation5 + $0x760] sm:$0xff]
    %v426 = vld [vmem:[#allocation5 + $0x768] sm:$0xff]
    %v427 = vld [vmem:[#allocation5 + $0x770] sm:$0xff]
    %v428 = vld [vmem:[#allocation5 + $0x778] sm:$0xff]
    %v429 = vld [vmem:[#allocation5 + $0x780] sm:$0xff]
    %v430 = vld [vmem:[#allocation5 + $0x788] sm:$0xff]
    %v431 = vld [vmem:[#allocation5 + $0x790] sm:$0xff]
    %v432 = vld [vmem:[#allocation5 + $0x798] sm:$0xff]
    %v433 = vld [vmem:[#allocation5 + $0x7a0] sm:$0xff]
    %v434 = vld [vmem:[#allocation5 + $0x7a8] sm:$0xff]
    %v435 = vld [vmem:[#allocation5 + $0x7b0] sm:$0xff]
    %v436 = vld [vmem:[#allocation5 + $0x7b8] sm:$0xff]
    %v437 = vld [vmem:[#allocation5 + $0x7c0] sm:$0xff]
    %v438 = vld [vmem:[#allocation5 + $0x7c8] sm:$0xff]
    %v439 = vld [vmem:[#allocation5 + $0x7d0] sm:$0xff]
    %v440 = vld [vmem:[#allocation5 + $0x7d8] sm:$0xff]
    %v441 = vld [vmem:[#allocation5 + $0x7e0] sm:$0xff]
    %v442 = vld [vmem:[#allocation5 + $0x7e8] sm:$0xff]
    %v443 = vld [vmem:[#allocation5 + $0x7f0] sm:$0xff]
    %v444 = vld [vmem:[#allocation5 + $0x7f8] sm:$0xff]
    %v445 = vld [vmem:[#allocation5 + $0x800] sm:$0xff]
    %v446 = vld [vmem:[#allocation5 + $0x808] sm:$0xff]
    %v447 = vld [vmem:[#allocation5 + $0x810] sm:$0xff]
    %v448 = vld [vmem:[#allocation5 + $0x818] sm:$0xff]
    %v449 = vld [vmem:[#allocation5 + $0x820] sm:$0xff]
    %v450 = vld [vmem:[#allocation5 + $0x828] sm:$0xff]
    %v451 = vld [vmem:[#allocation5 + $0x830] sm:$0xff]
    %v452 = vld [vmem:[#allocation5 + $0x838] sm:$0xff]
    %v453 = vld [vmem:[#allocation5 + $0x840] sm:$0xff]
    %v454 = vld [vmem:[#allocation5 + $0x848] sm:$0xff]
    %v455 = vld [vmem:[#allocation5 + $0x850] sm:$0xff]
    %v456 = vld [vmem:[#allocation5 + $0x858] sm:$0xff]
    %v457 = vld [vmem:[#allocation5 + $0x860] sm:$0xff]
    %v458 = vld [vmem:[#allocation5 + $0x868] sm:$0xff]
    %v459 = vld [vmem:[#allocation5 + $0x870] sm:$0xff]
    %v460 = vld [vmem:[#allocation5 + $0x878] sm:$0xff]
    %v461 = vld [vmem:[#allocation5 + $0x880] sm:$0xff]
    %v462 = vld [vmem:[#allocation5 + $0x888] sm:$0xff]
    %v463 = vld [vmem:[#allocation5 + $0x890] sm:$0xff]
    %v464 = vld [vmem:[#allocation5 + $0x898] sm:$0xff]
    %v465 = vld [vmem:[#allocation5 + $0x8a0] sm:$0xff]
    %v466 = vld [vmem:[#allocation5 + $0x8a8] sm:$0xff]
    %v467 = vld [vmem:[#allocation5 + $0x8b0] sm:$0xff]
    %v468 = vld [vmem:[#allocation5 + $0x8b8] sm:$0xff]
    %v469 = vld [vmem:[#allocation5 + $0x8c0] sm:$0xff]
    %v470 = vld [vmem:[#allocation5 + $0x8c8] sm:$0xff]
    %v471 = vld [vmem:[#allocation5 + $0x8d0] sm:$0xff]
    %v472 = vld [vmem:[#allocation5 + $0x8d8] sm:$0xff]
    %v473 = vld [vmem:[#allocation5 + $0x8e0] sm:$0xff]
    %v474 = vld [vmem:[#allocation5 + $0x8e8] sm:$0xff]
    %v475 = vld [vmem:[#allocation5 + $0x8f0] sm:$0xff]
    %v476 = vld [vmem:[#allocation5 + $0x8f8] sm:$0xff]
    %v477 = vld [vmem:[#allocation5 + $0x900] sm:$0xff]
    %v478 = vld [vmem:[#allocation5 + $0x908] sm:$0xff]
    %v479 = vld [vmem:[#allocation5 + $0x910] sm:$0xff]
    %v480 = vld [vmem:[#allocation5 + $0x918] sm:$0xff]
    %v481 = vld [vmem:[#allocation5 + $0x920] sm:$0xff]
    %v482 = vld [vmem:[#allocation5 + $0x928] sm:$0xff]
    %v483 = vld [vmem:[#allocation5 + $0x930] sm:$0xff]
    %v484 = vld [vmem:[#allocation5 + $0x938] sm:$0xff]
    %v485 = vld [vmem:[#allocation5 + $0x940] sm:$0xff]
    %v486 = vld [vmem:[#allocation5 + $0x948] sm:$0xff]
    %v487 = vld [vmem:[#allocation5 + $0x950] sm:$0xff]
    %v488 = vld [vmem:[#allocation5 + $0x958] sm:$0xff]
    %v489 = vld [vmem:[#allocation5 + $0x960] sm:$0xff]
    %v490 = vld [vmem:[#allocation5 + $0x968] sm:$0xff]
    %v491 = vld [vmem:[#allocation5 + $0x970] sm:$0xff]
    %v492 = vld [vmem:[#allocation5 + $0x978] sm:$0xff]
    %v493 = vld [vmem:[#allocation5 + $0x980] sm:$0xff]
    %v494 = vld [vmem:[#allocation5 + $0x988] sm:$0xff]
    %v495 = vld [vmem:[#allocation5 + $0x990] sm:$0xff]
    %v496 = vld [vmem:[#allocation5 + $0x998] sm:$0xff]
    %v497 = vld [vmem:[#allocation5 + $0x9a0] sm:$0xff]
    %v498 = vld [vmem:[#allocation5 + $0x9a8] sm:$0xff]
    %v499 = vld [vmem:[#allocation5 + $0x9b0] sm:$0xff]
    %v500 = vld [vmem:[#allocation5 + $0x9b8] sm:$0xff]
    %v501 = vld [vmem:[#allocation5 + $0x9c0] sm:$0xff]
    %v502 = vld [vmem:[#allocation5 + $0x9c8] sm:$0xff]
    %v503 = vld [vmem:[#allocation5 + $0x9d0] sm:$0xff]
    %v504 = vld [vmem:[#allocation5 + $0x9d8] sm:$0xff]
    %v505 = vld [vmem:[#allocation5 + $0x9e0] sm:$0xff]
    %v506 = vld [vmem:[#allocation5 + $0x9e8] sm:$0xff]
    %v507 = vld [vmem:[#allocation5 + $0x9f0] sm:$0xff]
    %v508 = vld [vmem:[#allocation5 + $0x9f8] sm:$0xff]
    %v509 = vld [vmem:[#allocation5 + $0xa00] sm:$0xff]
    %v510 = vld [vmem:[#allocation5 + $0xa08] sm:$0xff]
    %v511 = vld [vmem:[#allocation5 + $0xa10] sm:$0xff]
    %v512 = vld [vmem:[#allocation5 + $0xa18] sm:$0xff]
    %v513 = vld [vmem:[#allocation5 + $0xa20] sm:$0xff]
    %v514 = vld [vmem:[#allocation5 + $0xa28] sm:$0xff]
    %v515 = vld [vmem:[#allocation5 + $0xa30] sm:$0xff]
    %v516 = vld [vmem:[#allocation5 + $0xa38] sm:$0xff]
    %v517 = vld [vmem:[#allocation5 + $0xa40] sm:$0xff]
    %v518 = vld [vmem:[#allocation5 + $0xa48] sm:$0xff]
    %v519 = vld [vmem:[#allocation5 + $0xa50] sm:$0xff]
    %v520 = vld [vmem:[#allocation5 + $0xa58] sm:$0xff]
    %v521 = vld [vmem:[#allocation5 + $0xa60] sm:$0xff]
    %v522 = vld [vmem:[#allocation5 + $0xa68] sm:$0xff]
    %v523 = vld [vmem:[#allocation5 + $0xa70] sm:$0xff]
    %v524 = vld [vmem:[#allocation5 + $0xa78] sm:$0xff]
    %v525 = vld [vmem:[#allocation5 + $0xa80] sm:$0xff]
    %v526 = vld [vmem:[#allocation5 + $0xa88] sm:$0xff]
    %v527 = vld [vmem:[#allocation5 + $0xa90] sm:$0xff]
    %v528 = vld [vmem:[#allocation5 + $0xa98] sm:$0xff]
    %v529 = vld [vmem:[#allocation5 + $0xaa0] sm:$0xff]
    %v530 = vld [vmem:[#allocation5 + $0xaa8] sm:$0xff]
    %v531 = vld [vmem:[#allocation5 + $0xab0] sm:$0xff]
    %v532 = vld [vmem:[#allocation5 + $0xab8] sm:$0xff]
    %v533 = vld [vmem:[#allocation5 + $0xac0] sm:$0xff]
    %v534 = vld [vmem:[#allocation5 + $0xac8] sm:$0xff]
    %v535 = vld [vmem:[#allocation5 + $0xad0] sm:$0xff]
    %v536 = vld [vmem:[#allocation5 + $0xad8] sm:$0xff]
    %v537 = vld [vmem:[#allocation5 + $0xae0] sm:$0xff]
    %v538 = vld [vmem:[#allocation5 + $0xae8] sm:$0xff]
    %v539 = vld [vmem:[#allocation5 + $0xaf0] sm:$0xff]
    %v540 = vld [vmem:[#allocation5 + $0xaf8] sm:$0xff]
    %v541 = vld [vmem:[#allocation5 + $0xb00] sm:$0xff]
    %v542 = vld [vmem:[#allocation5 + $0xb08] sm:$0xff]
    %v543 = vld [vmem:[#allocation5 + $0xb10] sm:$0xff]
    %v544 = vld [vmem:[#allocation5 + $0xb18] sm:$0xff]
    %v545 = vld [vmem:[#allocation5 + $0xb20] sm:$0xff]
    %v546 = vld [vmem:[#allocation5 + $0xb28] sm:$0xff]
    %v547 = vld [vmem:[#allocation5 + $0xb30] sm:$0xff]
    %v548 = vld [vmem:[#allocation5 + $0xb38] sm:$0xff]
    %v549 = vld [vmem:[#allocation5 + $0xb40] sm:$0xff]
    %v550 = vld [vmem:[#allocation5 + $0xb48] sm:$0xff]
    %v551 = vld [vmem:[#allocation5 + $0xb50] sm:$0xff]
    %v552 = vld [vmem:[#allocation5 + $0xb58] sm:$0xff]
    %v553 = vld [vmem:[#allocation5 + $0xb60] sm:$0xff]
    %v554 = vld [vmem:[#allocation5 + $0xb68] sm:$0xff]
    %v555 = vld [vmem:[#allocation5 + $0xb70] sm:$0xff]
    %v556 = vld [vmem:[#allocation5 + $0xb78] sm:$0xff]
    %v557 = vld [vmem:[#allocation5 + $0xb80] sm:$0xff]
    %v558 = vld [vmem:[#allocation5 + $0xb88] sm:$0xff]
    %v559 = vld [vmem:[#allocation5 + $0xb90] sm:$0xff]
    %v560 = vld [vmem:[#allocation5 + $0xb98] sm:$0xff]
    %v561 = vld [vmem:[#allocation5 + $0xba0] sm:$0xff]
    %v562 = vld [vmem:[#allocation5 + $0xba8] sm:$0xff]
    %v563 = vld [vmem:[#allocation5 + $0xbb0] sm:$0xff]
    %v564 = vld [vmem:[#allocation5 + $0xbb8] sm:$0xff]
    %v565 = vld [vmem:[#allocation5 + $0xbc0] sm:$0xff]
    %v566 = vld [vmem:[#allocation5 + $0xbc8] sm:$0xff]
    %v567 = vld [vmem:[#allocation5 + $0xbd0] sm:$0xff]
    %v568 = vld [vmem:[#allocation5 + $0xbd8] sm:$0xff]
    %v569 = vld [vmem:[#allocation5 + $0xbe0] sm:$0xff]
    %v570 = vld [vmem:[#allocation5 + $0xbe8] sm:$0xff]
    %v571 = vld [vmem:[#allocation5 + $0xbf0] sm:$0xff]
    %v572 = vld [vmem:[#allocation5 + $0xbf8] sm:$0xff]
    %v573 = vld [vmem:[#allocation5 + $0xc00] sm:$0xff]
    %v574 = vld [vmem:[#allocation5 + $0xc08] sm:$0xff]
    %v575 = vld [vmem:[#allocation5 + $0xc10] sm:$0xff]
    %v576 = vld [vmem:[#allocation5 + $0xc18] sm:$0xff]
    %v577 = vld [vmem:[#allocation5 + $0xc20] sm:$0xff]
    %v578 = vld [vmem:[#allocation5 + $0xc28] sm:$0xff]
    %v579 = vld [vmem:[#allocation5 + $0xc30] sm:$0xff]
    %v580 = vld [vmem:[#allocation5 + $0xc38] sm:$0xff]
    %v581 = vld [vmem:[#allocation5 + $0xc40] sm:$0xff]
    %v582 = vld [vmem:[#allocation5 + $0xc48] sm:$0xff]
    %v583 = vld [vmem:[#allocation5 + $0xc50] sm:$0xff]
    %v584 = vld [vmem:[#allocation5 + $0xc58] sm:$0xff]
    %v585 = vld [vmem:[#allocation5 + $0xc60] sm:$0xff]
    %v586 = vld [vmem:[#allocation5 + $0xc68] sm:$0xff]
    %v587 = vld [vmem:[#allocation5 + $0xc70] sm:$0xff]
    %v588 = vld [vmem:[#allocation5 + $0xc78] sm:$0xff]
    %v589 = vld [vmem:[#allocation5 + $0xc80] sm:$0xff]
    %v590 = vld [vmem:[#allocation5 + $0xc88] sm:$0xff]
    %v591 = vld [vmem:[#allocation5 + $0xc90] sm:$0xff]
    %v592 = vld [vmem:[#allocation5 + $0xc98] sm:$0xff]
    %v593 = vld [vmem:[#allocation5 + $0xca0] sm:$0xff]
    %v594 = vld [vmem:[#allocation5 + $0xca8] sm:$0xff]
    %v595 = vld [vmem:[#allocation5 + $0xcb0] sm:$0xff]
    %v596 = vld [vmem:[#allocation5 + $0xcb8] sm:$0xff]
    %v597 = vld [vmem:[#allocation5 + $0xcc0] sm:$0xff]
    %v598 = vld [vmem:[#allocation5 + $0xcc8] sm:$0xff]
    %v599 = vld [vmem:[#allocation5 + $0xcd0] sm:$0xff]
    %v600 = vld [vmem:[#allocation5 + $0xcd8] sm:$0xff]
    %v601 = vld [vmem:[#allocation5 + $0xce0] sm:$0xff]
    %v602 = vld [vmem:[#allocation5 + $0xce8] sm:$0xff]
    %v603 = vld [vmem:[#allocation5 + $0xcf0] sm:$0xff]
    %v604 = vld [vmem:[#allocation5 + $0xcf8] sm:$0xff]
    %v605 = vld [vmem:[#allocation5 + $0xd00] sm:$0xff]
    %v606 = vld [vmem:[#allocation5 + $0xd08] sm:$0xff]
    %v607 = vld [vmem:[#allocation5 + $0xd10] sm:$0xff]
    %v608 = vld [vmem:[#allocation5 + $0xd18] sm:$0xff]
    %v609 = vld [vmem:[#allocation5 + $0xd20] sm:$0xff]
    %v610 = vld [vmem:[#allocation5 + $0xd28] sm:$0xff]
    %v611 = vld [vmem:[#allocation5 + $0xd30] sm:$0xff]
    %v612 = vld [vmem:[#allocation5 + $0xd38] sm:$0xff]
    %v613 = vld [vmem:[#allocation5 + $0xd40] sm:$0xff]
    %v614 = vld [vmem:[#allocation5 + $0xd48] sm:$0xff]
    %v615 = vld [vmem:[#allocation5 + $0xd50] sm:$0xff]
    %v616 = vld [vmem:[#allocation5 + $0xd58] sm:$0xff]
    %v617 = vld [vmem:[#allocation5 + $0xd60] sm:$0xff]
    %v618 = vld [vmem:[#allocation5 + $0xd68] sm:$0xff]
    %v619 = vld [vmem:[#allocation5 + $0xd70] sm:$0xff]
    %v620 = vld [vmem:[#allocation5 + $0xd78] sm:$0xff]
    %v621 = vld [vmem:[#allocation5 + $0xd80] sm:$0xff]
    %v622 = vld [vmem:[#allocation5 + $0xd88] sm:$0xff]
    %v623 = vld [vmem:[#allocation5 + $0xd90] sm:$0xff]
    %v624 = vld [vmem:[#allocation5 + $0xd98] sm:$0xff]
    %v625 = vld [vmem:[#allocation5 + $0xda0] sm:$0xff]
    %v626 = vld [vmem:[#allocation5 + $0xda8] sm:$0xff]
    %v627 = vld [vmem:[#allocation5 + $0xdb0] sm:$0xff]
    %v628 = vld [vmem:[#allocation5 + $0xdb8] sm:$0xff]
    %v629 = vld [vmem:[#allocation5 + $0xdc0] sm:$0xff]
    %v630 = vld [vmem:[#allocation5 + $0xdc8] sm:$0xff]
    %v631 = vld [vmem:[#allocation5 + $0xdd0] sm:$0xff]
    %v632 = vld [vmem:[#allocation5 + $0xdd8] sm:$0xff]
    %v633 = vld [vmem:[#allocation5 + $0xde0] sm:$0xff]
    %v634 = vld [vmem:[#allocation5 + $0xde8] sm:$0xff]
    %v635 = vld [vmem:[#allocation5 + $0xdf0] sm:$0xff]
    %v636 = vld [vmem:[#allocation5 + $0xdf8] sm:$0xff]
    %v637 = vld [vmem:[#allocation5 + $0xe00] sm:$0xff]
    %v638 = vld [vmem:[#allocation5 + $0xe08] sm:$0xff]
    %v639 = vld [vmem:[#allocation5 + $0xe10] sm:$0xff]
    %v640 = vld [vmem:[#allocation5 + $0xe18] sm:$0xff]
    %v641 = vld [vmem:[#allocation5 + $0xe20] sm:$0xff]
    %v642 = vld [vmem:[#allocation5 + $0xe28] sm:$0xff]
    %v643 = vld [vmem:[#allocation5 + $0xe30] sm:$0xff]
    %v644 = vld [vmem:[#allocation5 + $0xe38] sm:$0xff]
    %v645 = vld [vmem:[#allocation5 + $0xe40] sm:$0xff]
    %v646 = vld [vmem:[#allocation5 + $0xe48] sm:$0xff]
    %v647 = vld [vmem:[#allocation5 + $0xe50] sm:$0xff]
    %v648 = vld [vmem:[#allocation5 + $0xe58] sm:$0xff]
    %v649 = vld [vmem:[#allocation5 + $0xe60] sm:$0xff]
    %v650 = vld [vmem:[#allocation5 + $0xe68] sm:$0xff]
    %v651 = vld [vmem:[#allocation5 + $0xe70] sm:$0xff]
    %v652 = vld [vmem:[#allocation5 + $0xe78] sm:$0xff]
    %v653 = vld [vmem:[#allocation5 + $0xe80] sm:$0xff]
    %v654 = vld [vmem:[#allocation5 + $0xe88] sm:$0xff]
    %v655 = vld [vmem:[#allocation5 + $0xe90] sm:$0xff]
    %v656 = vld [vmem:[#allocation5 + $0xe98] sm:$0xff]
    %v657 = vld [vmem:[#allocation5 + $0xea0] sm:$0xff]
    %v658 = vld [vmem:[#allocation5 + $0xea8] sm:$0xff]
    %v659 = vld [vmem:[#allocation5 + $0xeb0] sm:$0xff]
    %v660 = vld [vmem:[#allocation5 + $0xeb8] sm:$0xff]
    %v661 = vld [vmem:[#allocation5 + $0xec0] sm:$0xff]
    %v662 = vld [vmem:[#allocation5 + $0xec8] sm:$0xff]
    %v663 = vld [vmem:[#allocation5 + $0xed0] sm:$0xff]
    %v664 = vld [vmem:[#allocation5 + $0xed8] sm:$0xff]
    %v665 = vld [vmem:[#allocation5 + $0xee0] sm:$0xff]
    %v666 = vld [vmem:[#allocation5 + $0xee8] sm:$0xff]
    %v667 = vld [vmem:[#allocation5 + $0xef0] sm:$0xff]
    %v668 = vld [vmem:[#allocation5 + $0xef8] sm:$0xff]
    %v669 = vld [vmem:[#allocation5 + $0xf00] sm:$0xff]
    %v670 = vld [vmem:[#allocation5 + $0xf08] sm:$0xff]
    %v671 = vld [vmem:[#allocation5 + $0xf10] sm:$0xff]
    %v672 = vld [vmem:[#allocation5 + $0xf18] sm:$0xff]
    %v673 = vld [vmem:[#allocation5 + $0xf20] sm:$0xff]
    %v674 = vld [vmem:[#allocation5 + $0xf28] sm:$0xff]
    %v675 = vld [vmem:[#allocation5 + $0xf30] sm:$0xff]
    %v676 = vld [vmem:[#allocation5 + $0xf38] sm:$0xff]
    %v677 = vld [vmem:[#allocation5 + $0xf40] sm:$0xff]
    %v678 = vld [vmem:[#allocation5 + $0xf48] sm:$0xff]
    %v679 = vld [vmem:[#allocation5 + $0xf50] sm:$0xff]
    %v680 = vld [vmem:[#allocation5 + $0xf58] sm:$0xff]
    %v681 = vld [vmem:[#allocation5 + $0xf60] sm:$0xff]
    %v682 = vld [vmem:[#allocation5 + $0xf68] sm:$0xff]
    %v683 = vld [vmem:[#allocation5 + $0xf70] sm:$0xff]
    %v684 = vld [vmem:[#allocation5 + $0xf78] sm:$0xff]
    %v685 = vld [vmem:[#allocation5 + $0xf80] sm:$0xff]
    %v686 = vld [vmem:[#allocation5 + $0xf88] sm:$0xff]
    %v687 = vld [vmem:[#allocation5 + $0xf90] sm:$0xff]
    %v688 = vld [vmem:[#allocation5 + $0xf98] sm:$0xff]
    %v689 = vld [vmem:[#allocation5 + $0xfa0] sm:$0xff]
    %v690 = vld [vmem:[#allocation5 + $0xfa8] sm:$0xff]
    %v691 = vld [vmem:[#allocation5 + $0xfb0] sm:$0xff]
    %v692 = vld [vmem:[#allocation5 + $0xfb8] sm:$0xff]
    %v693 = vld [vmem:[#allocation5 + $0xfc0] sm:$0xff]
    %v694 = vld [vmem:[#allocation5 + $0xfc8] sm:$0xff]
    %v695 = vld [vmem:[#allocation5 + $0xfd0] sm:$0xff]
    %v696 = vld [vmem:[#allocation5 + $0xfd8] sm:$0xff]
    %v697 = vld [vmem:[#allocation5 + $0xfe0] sm:$0xff]
    %v698 = vld [vmem:[#allocation5 + $0xfe8] sm:$0xff]
    %v699 = vld [vmem:[#allocation5 + $0xff0] sm:$0xff]
    %v700 = vld [vmem:[#allocation5 + $0xff8] sm:$0xff]
    %v701 = vld [vmem:[#allocation5 + $0x1000] sm:$0xff]
    %v702 = vld [vmem:[#allocation5 + $0x1008] sm:$0xff]
    %v703 = vld [vmem:[#allocation5 + $0x1010] sm:$0xff]
    %v704 = vld [vmem:[#allocation5 + $0x1018] sm:$0xff]
    %v705 = vld [vmem:[#allocation5 + $0x1020] sm:$0xff]
    %v706 = vld [vmem:[#allocation5 + $0x1028] sm:$0xff]
    %v707 = vld [vmem:[#allocation5 + $0x1030] sm:$0xff]
    %v708 = vld [vmem:[#allocation5 + $0x1038] sm:$0xff]
    %v709 = vld [vmem:[#allocation5 + $0x1040] sm:$0xff]
    %v710 = vld [vmem:[#allocation5 + $0x1048] sm:$0xff]
    %v711 = vld [vmem:[#allocation5 + $0x1050] sm:$0xff]
    %v712 = vld [vmem:[#allocation5 + $0x1058] sm:$0xff]
    %v713 = vld [vmem:[#allocation5 + $0x1060] sm:$0xff]
    %v714 = vld [vmem:[#allocation5 + $0x1068] sm:$0xff]
    %v715 = vld [vmem:[#allocation5 + $0x1070] sm:$0xff]
    %v716 = vld [vmem:[#allocation5 + $0x1078] sm:$0xff]
    %v717 = vld [vmem:[#allocation5 + $0x1080] sm:$0xff]
    %v718 = vld [vmem:[#allocation5 + $0x1088] sm:$0xff]
    %v719 = vld [vmem:[#allocation5 + $0x1090] sm:$0xff]
    %v720 = vld [vmem:[#allocation5 + $0x1098] sm:$0xff]
    %v721 = vld [vmem:[#allocation5 + $0x10a0] sm:$0xff]
    %v722 = vld [vmem:[#allocation5 + $0x10a8] sm:$0xff]
    %v723 = vld [vmem:[#allocation5 + $0x10b0] sm:$0xff]
    %v724 = vld [vmem:[#allocation5 + $0x10b8] sm:$0xff]
    %v725 = vld [vmem:[#allocation5 + $0x10c0] sm:$0xff]
    %v726 = vld [vmem:[#allocation5 + $0x10c8] sm:$0xff]
    %v727 = vld [vmem:[#allocation5 + $0x10d0] sm:$0xff]
    %v728 = vld [vmem:[#allocation5 + $0x10d8] sm:$0xff]
    %v729 = vld [vmem:[#allocation5 + $0x10e0] sm:$0xff]
    %v730 = vld [vmem:[#allocation5 + $0x10e8] sm:$0xff]
    %v731 = vld [vmem:[#allocation5 + $0x10f0] sm:$0xff]
    %v732 = vld [vmem:[#allocation5 + $0x10f8] sm:$0xff]
    %v733 = vld [vmem:[#allocation5 + $0x1100] sm:$0xff]
    %v734 = vld [vmem:[#allocation5 + $0x1108] sm:$0xff]
    %v735 = vld [vmem:[#allocation5 + $0x1110] sm:$0xff]
    %v736 = vld [vmem:[#allocation5 + $0x1118] sm:$0xff]
    %v737 = vld [vmem:[#allocation5 + $0x1120] sm:$0xff]
    %v738 = vld [vmem:[#allocation5 + $0x1128] sm:$0xff]
    %v739 = vld [vmem:[#allocation5 + $0x1130] sm:$0xff]
    %v740 = vld [vmem:[#allocation5 + $0x1138] sm:$0xff]
    %v741 = vld [vmem:[#allocation5 + $0x1140] sm:$0xff]
    %v742 = vld [vmem:[#allocation5 + $0x1148] sm:$0xff]
    %v743 = vld [vmem:[#allocation5 + $0x1150] sm:$0xff]
    %v744 = vld [vmem:[#allocation5 + $0x1158] sm:$0xff]
    %v745 = vld [vmem:[#allocation5 + $0x1160] sm:$0xff]
    %v746 = vld [vmem:[#allocation5 + $0x1168] sm:$0xff]
    %v747 = vld [vmem:[#allocation5 + $0x1170] sm:$0xff]
    %v748 = vld [vmem:[#allocation5 + $0x1178] sm:$0xff]
    %v749 = vld [vmem:[#allocation5 + $0x1180] sm:$0xff]
    %v750 = vld [vmem:[#allocation5 + $0x1188] sm:$0xff]
    %v751 = vld [vmem:[#allocation5 + $0x1190] sm:$0xff]
    %v752 = vld [vmem:[#allocation5 + $0x1198] sm:$0xff]
    %v753 = vld [vmem:[#allocation5 + $0x11a0] sm:$0xff]
    %v754 = vld [vmem:[#allocation5 + $0x11a8] sm:$0xff]
    %v755 = vld [vmem:[#allocation5 + $0x11b0] sm:$0xff]
    %v756 = vld [vmem:[#allocation5 + $0x11b8] sm:$0xff]
    %v757 = vld [vmem:[#allocation5 + $0x11c0] sm:$0xff]
    %v758 = vld [vmem:[#allocation5 + $0x11c8] sm:$0xff]
    %v759 = vld [vmem:[#allocation5 + $0x11d0] sm:$0xff]
    %v760 = vld [vmem:[#allocation5 + $0x11d8] sm:$0xff]
    %v761 = vld [vmem:[#allocation5 + $0x11e0] sm:$0xff]
    %v762 = vld [vmem:[#allocation5 + $0x11e8] sm:$0xff]
    %v763 = vld [vmem:[#allocation5 + $0x11f0] sm:$0xff]
    %v764 = vld [vmem:[#allocation5 + $0x11f8] sm:$0xff]
    %v765 = vld [vmem:[#allocation5 + $0x1200] sm:$0xff]
    %v766 = vld [vmem:[#allocation5 + $0x1208] sm:$0xff]
    %v767 = vld [vmem:[#allocation5 + $0x1210] sm:$0xff]
    %v768 = vld [vmem:[#allocation5 + $0x1218] sm:$0xff]
    %v769 = vld [vmem:[#allocation5 + $0x1220] sm:$0xff]
    %v770 = vld [vmem:[#allocation5 + $0x1228] sm:$0xff]
    %v771 = vld [vmem:[#allocation5 + $0x1230] sm:$0xff]
    %v772 = vld [vmem:[#allocation5 + $0x1238] sm:$0xff]
    %v773 = vld [vmem:[#allocation5 + $0x1240] sm:$0xff]
    %v774 = vld [vmem:[#allocation5 + $0x1248] sm:$0xff]
    %v775 = vld [vmem:[#allocation5 + $0x1250] sm:$0xff]
    %v776 = vld [vmem:[#allocation5 + $0x1258] sm:$0xff]
    %v777 = vld [vmem:[#allocation5 + $0x1260] sm:$0xff]
    %v778 = vld [vmem:[#allocation5 + $0x1268] sm:$0xff]
    %v779 = vld [vmem:[#allocation5 + $0x1270] sm:$0xff]
    %v780 = vld [vmem:[#allocation5 + $0x1278] sm:$0xff]
    %v781 = vld [vmem:[#allocation5 + $0x1280] sm:$0xff]
    %v782 = vld [vmem:[#allocation5 + $0x1288] sm:$0xff]
    %v783 = vld [vmem:[#allocation5 + $0x1290] sm:$0xff]
    %v784 = vld [vmem:[#allocation5 + $0x1298] sm:$0xff]
    %v785 = vld [vmem:[#allocation5 + $0x12a0] sm:$0xff]
    %v786 = vld [vmem:[#allocation5 + $0x12a8] sm:$0xff]
    %v787 = vld [vmem:[#allocation5 + $0x12b0] sm:$0xff]
    %v788 = vld [vmem:[#allocation5 + $0x12b8] sm:$0xff]
    %v789 = vld [vmem:[#allocation5 + $0x12c0] sm:$0xff]
    %v790 = vld [vmem:[#allocation5 + $0x12c8] sm:$0xff]
    %v791 = vld [vmem:[#allocation5 + $0x12d0] sm:$0xff]
    %v792 = vld [vmem:[#allocation5 + $0x12d8] sm:$0xff]
    %v793 = vld [vmem:[#allocation5 + $0x12e0] sm:$0xff]
    %v794 = vld [vmem:[#allocation5 + $0x12e8] sm:$0xff]
    %v795 = vld [vmem:[#allocation5 + $0x12f0] sm:$0xff]
    %v796 = vld [vmem:[#allocation5 + $0x12f8] sm:$0xff]
    %v797 = vld [vmem:[#allocation5 + $0x1300] sm:$0xff]
    %v798 = vld [vmem:[#allocation5 + $0x1308] sm:$0xff]
    %v799 = vld [vmem:[#allocation5 + $0x1310] sm:$0xff]
    %v800 = vld [vmem:[#allocation5 + $0x1318] sm:$0xff]
    %v801 = vld [vmem:[#allocation5 + $0x1320] sm:$0xff]
    %v802 = vld [vmem:[#allocation5 + $0x1328] sm:$0xff]
    %v803 = vld [vmem:[#allocation5 + $0x1330] sm:$0xff]
    %v804 = vld [vmem:[#allocation5 + $0x1338] sm:$0xff]
    %v805 = vld [vmem:[#allocation5 + $0x1340] sm:$0xff]
    %v806 = vld [vmem:[#allocation5 + $0x1348] sm:$0xff]
    %v807 = vld [vmem:[#allocation5 + $0x1350] sm:$0xff]
    %v808 = vld [vmem:[#allocation5 + $0x1358] sm:$0xff]
    %v809 = vld [vmem:[#allocation5 + $0x1360] sm:$0xff]
    %v810 = vld [vmem:[#allocation5 + $0x1368] sm:$0xff]
    %v811 = vld [vmem:[#allocation5 + $0x1370] sm:$0xff]
    %v812 = vld [vmem:[#allocation5 + $0x1378] sm:$0xff]
    %v813 = vld [vmem:[#allocation5 + $0x1380] sm:$0xff]
    %v814 = vld [vmem:[#allocation5 + $0x1388] sm:$0xff]
    %v815 = vld [vmem:[#allocation5 + $0x1390] sm:$0xff]
    %v816 = vld [vmem:[#allocation5 + $0x1398] sm:$0xff]
    %v817 = vld [vmem:[#allocation5 + $0x13a0] sm:$0xff]
    %v818 = vld [vmem:[#allocation5 + $0x13a8] sm:$0xff]
    %v819 = vld [vmem:[#allocation5 + $0x13b0] sm:$0xff]
    %v820 = vld [vmem:[#allocation5 + $0x13b8] sm:$0xff]
    %v821 = vld [vmem:[#allocation5 + $0x13c0] sm:$0xff]
    %v822 = vld [vmem:[#allocation5 + $0x13c8] sm:$0xff]
    %v823 = vld [vmem:[#allocation5 + $0x13d0] sm:$0xff]
    %v824 = vld [vmem:[#allocation5 + $0x13d8] sm:$0xff]
    %v825 = vld [vmem:[#allocation5 + $0x13e0] sm:$0xff]
    %v826 = vld [vmem:[#allocation5 + $0x13e8] sm:$0xff]
    %v827 = vld [vmem:[#allocation5 + $0x13f0] sm:$0xff]
    %v828 = vld [vmem:[#allocation5 + $0x13f8] sm:$0xff]
    %v829 = vld [vmem:[#allocation5 + $0x1400] sm:$0xff]
    %v830 = vld [vmem:[#allocation5 + $0x1408] sm:$0xff]
    %v831 = vld [vmem:[#allocation5 + $0x1410] sm:$0xff]
    %v832 = vld [vmem:[#allocation5 + $0x1418] sm:$0xff]
    %v833 = vld [vmem:[#allocation5 + $0x1420] sm:$0xff]
    %v834 = vld [vmem:[#allocation5 + $0x1428] sm:$0xff]
    %v835 = vld [vmem:[#allocation5 + $0x1430] sm:$0xff]
    %v836 = vld [vmem:[#allocation5 + $0x1438] sm:$0xff]
    %v837 = vld [vmem:[#allocation5 + $0x1440] sm:$0xff]
    %v838 = vld [vmem:[#allocation5 + $0x1448] sm:$0xff]
    %v839 = vld [vmem:[#allocation5 + $0x1450] sm:$0xff]
    %v840 = vld [vmem:[#allocation5 + $0x1458] sm:$0xff]
    %v841 = vld [vmem:[#allocation5 + $0x1460] sm:$0xff]
    %v842 = vld [vmem:[#allocation5 + $0x1468] sm:$0xff]
    %v843 = vld [vmem:[#allocation5 + $0x1470] sm:$0xff]
    %v844 = vld [vmem:[#allocation5 + $0x1478] sm:$0xff]
    %v845 = vld [vmem:[#allocation5 + $0x1480] sm:$0xff]
    %v846 = vld [vmem:[#allocation5 + $0x1488] sm:$0xff]
    %v847 = vld [vmem:[#allocation5 + $0x1490] sm:$0xff]
    %v848 = vld [vmem:[#allocation5 + $0x1498] sm:$0xff]
    %v849 = vld [vmem:[#allocation5 + $0x14a0] sm:$0xff]
    %v850 = vld [vmem:[#allocation5 + $0x14a8] sm:$0xff]
    %v851 = vld [vmem:[#allocation5 + $0x14b0] sm:$0xff]
    %v852 = vld [vmem:[#allocation5 + $0x14b8] sm:$0xff]
    %v853 = vld [vmem:[#allocation5 + $0x14c0] sm:$0xff]
    %v854 = vld [vmem:[#allocation5 + $0x14c8] sm:$0xff]
    %v855 = vld [vmem:[#allocation5 + $0x14d0] sm:$0xff]
    %v856 = vld [vmem:[#allocation5 + $0x14d8] sm:$0xff]
    %v857 = vld [vmem:[#allocation5 + $0x14e0] sm:$0xff]
    %v858 = vld [vmem:[#allocation5 + $0x14e8] sm:$0xff]
    %v859 = vld [vmem:[#allocation5 + $0x14f0] sm:$0xff]
    %v860 = vld [vmem:[#allocation5 + $0x14f8] sm:$0xff]
    %v861 = vld [vmem:[#allocation5 + $0x1500] sm:$0xff]
    %v862 = vld [vmem:[#allocation5 + $0x1508] sm:$0xff]
    %v863 = vld [vmem:[#allocation5 + $0x1510] sm:$0xff]
    %v864 = vld [vmem:[#allocation5 + $0x1518] sm:$0xff]
    %v865 = vld [vmem:[#allocation5 + $0x1520] sm:$0xff]
    %v866 = vld [vmem:[#allocation5 + $0x1528] sm:$0xff]
    %v867 = vld [vmem:[#allocation5 + $0x1530] sm:$0xff]
    %v868 = vld [vmem:[#allocation5 + $0x1538] sm:$0xff]
    %v869 = vld [vmem:[#allocation5 + $0x1540] sm:$0xff]
    %v870 = vld [vmem:[#allocation5 + $0x1548] sm:$0xff]
    %v871 = vld [vmem:[#allocation5 + $0x1550] sm:$0xff]
    %v872 = vld [vmem:[#allocation5 + $0x1558] sm:$0xff]
    %v873 = vld [vmem:[#allocation5 + $0x1560] sm:$0xff]
    %v874 = vld [vmem:[#allocation5 + $0x1568] sm:$0xff]
    %v875 = vld [vmem:[#allocation5 + $0x1570] sm:$0xff]
    %v876 = vld [vmem:[#allocation5 + $0x1578] sm:$0xff]
    %v877 = vld [vmem:[#allocation5 + $0x1580] sm:$0xff]
    %v878 = vld [vmem:[#allocation5 + $0x1588] sm:$0xff]
    %v879 = vld [vmem:[#allocation5 + $0x1590] sm:$0xff]
    %v880 = vld [vmem:[#allocation5 + $0x1598] sm:$0xff]
    %v881 = vld [vmem:[#allocation5 + $0x15a0] sm:$0xff]
    %v882 = vld [vmem:[#allocation5 + $0x15a8] sm:$0xff]
    %v883 = vld [vmem:[#allocation5 + $0x15b0] sm:$0xff]
    %v884 = vld [vmem:[#allocation5 + $0x15b8] sm:$0xff]
    %v885 = vld [vmem:[#allocation5 + $0x15c0] sm:$0xff]
    %v886 = vld [vmem:[#allocation5 + $0x15c8] sm:$0xff]
    %v887 = vld [vmem:[#allocation5 + $0x15d0] sm:$0xff]
    %v888 = vld [vmem:[#allocation5 + $0x15d8] sm:$0xff]
    %v889 = vld [vmem:[#allocation5 + $0x15e0] sm:$0xff]
    %v890 = vld [vmem:[#allocation5 + $0x15e8] sm:$0xff]
    %v891 = vld [vmem:[#allocation5 + $0x15f0] sm:$0xff]
    %v892 = vld [vmem:[#allocation5 + $0x15f8] sm:$0xff]
    %v893 = vld [vmem:[#allocation5 + $0x1600] sm:$0xff]
    %v894 = vld [vmem:[#allocation5 + $0x1608] sm:$0xff]
    %v895 = vld [vmem:[#allocation5 + $0x1610] sm:$0xff]
    %v896 = vld [vmem:[#allocation5 + $0x1618] sm:$0xff]
    %v897 = vld [vmem:[#allocation5 + $0x1620] sm:$0xff]
    %v898 = vld [vmem:[#allocation5 + $0x1628] sm:$0xff]
    %v899 = vld [vmem:[#allocation5 + $0x1630] sm:$0xff]
    %v900 = vld [vmem:[#allocation5 + $0x1638] sm:$0xff]
    %v901 = vld [vmem:[#allocation5 + $0x1640] sm:$0xff]
    %v902 = vld [vmem:[#allocation5 + $0x1648] sm:$0xff]
    %v903 = vld [vmem:[#allocation5 + $0x1650] sm:$0xff]
    %v904 = vld [vmem:[#allocation5 + $0x1658] sm:$0xff]
    %v905 = vld [vmem:[#allocation5 + $0x1660] sm:$0xff]
    %v906 = vld [vmem:[#allocation5 + $0x1668] sm:$0xff]
    %v907 = vld [vmem:[#allocation5 + $0x1670] sm:$0xff]
    %v908 = vld [vmem:[#allocation5 + $0x1678] sm:$0xff]
    %v909 = vld [vmem:[#allocation5 + $0x1680] sm:$0xff]
    %v910 = vld [vmem:[#allocation5 + $0x1688] sm:$0xff]
    %v911 = vld [vmem:[#allocation5 + $0x1690] sm:$0xff]
    %v912 = vld [vmem:[#allocation5 + $0x1698] sm:$0xff]
    %v913 = vld [vmem:[#allocation5 + $0x16a0] sm:$0xff]
    %v914 = vld [vmem:[#allocation5 + $0x16a8] sm:$0xff]
    %v915 = vld [vmem:[#allocation5 + $0x16b0] sm:$0xff]
    %v916 = vld [vmem:[#allocation5 + $0x16b8] sm:$0xff]
    %v917 = vld [vmem:[#allocation5 + $0x16c0] sm:$0xff]
    %v918 = vld [vmem:[#allocation5 + $0x16c8] sm:$0xff]
    %v919 = vld [vmem:[#allocation5 + $0x16d0] sm:$0xff]
    %v920 = vld [vmem:[#allocation5 + $0x16d8] sm:$0xff]
    %v921 = vld [vmem:[#allocation5 + $0x16e0] sm:$0xff]
    %v922 = vld [vmem:[#allocation5 + $0x16e8] sm:$0xff]
    %v923 = vld [vmem:[#allocation5 + $0x16f0] sm:$0xff]
    %v924 = vld [vmem:[#allocation5 + $0x16f8] sm:$0xff]
    %v925 = vld [vmem:[#allocation5 + $0x1700] sm:$0xff]
    %v926 = vld [vmem:[#allocation5 + $0x1708] sm:$0xff]
    %v927 = vld [vmem:[#allocation5 + $0x1710] sm:$0xff]
    %v928 = vld [vmem:[#allocation5 + $0x1718] sm:$0xff]
    %v929 = vld [vmem:[#allocation5 + $0x1720] sm:$0xff]
    %v930 = vld [vmem:[#allocation5 + $0x1728] sm:$0xff]
    %v931 = vld [vmem:[#allocation5 + $0x1730] sm:$0xff]
    %v932 = vld [vmem:[#allocation5 + $0x1738] sm:$0xff]
    %v933 = vld [vmem:[#allocation5 + $0x1740] sm:$0xff]
    %v934 = vld [vmem:[#allocation5 + $0x1748] sm:$0xff]
    %v935 = vld [vmem:[#allocation5 + $0x1750] sm:$0xff]
    %v936 = vld [vmem:[#allocation5 + $0x1758] sm:$0xff]
    %v937 = vld [vmem:[#allocation5 + $0x1760] sm:$0xff]
    %v938 = vld [vmem:[#allocation5 + $0x1768] sm:$0xff]
    %v939 = vld [vmem:[#allocation5 + $0x1770] sm:$0xff]
    %v940 = vld [vmem:[#allocation5 + $0x1778] sm:$0xff]
    %v941 = vld [vmem:[#allocation5 + $0x1780] sm:$0xff]
    %v942 = vld [vmem:[#allocation5 + $0x1788] sm:$0xff]
    %v943 = vld [vmem:[#allocation5 + $0x1790] sm:$0xff]
    %v944 = vld [vmem:[#allocation5 + $0x1798] sm:$0xff]
    %v945 = vld [vmem:[#allocation5 + $0x17a0] sm:$0xff]
    %v946 = vld [vmem:[#allocation5 + $0x17a8] sm:$0xff]
    %v947 = vld [vmem:[#allocation5 + $0x17b0] sm:$0xff]
    %v948 = vld [vmem:[#allocation5 + $0x17b8] sm:$0xff]
    %v949 = vld [vmem:[#allocation5 + $0x17c0] sm:$0xff]
    %v950 = vld [vmem:[#allocation5 + $0x17c8] sm:$0xff]
    %v951 = vld [vmem:[#allocation5 + $0x17d0] sm:$0xff]
    %v952 = vld [vmem:[#allocation5 + $0x17d8] sm:$0xff]
    %v953 = vld [vmem:[#allocation5 + $0x17e0] sm:$0xff]
    %v954 = vld [vmem:[#allocation5 + $0x17e8] sm:$0xff]
    %v955 = vld [vmem:[#allocation5 + $0x17f0] sm:$0xff]
    %v956 = vld [vmem:[#allocation5 + $0x17f8] sm:$0xff]
    %v957 = vld [vmem:[#allocation7] sm:$0xf]
    %v959 = vlaneseq
    %v960 = vshrl.u32 %v959, 7
    %v961 = vsub.s32 0, %v960
    %v962 = vrot.slane %v957, %v961
    %v963 = vlaneseq
    %v964 = vshrl.u32 %v963, 7
    %v965 = vsub.s32 1, %v964
    %v966 = vrot.slane %v957, %v965
    %v967 = vlaneseq
    %v968 = vshrl.u32 %v967, 7
    %v969 = vsub.s32 2, %v968
    %v970 = vrot.slane %v957, %v969
    %v971 = vlaneseq
    %v972 = vshrl.u32 %v971, 7
    %v973 = vsub.s32 3, %v972
    %v974 = vrot.slane %v957, %v973
    %v1747 = vunpack.c.l.b16 %v189
    %v1748 = vunpack.c.h.b16 %v189
    %v1749 = vunpack.c.l.b16 %v190
    %v1750 = vunpack.c.h.b16 %v190
    %v1751 = vunpack.c.l.b16 %v191
    %v1752 = vunpack.c.h.b16 %v191
    %v1753 = vunpack.c.l.b16 %v192
    %v1754 = vunpack.c.h.b16 %v192
    %v1755 = vunpack.c.l.b16 %v193
    %v1756 = vunpack.c.h.b16 %v193
    %v1757 = vunpack.c.l.b16 %v194
    %v1758 = vunpack.c.h.b16 %v194
    %v1759 = vunpack.c.l.b16 %v195
    %v1760 = vunpack.c.h.b16 %v195
    %v1761 = vunpack.c.l.b16 %v196
    %v1762 = vunpack.c.h.b16 %v196
    %v1763 = vunpack.c.l.b16 %v197
    %v1764 = vunpack.c.h.b16 %v197
    %v1765 = vunpack.c.l.b16 %v198
    %v1766 = vunpack.c.h.b16 %v198
    %v1767 = vunpack.c.l.b16 %v199
    %v1768 = vunpack.c.h.b16 %v199
    %v1769 = vunpack.c.l.b16 %v200
    %v1770 = vunpack.c.h.b16 %v200
    %v1771 = vunpack.c.l.b16 %v201
    %v1772 = vunpack.c.h.b16 %v201
    %v1773 = vunpack.c.l.b16 %v202
    %v1774 = vunpack.c.h.b16 %v202
    %v1775 = vunpack.c.l.b16 %v203
    %v1776 = vunpack.c.h.b16 %v203
    %v1777 = vunpack.c.l.b16 %v204
    %v1778 = vunpack.c.h.b16 %v204
    %v1779 = vunpack.c.l.b16 %v205
    %v1780 = vunpack.c.h.b16 %v205
    %v1781 = vunpack.c.l.b16 %v206
    %v1782 = vunpack.c.h.b16 %v206
    %v1783 = vunpack.c.l.b16 %v207
    %v1784 = vunpack.c.h.b16 %v207
    %v1785 = vunpack.c.l.b16 %v208
    %v1786 = vunpack.c.h.b16 %v208
    %v1787 = vunpack.c.l.b16 %v209
    %v1788 = vunpack.c.h.b16 %v209
    %v1789 = vunpack.c.l.b16 %v210
    %v1790 = vunpack.c.h.b16 %v210
    %v1791 = vunpack.c.l.b16 %v211
    %v1792 = vunpack.c.h.b16 %v211
    %v1793 = vunpack.c.l.b16 %v212
    %v1794 = vunpack.c.h.b16 %v212
    %v1795 = vunpack.c.l.b16 %v213
    %v1796 = vunpack.c.h.b16 %v213
    %v1797 = vunpack.c.l.b16 %v214
    %v1798 = vunpack.c.h.b16 %v214
    %v1799 = vunpack.c.l.b16 %v215
    %v1800 = vunpack.c.h.b16 %v215
    %v1801 = vunpack.c.l.b16 %v216
    %v1802 = vunpack.c.h.b16 %v216
    %v1803 = vunpack.c.l.b16 %v217
    %v1804 = vunpack.c.h.b16 %v217
    %v1805 = vunpack.c.l.b16 %v218
    %v1806 = vunpack.c.h.b16 %v218
    %v1807 = vunpack.c.l.b16 %v219
    %v1808 = vunpack.c.h.b16 %v219
    %v1809 = vunpack.c.l.b16 %v220
    %v1810 = vunpack.c.h.b16 %v220
    %v1811 = vunpack.c.l.b16 %v221
    %v1812 = vunpack.c.h.b16 %v221
    %v1813 = vunpack.c.l.b16 %v222
    %v1814 = vunpack.c.h.b16 %v222
    %v1815 = vunpack.c.l.b16 %v223
    %v1816 = vunpack.c.h.b16 %v223
    %v1817 = vunpack.c.l.b16 %v224
    %v1818 = vunpack.c.h.b16 %v224
    %v1819 = vunpack.c.l.b16 %v225
    %v1820 = vunpack.c.h.b16 %v225
    %v1821 = vunpack.c.l.b16 %v226
    %v1822 = vunpack.c.h.b16 %v226
    %v1823 = vunpack.c.l.b16 %v227
    %v1824 = vunpack.c.h.b16 %v227
    %v1825 = vunpack.c.l.b16 %v228
    %v1826 = vunpack.c.h.b16 %v228
    %v1827 = vunpack.c.l.b16 %v229
    %v1828 = vunpack.c.h.b16 %v229
    %v1829 = vunpack.c.l.b16 %v230
    %v1830 = vunpack.c.h.b16 %v230
    %v1831 = vunpack.c.l.b16 %v231
    %v1832 = vunpack.c.h.b16 %v231
    %v1833 = vunpack.c.l.b16 %v232
    %v1834 = vunpack.c.h.b16 %v232
    %v1835 = vunpack.c.l.b16 %v233
    %v1836 = vunpack.c.h.b16 %v233
    %v1837 = vunpack.c.l.b16 %v234
    %v1838 = vunpack.c.h.b16 %v234
    %v1839 = vunpack.c.l.b16 %v235
    %v1840 = vunpack.c.h.b16 %v235
    %v1841 = vunpack.c.l.b16 %v236
    %v1842 = vunpack.c.h.b16 %v236
    %v1843 = vunpack.c.l.b16 %v237
    %v1844 = vunpack.c.h.b16 %v237
    %v1845 = vunpack.c.l.b16 %v238
    %v1846 = vunpack.c.h.b16 %v238
    %v1847 = vunpack.c.l.b16 %v239
    %v1848 = vunpack.c.h.b16 %v239
    %v1849 = vunpack.c.l.b16 %v240
    %v1850 = vunpack.c.h.b16 %v240
    %v1851 = vunpack.c.l.b16 %v241
    %v1852 = vunpack.c.h.b16 %v241
    %v1853 = vunpack.c.l.b16 %v242
    %v1854 = vunpack.c.h.b16 %v242
    %v1855 = vunpack.c.l.b16 %v243
    %v1856 = vunpack.c.h.b16 %v243
    %v1857 = vunpack.c.l.b16 %v244
    %v1858 = vunpack.c.h.b16 %v244
    %v1859 = vunpack.c.l.b16 %v245
    %v1860 = vunpack.c.h.b16 %v245
    %v1861 = vunpack.c.l.b16 %v246
    %v1862 = vunpack.c.h.b16 %v246
    %v1863 = vunpack.c.l.b16 %v247
    %v1864 = vunpack.c.h.b16 %v247
    %v1865 = vunpack.c.l.b16 %v248
    %v1866 = vunpack.c.h.b16 %v248
    %v1867 = vunpack.c.l.b16 %v249
    %v1868 = vunpack.c.h.b16 %v249
    %v1869 = vunpack.c.l.b16 %v250
    %v1870 = vunpack.c.h.b16 %v250
    %v1871 = vunpack.c.l.b16 %v251
    %v1872 = vunpack.c.h.b16 %v251
    %v1873 = vunpack.c.l.b16 %v252
    %v1874 = vunpack.c.h.b16 %v252
    %v1875 = vunpack.c.l.b16 %v253
    %v1876 = vunpack.c.h.b16 %v253
    %v1877 = vunpack.c.l.b16 %v254
    %v1878 = vunpack.c.h.b16 %v254
    %v1879 = vunpack.c.l.b16 %v255
    %v1880 = vunpack.c.h.b16 %v255
    %v1881 = vunpack.c.l.b16 %v256
    %v1882 = vunpack.c.h.b16 %v256
    %v1883 = vunpack.c.l.b16 %v257
    %v1884 = vunpack.c.h.b16 %v257
    %v1885 = vunpack.c.l.b16 %v258
    %v1886 = vunpack.c.h.b16 %v258
    %v1887 = vunpack.c.l.b16 %v259
    %v1888 = vunpack.c.h.b16 %v259
    %v1889 = vunpack.c.l.b16 %v260
    %v1890 = vunpack.c.h.b16 %v260
    %v1891 = vunpack.c.l.b16 %v261
    %v1892 = vunpack.c.h.b16 %v261
    %v1893 = vunpack.c.l.b16 %v262
    %v1894 = vunpack.c.h.b16 %v262
    %v1895 = vunpack.c.l.b16 %v263
    %v1896 = vunpack.c.h.b16 %v263
    %v1897 = vunpack.c.l.b16 %v264
    %v1898 = vunpack.c.h.b16 %v264
    %v1899 = vunpack.c.l.b16 %v265
    %v1900 = vunpack.c.h.b16 %v265
    %v1901 = vunpack.c.l.b16 %v266
    %v1902 = vunpack.c.h.b16 %v266
    %v1903 = vunpack.c.l.b16 %v267
    %v1904 = vunpack.c.h.b16 %v267
    %v1905 = vunpack.c.l.b16 %v268
    %v1906 = vunpack.c.h.b16 %v268
    %v1907 = vunpack.c.l.b16 %v269
    %v1908 = vunpack.c.h.b16 %v269
    %v1909 = vunpack.c.l.b16 %v270
    %v1910 = vunpack.c.h.b16 %v270
    %v1911 = vunpack.c.l.b16 %v271
    %v1912 = vunpack.c.h.b16 %v271
    %v1913 = vunpack.c.l.b16 %v272
    %v1914 = vunpack.c.h.b16 %v272
    %v1915 = vunpack.c.l.b16 %v273
    %v1916 = vunpack.c.h.b16 %v273
    %v1917 = vunpack.c.l.b16 %v274
    %v1918 = vunpack.c.h.b16 %v274
    %v1919 = vunpack.c.l.b16 %v275
    %v1920 = vunpack.c.h.b16 %v275
    %v1921 = vunpack.c.l.b16 %v276
    %v1922 = vunpack.c.h.b16 %v276
    %v1923 = vunpack.c.l.b16 %v277
    %v1924 = vunpack.c.h.b16 %v277
    %v1925 = vunpack.c.l.b16 %v278
    %v1926 = vunpack.c.h.b16 %v278
    %v1927 = vunpack.c.l.b16 %v279
    %v1928 = vunpack.c.h.b16 %v279
    %v1929 = vunpack.c.l.b16 %v280
    %v1930 = vunpack.c.h.b16 %v280
    %v1931 = vunpack.c.l.b16 %v281
    %v1932 = vunpack.c.h.b16 %v281
    %v1933 = vunpack.c.l.b16 %v282
    %v1934 = vunpack.c.h.b16 %v282
    %v1935 = vunpack.c.l.b16 %v283
    %v1936 = vunpack.c.h.b16 %v283
    %v1937 = vunpack.c.l.b16 %v284
    %v1938 = vunpack.c.h.b16 %v284
    %v1939 = vunpack.c.l.b16 %v285
    %v1940 = vunpack.c.h.b16 %v285
    %v1941 = vunpack.c.l.b16 %v286
    %v1942 = vunpack.c.h.b16 %v286
    %v1943 = vunpack.c.l.b16 %v287
    %v1944 = vunpack.c.h.b16 %v287
    %v1945 = vunpack.c.l.b16 %v288
    %v1946 = vunpack.c.h.b16 %v288
    %v1947 = vunpack.c.l.b16 %v289
    %v1948 = vunpack.c.h.b16 %v289
    %v1949 = vunpack.c.l.b16 %v290
    %v1950 = vunpack.c.h.b16 %v290
    %v1951 = vunpack.c.l.b16 %v291
    %v1952 = vunpack.c.h.b16 %v291
    %v1953 = vunpack.c.l.b16 %v292
    %v1954 = vunpack.c.h.b16 %v292
    %v1955 = vunpack.c.l.b16 %v293
    %v1956 = vunpack.c.h.b16 %v293
    %v1957 = vunpack.c.l.b16 %v294
    %v1958 = vunpack.c.h.b16 %v294
    %v1959 = vunpack.c.l.b16 %v295
    %v1960 = vunpack.c.h.b16 %v295
    %v1961 = vunpack.c.l.b16 %v296
    %v1962 = vunpack.c.h.b16 %v296
    %v1963 = vunpack.c.l.b16 %v297
    %v1964 = vunpack.c.h.b16 %v297
    %v1965 = vunpack.c.l.b16 %v298
    %v1966 = vunpack.c.h.b16 %v298
    %v1967 = vunpack.c.l.b16 %v299
    %v1968 = vunpack.c.h.b16 %v299
    %v1969 = vunpack.c.l.b16 %v300
    %v1970 = vunpack.c.h.b16 %v300
    %v1971 = vunpack.c.l.b16 %v301
    %v1972 = vunpack.c.h.b16 %v301
    %v1973 = vunpack.c.l.b16 %v302
    %v1974 = vunpack.c.h.b16 %v302
    %v1975 = vunpack.c.l.b16 %v303
    %v1976 = vunpack.c.h.b16 %v303
    %v1977 = vunpack.c.l.b16 %v304
    %v1978 = vunpack.c.h.b16 %v304
    %v1979 = vunpack.c.l.b16 %v305
    %v1980 = vunpack.c.h.b16 %v305
    %v1981 = vunpack.c.l.b16 %v306
    %v1982 = vunpack.c.h.b16 %v306
    %v1983 = vunpack.c.l.b16 %v307
    %v1984 = vunpack.c.h.b16 %v307
    %v1985 = vunpack.c.l.b16 %v308
    %v1986 = vunpack.c.h.b16 %v308
    %v1987 = vunpack.c.l.b16 %v309
    %v1988 = vunpack.c.h.b16 %v309
    %v1989 = vunpack.c.l.b16 %v310
    %v1990 = vunpack.c.h.b16 %v310
    %v1991 = vunpack.c.l.b16 %v311
    %v1992 = vunpack.c.h.b16 %v311
    %v1993 = vunpack.c.l.b16 %v312
    %v1994 = vunpack.c.h.b16 %v312
    %v1995 = vunpack.c.l.b16 %v313
    %v1996 = vunpack.c.h.b16 %v313
    %v1997 = vunpack.c.l.b16 %v314
    %v1998 = vunpack.c.h.b16 %v314
    %v1999 = vunpack.c.l.b16 %v315
    %v2000 = vunpack.c.h.b16 %v315
    %v2001 = vunpack.c.l.b16 %v316
    %v2002 = vunpack.c.h.b16 %v316
    %v2003 = vunpack.c.l.b16 %v317
    %v2004 = vunpack.c.h.b16 %v317
    %v2005 = vunpack.c.l.b16 %v318
    %v2006 = vunpack.c.h.b16 %v318
    %v2007 = vunpack.c.l.b16 %v319
    %v2008 = vunpack.c.h.b16 %v319
    %v2009 = vunpack.c.l.b16 %v320
    %v2010 = vunpack.c.h.b16 %v320
    %v2011 = vunpack.c.l.b16 %v321
    %v2012 = vunpack.c.h.b16 %v321
    %v2013 = vunpack.c.l.b16 %v322
    %v2014 = vunpack.c.h.b16 %v322
    %v2015 = vunpack.c.l.b16 %v323
    %v2016 = vunpack.c.h.b16 %v323
    %v2017 = vunpack.c.l.b16 %v324
    %v2018 = vunpack.c.h.b16 %v324
    %v2019 = vunpack.c.l.b16 %v325
    %v2020 = vunpack.c.h.b16 %v325
    %v2021 = vunpack.c.l.b16 %v326
    %v2022 = vunpack.c.h.b16 %v326
    %v2023 = vunpack.c.l.b16 %v327
    %v2024 = vunpack.c.h.b16 %v327
    %v2025 = vunpack.c.l.b16 %v328
    %v2026 = vunpack.c.h.b16 %v328
    %v2027 = vunpack.c.l.b16 %v329
    %v2028 = vunpack.c.h.b16 %v329
    %v2029 = vunpack.c.l.b16 %v330
    %v2030 = vunpack.c.h.b16 %v330
    %v2031 = vunpack.c.l.b16 %v331
    %v2032 = vunpack.c.h.b16 %v331
    %v2033 = vunpack.c.l.b16 %v332
    %v2034 = vunpack.c.h.b16 %v332
    %v2035 = vunpack.c.l.b16 %v333
    %v2036 = vunpack.c.h.b16 %v333
    %v2037 = vunpack.c.l.b16 %v334
    %v2038 = vunpack.c.h.b16 %v334
    %v2039 = vunpack.c.l.b16 %v335
    %v2040 = vunpack.c.h.b16 %v335
    %v2041 = vunpack.c.l.b16 %v336
    %v2042 = vunpack.c.h.b16 %v336
    %v2043 = vunpack.c.l.b16 %v337
    %v2044 = vunpack.c.h.b16 %v337
    %v2045 = vunpack.c.l.b16 %v338
    %v2046 = vunpack.c.h.b16 %v338
    %v2047 = vunpack.c.l.b16 %v339
    %v2048 = vunpack.c.h.b16 %v339
    %v2049 = vunpack.c.l.b16 %v340
    %v2050 = vunpack.c.h.b16 %v340
    %v2051 = vunpack.c.l.b16 %v341
    %v2052 = vunpack.c.h.b16 %v341
    %v2053 = vunpack.c.l.b16 %v342
    %v2054 = vunpack.c.h.b16 %v342
    %v2055 = vunpack.c.l.b16 %v343
    %v2056 = vunpack.c.h.b16 %v343
    %v2057 = vunpack.c.l.b16 %v344
    %v2058 = vunpack.c.h.b16 %v344
    %v2059 = vunpack.c.l.b16 %v345
    %v2060 = vunpack.c.h.b16 %v345
    %v2061 = vunpack.c.l.b16 %v346
    %v2062 = vunpack.c.h.b16 %v346
    %v2063 = vunpack.c.l.b16 %v347
    %v2064 = vunpack.c.h.b16 %v347
    %v2065 = vunpack.c.l.b16 %v348
    %v2066 = vunpack.c.h.b16 %v348
    %v2067 = vunpack.c.l.b16 %v349
    %v2068 = vunpack.c.h.b16 %v349
    %v2069 = vunpack.c.l.b16 %v350
    %v2070 = vunpack.c.h.b16 %v350
    %v2071 = vunpack.c.l.b16 %v351
    %v2072 = vunpack.c.h.b16 %v351
    %v2073 = vunpack.c.l.b16 %v352
    %v2074 = vunpack.c.h.b16 %v352
    %v2075 = vunpack.c.l.b16 %v353
    %v2076 = vunpack.c.h.b16 %v353
    %v2077 = vunpack.c.l.b16 %v354
    %v2078 = vunpack.c.h.b16 %v354
    %v2079 = vunpack.c.l.b16 %v355
    %v2080 = vunpack.c.h.b16 %v355
    %v2081 = vunpack.c.l.b16 %v356
    %v2082 = vunpack.c.h.b16 %v356
    %v2083 = vunpack.c.l.b16 %v357
    %v2084 = vunpack.c.h.b16 %v357
    %v2085 = vunpack.c.l.b16 %v358
    %v2086 = vunpack.c.h.b16 %v358
    %v2087 = vunpack.c.l.b16 %v359
    %v2088 = vunpack.c.h.b16 %v359
    %v2089 = vunpack.c.l.b16 %v360
    %v2090 = vunpack.c.h.b16 %v360
    %v2091 = vunpack.c.l.b16 %v361
    %v2092 = vunpack.c.h.b16 %v361
    %v2093 = vunpack.c.l.b16 %v362
    %v2094 = vunpack.c.h.b16 %v362
    %v2095 = vunpack.c.l.b16 %v363
    %v2096 = vunpack.c.h.b16 %v363
    %v2097 = vunpack.c.l.b16 %v364
    %v2098 = vunpack.c.h.b16 %v364
    %v2099 = vunpack.c.l.b16 %v365
    %v2100 = vunpack.c.h.b16 %v365
    %v2101 = vunpack.c.l.b16 %v366
    %v2102 = vunpack.c.h.b16 %v366
    %v2103 = vunpack.c.l.b16 %v367
    %v2104 = vunpack.c.h.b16 %v367
    %v2105 = vunpack.c.l.b16 %v368
    %v2106 = vunpack.c.h.b16 %v368
    %v2107 = vunpack.c.l.b16 %v369
    %v2108 = vunpack.c.h.b16 %v369
    %v2109 = vunpack.c.l.b16 %v370
    %v2110 = vunpack.c.h.b16 %v370
    %v2111 = vunpack.c.l.b16 %v371
    %v2112 = vunpack.c.h.b16 %v371
    %v2113 = vunpack.c.l.b16 %v372
    %v2114 = vunpack.c.h.b16 %v372
    %v2115 = vunpack.c.l.b16 %v373
    %v2116 = vunpack.c.h.b16 %v373
    %v2117 = vunpack.c.l.b16 %v374
    %v2118 = vunpack.c.h.b16 %v374
    %v2119 = vunpack.c.l.b16 %v375
    %v2120 = vunpack.c.h.b16 %v375
    %v2121 = vunpack.c.l.b16 %v376
    %v2122 = vunpack.c.h.b16 %v376
    %v2123 = vunpack.c.l.b16 %v377
    %v2124 = vunpack.c.h.b16 %v377
    %v2125 = vunpack.c.l.b16 %v378
    %v2126 = vunpack.c.h.b16 %v378
    %v2127 = vunpack.c.l.b16 %v379
    %v2128 = vunpack.c.h.b16 %v379
    %v2129 = vunpack.c.l.b16 %v380
    %v2130 = vunpack.c.h.b16 %v380
    %v2131 = vunpack.c.l.b16 %v381
    %v2132 = vunpack.c.h.b16 %v381
    %v2133 = vunpack.c.l.b16 %v382
    %v2134 = vunpack.c.h.b16 %v382
    %v2135 = vunpack.c.l.b16 %v383
    %v2136 = vunpack.c.h.b16 %v383
    %v2137 = vunpack.c.l.b16 %v384
    %v2138 = vunpack.c.h.b16 %v384
    %v2139 = vunpack.c.l.b16 %v385
    %v2140 = vunpack.c.h.b16 %v385
    %v2141 = vunpack.c.l.b16 %v386
    %v2142 = vunpack.c.h.b16 %v386
    %v2143 = vunpack.c.l.b16 %v387
    %v2144 = vunpack.c.h.b16 %v387
    %v2145 = vunpack.c.l.b16 %v388
    %v2146 = vunpack.c.h.b16 %v388
    %v2147 = vunpack.c.l.b16 %v389
    %v2148 = vunpack.c.h.b16 %v389
    %v2149 = vunpack.c.l.b16 %v390
    %v2150 = vunpack.c.h.b16 %v390
    %v2151 = vunpack.c.l.b16 %v391
    %v2152 = vunpack.c.h.b16 %v391
    %v2153 = vunpack.c.l.b16 %v392
    %v2154 = vunpack.c.h.b16 %v392
    %v2155 = vunpack.c.l.b16 %v393
    %v2156 = vunpack.c.h.b16 %v393
    %v2157 = vunpack.c.l.b16 %v394
    %v2158 = vunpack.c.h.b16 %v394
    %v2159 = vunpack.c.l.b16 %v395
    %v2160 = vunpack.c.h.b16 %v395
    %v2161 = vunpack.c.l.b16 %v396
    %v2162 = vunpack.c.h.b16 %v396
    %v2163 = vunpack.c.l.b16 %v397
    %v2164 = vunpack.c.h.b16 %v397
    %v2165 = vunpack.c.l.b16 %v398
    %v2166 = vunpack.c.h.b16 %v398
    %v2167 = vunpack.c.l.b16 %v399
    %v2168 = vunpack.c.h.b16 %v399
    %v2169 = vunpack.c.l.b16 %v400
    %v2170 = vunpack.c.h.b16 %v400
    %v2171 = vunpack.c.l.b16 %v401
    %v2172 = vunpack.c.h.b16 %v401
    %v2173 = vunpack.c.l.b16 %v402
    %v2174 = vunpack.c.h.b16 %v402
    %v2175 = vunpack.c.l.b16 %v403
    %v2176 = vunpack.c.h.b16 %v403
    %v2177 = vunpack.c.l.b16 %v404
    %v2178 = vunpack.c.h.b16 %v404
    %v2179 = vunpack.c.l.b16 %v405
    %v2180 = vunpack.c.h.b16 %v405
    %v2181 = vunpack.c.l.b16 %v406
    %v2182 = vunpack.c.h.b16 %v406
    %v2183 = vunpack.c.l.b16 %v407
    %v2184 = vunpack.c.h.b16 %v407
    %v2185 = vunpack.c.l.b16 %v408
    %v2186 = vunpack.c.h.b16 %v408
    %v2187 = vunpack.c.l.b16 %v409
    %v2188 = vunpack.c.h.b16 %v409
    %v2189 = vunpack.c.l.b16 %v410
    %v2190 = vunpack.c.h.b16 %v410
    %v2191 = vunpack.c.l.b16 %v411
    %v2192 = vunpack.c.h.b16 %v411
    %v2193 = vunpack.c.l.b16 %v412
    %v2194 = vunpack.c.h.b16 %v412
    %v2195 = vunpack.c.l.b16 %v413
    %v2196 = vunpack.c.h.b16 %v413
    %v2197 = vunpack.c.l.b16 %v414
    %v2198 = vunpack.c.h.b16 %v414
    %v2199 = vunpack.c.l.b16 %v415
    %v2200 = vunpack.c.h.b16 %v415
    %v2201 = vunpack.c.l.b16 %v416
    %v2202 = vunpack.c.h.b16 %v416
    %v2203 = vunpack.c.l.b16 %v417
    %v2204 = vunpack.c.h.b16 %v417
    %v2205 = vunpack.c.l.b16 %v418
    %v2206 = vunpack.c.h.b16 %v418
    %v2207 = vunpack.c.l.b16 %v419
    %v2208 = vunpack.c.h.b16 %v419
    %v2209 = vunpack.c.l.b16 %v420
    %v2210 = vunpack.c.h.b16 %v420
    %v2211 = vunpack.c.l.b16 %v421
    %v2212 = vunpack.c.h.b16 %v421
    %v2213 = vunpack.c.l.b16 %v422
    %v2214 = vunpack.c.h.b16 %v422
    %v2215 = vunpack.c.l.b16 %v423
    %v2216 = vunpack.c.h.b16 %v423
    %v2217 = vunpack.c.l.b16 %v424
    %v2218 = vunpack.c.h.b16 %v424
    %v2219 = vunpack.c.l.b16 %v425
    %v2220 = vunpack.c.h.b16 %v425
    %v2221 = vunpack.c.l.b16 %v426
    %v2222 = vunpack.c.h.b16 %v426
    %v2223 = vunpack.c.l.b16 %v427
    %v2224 = vunpack.c.h.b16 %v427
    %v2225 = vunpack.c.l.b16 %v428
    %v2226 = vunpack.c.h.b16 %v428
    %v2227 = vunpack.c.l.b16 %v429
    %v2228 = vunpack.c.h.b16 %v429
    %v2229 = vunpack.c.l.b16 %v430
    %v2230 = vunpack.c.h.b16 %v430
    %v2231 = vunpack.c.l.b16 %v431
    %v2232 = vunpack.c.h.b16 %v431
    %v2233 = vunpack.c.l.b16 %v432
    %v2234 = vunpack.c.h.b16 %v432
    %v2235 = vunpack.c.l.b16 %v433
    %v2236 = vunpack.c.h.b16 %v433
    %v2237 = vunpack.c.l.b16 %v434
    %v2238 = vunpack.c.h.b16 %v434
    %v2239 = vunpack.c.l.b16 %v435
    %v2240 = vunpack.c.h.b16 %v435
    %v2241 = vunpack.c.l.b16 %v436
    %v2242 = vunpack.c.h.b16 %v436
    %v2243 = vunpack.c.l.b16 %v437
    %v2244 = vunpack.c.h.b16 %v437
    %v2245 = vunpack.c.l.b16 %v438
    %v2246 = vunpack.c.h.b16 %v438
    %v2247 = vunpack.c.l.b16 %v439
    %v2248 = vunpack.c.h.b16 %v439
    %v2249 = vunpack.c.l.b16 %v440
    %v2250 = vunpack.c.h.b16 %v440
    %v2251 = vunpack.c.l.b16 %v441
    %v2252 = vunpack.c.h.b16 %v441
    %v2253 = vunpack.c.l.b16 %v442
    %v2254 = vunpack.c.h.b16 %v442
    %v2255 = vunpack.c.l.b16 %v443
    %v2256 = vunpack.c.h.b16 %v443
    %v2257 = vunpack.c.l.b16 %v444
    %v2258 = vunpack.c.h.b16 %v444
    %v2259 = vunpack.c.l.b16 %v445
    %v2260 = vunpack.c.h.b16 %v445
    %v2261 = vunpack.c.l.b16 %v446
    %v2262 = vunpack.c.h.b16 %v446
    %v2263 = vunpack.c.l.b16 %v447
    %v2264 = vunpack.c.h.b16 %v447
    %v2265 = vunpack.c.l.b16 %v448
    %v2266 = vunpack.c.h.b16 %v448
    %v2267 = vunpack.c.l.b16 %v449
    %v2268 = vunpack.c.h.b16 %v449
    %v2269 = vunpack.c.l.b16 %v450
    %v2270 = vunpack.c.h.b16 %v450
    %v2271 = vunpack.c.l.b16 %v451
    %v2272 = vunpack.c.h.b16 %v451
    %v2273 = vunpack.c.l.b16 %v452
    %v2274 = vunpack.c.h.b16 %v452
    %v2275 = vunpack.c.l.b16 %v453
    %v2276 = vunpack.c.h.b16 %v453
    %v2277 = vunpack.c.l.b16 %v454
    %v2278 = vunpack.c.h.b16 %v454
    %v2279 = vunpack.c.l.b16 %v455
    %v2280 = vunpack.c.h.b16 %v455
    %v2281 = vunpack.c.l.b16 %v456
    %v2282 = vunpack.c.h.b16 %v456
    %v2283 = vunpack.c.l.b16 %v457
    %v2284 = vunpack.c.h.b16 %v457
    %v2285 = vunpack.c.l.b16 %v458
    %v2286 = vunpack.c.h.b16 %v458
    %v2287 = vunpack.c.l.b16 %v459
    %v2288 = vunpack.c.h.b16 %v459
    %v2289 = vunpack.c.l.b16 %v460
    %v2290 = vunpack.c.h.b16 %v460
    %v2291 = vunpack.c.l.b16 %v461
    %v2292 = vunpack.c.h.b16 %v461
    %v2293 = vunpack.c.l.b16 %v462
    %v2294 = vunpack.c.h.b16 %v462
    %v2295 = vunpack.c.l.b16 %v463
    %v2296 = vunpack.c.h.b16 %v463
    %v2297 = vunpack.c.l.b16 %v464
    %v2298 = vunpack.c.h.b16 %v464
    %v2299 = vunpack.c.l.b16 %v465
    %v2300 = vunpack.c.h.b16 %v465
    %v2301 = vunpack.c.l.b16 %v466
    %v2302 = vunpack.c.h.b16 %v466
    %v2303 = vunpack.c.l.b16 %v467
    %v2304 = vunpack.c.h.b16 %v467
    %v2305 = vunpack.c.l.b16 %v468
    %v2306 = vunpack.c.h.b16 %v468
    %v2307 = vunpack.c.l.b16 %v469
    %v2308 = vunpack.c.h.b16 %v469
    %v2309 = vunpack.c.l.b16 %v470
    %v2310 = vunpack.c.h.b16 %v470
    %v2311 = vunpack.c.l.b16 %v471
    %v2312 = vunpack.c.h.b16 %v471
    %v2313 = vunpack.c.l.b16 %v472
    %v2314 = vunpack.c.h.b16 %v472
    %v2315 = vunpack.c.l.b16 %v473
    %v2316 = vunpack.c.h.b16 %v473
    %v2317 = vunpack.c.l.b16 %v474
    %v2318 = vunpack.c.h.b16 %v474
    %v2319 = vunpack.c.l.b16 %v475
    %v2320 = vunpack.c.h.b16 %v475
    %v2321 = vunpack.c.l.b16 %v476
    %v2322 = vunpack.c.h.b16 %v476
    %v2323 = vunpack.c.l.b16 %v477
    %v2324 = vunpack.c.h.b16 %v477
    %v2325 = vunpack.c.l.b16 %v478
    %v2326 = vunpack.c.h.b16 %v478
    %v2327 = vunpack.c.l.b16 %v479
    %v2328 = vunpack.c.h.b16 %v479
    %v2329 = vunpack.c.l.b16 %v480
    %v2330 = vunpack.c.h.b16 %v480
    %v2331 = vunpack.c.l.b16 %v481
    %v2332 = vunpack.c.h.b16 %v481
    %v2333 = vunpack.c.l.b16 %v482
    %v2334 = vunpack.c.h.b16 %v482
    %v2335 = vunpack.c.l.b16 %v483
    %v2336 = vunpack.c.h.b16 %v483
    %v2337 = vunpack.c.l.b16 %v484
    %v2338 = vunpack.c.h.b16 %v484
    %v2339 = vunpack.c.l.b16 %v485
    %v2340 = vunpack.c.h.b16 %v485
    %v2341 = vunpack.c.l.b16 %v486
    %v2342 = vunpack.c.h.b16 %v486
    %v2343 = vunpack.c.l.b16 %v487
    %v2344 = vunpack.c.h.b16 %v487
    %v2345 = vunpack.c.l.b16 %v488
    %v2346 = vunpack.c.h.b16 %v488
    %v2347 = vunpack.c.l.b16 %v489
    %v2348 = vunpack.c.h.b16 %v489
    %v2349 = vunpack.c.l.b16 %v490
    %v2350 = vunpack.c.h.b16 %v490
    %v2351 = vunpack.c.l.b16 %v491
    %v2352 = vunpack.c.h.b16 %v491
    %v2353 = vunpack.c.l.b16 %v492
    %v2354 = vunpack.c.h.b16 %v492
    %v2355 = vunpack.c.l.b16 %v493
    %v2356 = vunpack.c.h.b16 %v493
    %v2357 = vunpack.c.l.b16 %v494
    %v2358 = vunpack.c.h.b16 %v494
    %v2359 = vunpack.c.l.b16 %v495
    %v2360 = vunpack.c.h.b16 %v495
    %v2361 = vunpack.c.l.b16 %v496
    %v2362 = vunpack.c.h.b16 %v496
    %v2363 = vunpack.c.l.b16 %v497
    %v2364 = vunpack.c.h.b16 %v497
    %v2365 = vunpack.c.l.b16 %v498
    %v2366 = vunpack.c.h.b16 %v498
    %v2367 = vunpack.c.l.b16 %v499
    %v2368 = vunpack.c.h.b16 %v499
    %v2369 = vunpack.c.l.b16 %v500
    %v2370 = vunpack.c.h.b16 %v500
    %v2371 = vunpack.c.l.b16 %v501
    %v2372 = vunpack.c.h.b16 %v501
    %v2373 = vunpack.c.l.b16 %v502
    %v2374 = vunpack.c.h.b16 %v502
    %v2375 = vunpack.c.l.b16 %v503
    %v2376 = vunpack.c.h.b16 %v503
    %v2377 = vunpack.c.l.b16 %v504
    %v2378 = vunpack.c.h.b16 %v504
    %v2379 = vunpack.c.l.b16 %v505
    %v2380 = vunpack.c.h.b16 %v505
    %v2381 = vunpack.c.l.b16 %v506
    %v2382 = vunpack.c.h.b16 %v506
    %v2383 = vunpack.c.l.b16 %v507
    %v2384 = vunpack.c.h.b16 %v507
    %v2385 = vunpack.c.l.b16 %v508
    %v2386 = vunpack.c.h.b16 %v508
    %v2387 = vunpack.c.l.b16 %v509
    %v2388 = vunpack.c.h.b16 %v509
    %v2389 = vunpack.c.l.b16 %v510
    %v2390 = vunpack.c.h.b16 %v510
    %v2391 = vunpack.c.l.b16 %v511
    %v2392 = vunpack.c.h.b16 %v511
    %v2393 = vunpack.c.l.b16 %v512
    %v2394 = vunpack.c.h.b16 %v512
    %v2395 = vunpack.c.l.b16 %v513
    %v2396 = vunpack.c.h.b16 %v513
    %v2397 = vunpack.c.l.b16 %v514
    %v2398 = vunpack.c.h.b16 %v514
    %v2399 = vunpack.c.l.b16 %v515
    %v2400 = vunpack.c.h.b16 %v515
    %v2401 = vunpack.c.l.b16 %v516
    %v2402 = vunpack.c.h.b16 %v516
    %v2403 = vunpack.c.l.b16 %v517
    %v2404 = vunpack.c.h.b16 %v517
    %v2405 = vunpack.c.l.b16 %v518
    %v2406 = vunpack.c.h.b16 %v518
    %v2407 = vunpack.c.l.b16 %v519
    %v2408 = vunpack.c.h.b16 %v519
    %v2409 = vunpack.c.l.b16 %v520
    %v2410 = vunpack.c.h.b16 %v520
    %v2411 = vunpack.c.l.b16 %v521
    %v2412 = vunpack.c.h.b16 %v521
    %v2413 = vunpack.c.l.b16 %v522
    %v2414 = vunpack.c.h.b16 %v522
    %v2415 = vunpack.c.l.b16 %v523
    %v2416 = vunpack.c.h.b16 %v523
    %v2417 = vunpack.c.l.b16 %v524
    %v2418 = vunpack.c.h.b16 %v524
    %v2419 = vunpack.c.l.b16 %v525
    %v2420 = vunpack.c.h.b16 %v525
    %v2421 = vunpack.c.l.b16 %v526
    %v2422 = vunpack.c.h.b16 %v526
    %v2423 = vunpack.c.l.b16 %v527
    %v2424 = vunpack.c.h.b16 %v527
    %v2425 = vunpack.c.l.b16 %v528
    %v2426 = vunpack.c.h.b16 %v528
    %v2427 = vunpack.c.l.b16 %v529
    %v2428 = vunpack.c.h.b16 %v529
    %v2429 = vunpack.c.l.b16 %v530
    %v2430 = vunpack.c.h.b16 %v530
    %v2431 = vunpack.c.l.b16 %v531
    %v2432 = vunpack.c.h.b16 %v531
    %v2433 = vunpack.c.l.b16 %v532
    %v2434 = vunpack.c.h.b16 %v532
    %v2435 = vunpack.c.l.b16 %v533
    %v2436 = vunpack.c.h.b16 %v533
    %v2437 = vunpack.c.l.b16 %v534
    %v2438 = vunpack.c.h.b16 %v534
    %v2439 = vunpack.c.l.b16 %v535
    %v2440 = vunpack.c.h.b16 %v535
    %v2441 = vunpack.c.l.b16 %v536
    %v2442 = vunpack.c.h.b16 %v536
    %v2443 = vunpack.c.l.b16 %v537
    %v2444 = vunpack.c.h.b16 %v537
    %v2445 = vunpack.c.l.b16 %v538
    %v2446 = vunpack.c.h.b16 %v538
    %v2447 = vunpack.c.l.b16 %v539
    %v2448 = vunpack.c.h.b16 %v539
    %v2449 = vunpack.c.l.b16 %v540
    %v2450 = vunpack.c.h.b16 %v540
    %v2451 = vunpack.c.l.b16 %v541
    %v2452 = vunpack.c.h.b16 %v541
    %v2453 = vunpack.c.l.b16 %v542
    %v2454 = vunpack.c.h.b16 %v542
    %v2455 = vunpack.c.l.b16 %v543
    %v2456 = vunpack.c.h.b16 %v543
    %v2457 = vunpack.c.l.b16 %v544
    %v2458 = vunpack.c.h.b16 %v544
    %v2459 = vunpack.c.l.b16 %v545
    %v2460 = vunpack.c.h.b16 %v545
    %v2461 = vunpack.c.l.b16 %v546
    %v2462 = vunpack.c.h.b16 %v546
    %v2463 = vunpack.c.l.b16 %v547
    %v2464 = vunpack.c.h.b16 %v547
    %v2465 = vunpack.c.l.b16 %v548
    %v2466 = vunpack.c.h.b16 %v548
    %v2467 = vunpack.c.l.b16 %v549
    %v2468 = vunpack.c.h.b16 %v549
    %v2469 = vunpack.c.l.b16 %v550
    %v2470 = vunpack.c.h.b16 %v550
    %v2471 = vunpack.c.l.b16 %v551
    %v2472 = vunpack.c.h.b16 %v551
    %v2473 = vunpack.c.l.b16 %v552
    %v2474 = vunpack.c.h.b16 %v552
    %v2475 = vunpack.c.l.b16 %v553
    %v2476 = vunpack.c.h.b16 %v553
    %v2477 = vunpack.c.l.b16 %v554
    %v2478 = vunpack.c.h.b16 %v554
    %v2479 = vunpack.c.l.b16 %v555
    %v2480 = vunpack.c.h.b16 %v555
    %v2481 = vunpack.c.l.b16 %v556
    %v2482 = vunpack.c.h.b16 %v556
    %v2483 = vunpack.c.l.b16 %v557
    %v2484 = vunpack.c.h.b16 %v557
    %v2485 = vunpack.c.l.b16 %v558
    %v2486 = vunpack.c.h.b16 %v558
    %v2487 = vunpack.c.l.b16 %v559
    %v2488 = vunpack.c.h.b16 %v559
    %v2489 = vunpack.c.l.b16 %v560
    %v2490 = vunpack.c.h.b16 %v560
    %v2491 = vunpack.c.l.b16 %v561
    %v2492 = vunpack.c.h.b16 %v561
    %v2493 = vunpack.c.l.b16 %v562
    %v2494 = vunpack.c.h.b16 %v562
    %v2495 = vunpack.c.l.b16 %v563
    %v2496 = vunpack.c.h.b16 %v563
    %v2497 = vunpack.c.l.b16 %v564
    %v2498 = vunpack.c.h.b16 %v564
    %v2499 = vunpack.c.l.b16 %v565
    %v2500 = vunpack.c.h.b16 %v565
    %v2501 = vunpack.c.l.b16 %v566
    %v2502 = vunpack.c.h.b16 %v566
    %v2503 = vunpack.c.l.b16 %v567
    %v2504 = vunpack.c.h.b16 %v567
    %v2505 = vunpack.c.l.b16 %v568
    %v2506 = vunpack.c.h.b16 %v568
    %v2507 = vunpack.c.l.b16 %v569
    %v2508 = vunpack.c.h.b16 %v569
    %v2509 = vunpack.c.l.b16 %v570
    %v2510 = vunpack.c.h.b16 %v570
    %v2511 = vunpack.c.l.b16 %v571
    %v2512 = vunpack.c.h.b16 %v571
    %v2513 = vunpack.c.l.b16 %v572
    %v2514 = vunpack.c.h.b16 %v572
    %v2515 = vunpack.c.l.b16 %v573
    %v2516 = vunpack.c.h.b16 %v573
    %v2517 = vunpack.c.l.b16 %v574
    %v2518 = vunpack.c.h.b16 %v574
    %v2519 = vunpack.c.l.b16 %v575
    %v2520 = vunpack.c.h.b16 %v575
    %v2521 = vunpack.c.l.b16 %v576
    %v2522 = vunpack.c.h.b16 %v576
    %v2523 = vunpack.c.l.b16 %v577
    %v2524 = vunpack.c.h.b16 %v577
    %v2525 = vunpack.c.l.b16 %v578
    %v2526 = vunpack.c.h.b16 %v578
    %v2527 = vunpack.c.l.b16 %v579
    %v2528 = vunpack.c.h.b16 %v579
    %v2529 = vunpack.c.l.b16 %v580
    %v2530 = vunpack.c.h.b16 %v580
    %v2531 = vunpack.c.l.b16 %v581
    %v2532 = vunpack.c.h.b16 %v581
    %v2533 = vunpack.c.l.b16 %v582
    %v2534 = vunpack.c.h.b16 %v582
    %v2535 = vunpack.c.l.b16 %v583
    %v2536 = vunpack.c.h.b16 %v583
    %v2537 = vunpack.c.l.b16 %v584
    %v2538 = vunpack.c.h.b16 %v584
    %v2539 = vunpack.c.l.b16 %v585
    %v2540 = vunpack.c.h.b16 %v585
    %v2541 = vunpack.c.l.b16 %v586
    %v2542 = vunpack.c.h.b16 %v586
    %v2543 = vunpack.c.l.b16 %v587
    %v2544 = vunpack.c.h.b16 %v587
    %v2545 = vunpack.c.l.b16 %v588
    %v2546 = vunpack.c.h.b16 %v588
    %v2547 = vunpack.c.l.b16 %v589
    %v2548 = vunpack.c.h.b16 %v589
    %v2549 = vunpack.c.l.b16 %v590
    %v2550 = vunpack.c.h.b16 %v590
    %v2551 = vunpack.c.l.b16 %v591
    %v2552 = vunpack.c.h.b16 %v591
    %v2553 = vunpack.c.l.b16 %v592
    %v2554 = vunpack.c.h.b16 %v592
    %v2555 = vunpack.c.l.b16 %v593
    %v2556 = vunpack.c.h.b16 %v593
    %v2557 = vunpack.c.l.b16 %v594
    %v2558 = vunpack.c.h.b16 %v594
    %v2559 = vunpack.c.l.b16 %v595
    %v2560 = vunpack.c.h.b16 %v595
    %v2561 = vunpack.c.l.b16 %v596
    %v2562 = vunpack.c.h.b16 %v596
    %v2563 = vunpack.c.l.b16 %v597
    %v2564 = vunpack.c.h.b16 %v597
    %v2565 = vunpack.c.l.b16 %v598
    %v2566 = vunpack.c.h.b16 %v598
    %v2567 = vunpack.c.l.b16 %v599
    %v2568 = vunpack.c.h.b16 %v599
    %v2569 = vunpack.c.l.b16 %v600
    %v2570 = vunpack.c.h.b16 %v600
    %v2571 = vunpack.c.l.b16 %v601
    %v2572 = vunpack.c.h.b16 %v601
    %v2573 = vunpack.c.l.b16 %v602
    %v2574 = vunpack.c.h.b16 %v602
    %v2575 = vunpack.c.l.b16 %v603
    %v2576 = vunpack.c.h.b16 %v603
    %v2577 = vunpack.c.l.b16 %v604
    %v2578 = vunpack.c.h.b16 %v604
    %v2579 = vunpack.c.l.b16 %v605
    %v2580 = vunpack.c.h.b16 %v605
    %v2581 = vunpack.c.l.b16 %v606
    %v2582 = vunpack.c.h.b16 %v606
    %v2583 = vunpack.c.l.b16 %v607
    %v2584 = vunpack.c.h.b16 %v607
    %v2585 = vunpack.c.l.b16 %v608
    %v2586 = vunpack.c.h.b16 %v608
    %v2587 = vunpack.c.l.b16 %v609
    %v2588 = vunpack.c.h.b16 %v609
    %v2589 = vunpack.c.l.b16 %v610
    %v2590 = vunpack.c.h.b16 %v610
    %v2591 = vunpack.c.l.b16 %v611
    %v2592 = vunpack.c.h.b16 %v611
    %v2593 = vunpack.c.l.b16 %v612
    %v2594 = vunpack.c.h.b16 %v612
    %v2595 = vunpack.c.l.b16 %v613
    %v2596 = vunpack.c.h.b16 %v613
    %v2597 = vunpack.c.l.b16 %v614
    %v2598 = vunpack.c.h.b16 %v614
    %v2599 = vunpack.c.l.b16 %v615
    %v2600 = vunpack.c.h.b16 %v615
    %v2601 = vunpack.c.l.b16 %v616
    %v2602 = vunpack.c.h.b16 %v616
    %v2603 = vunpack.c.l.b16 %v617
    %v2604 = vunpack.c.h.b16 %v617
    %v2605 = vunpack.c.l.b16 %v618
    %v2606 = vunpack.c.h.b16 %v618
    %v2607 = vunpack.c.l.b16 %v619
    %v2608 = vunpack.c.h.b16 %v619
    %v2609 = vunpack.c.l.b16 %v620
    %v2610 = vunpack.c.h.b16 %v620
    %v2611 = vunpack.c.l.b16 %v621
    %v2612 = vunpack.c.h.b16 %v621
    %v2613 = vunpack.c.l.b16 %v622
    %v2614 = vunpack.c.h.b16 %v622
    %v2615 = vunpack.c.l.b16 %v623
    %v2616 = vunpack.c.h.b16 %v623
    %v2617 = vunpack.c.l.b16 %v624
    %v2618 = vunpack.c.h.b16 %v624
    %v2619 = vunpack.c.l.b16 %v625
    %v2620 = vunpack.c.h.b16 %v625
    %v2621 = vunpack.c.l.b16 %v626
    %v2622 = vunpack.c.h.b16 %v626
    %v2623 = vunpack.c.l.b16 %v627
    %v2624 = vunpack.c.h.b16 %v627
    %v2625 = vunpack.c.l.b16 %v628
    %v2626 = vunpack.c.h.b16 %v628
    %v2627 = vunpack.c.l.b16 %v629
    %v2628 = vunpack.c.h.b16 %v629
    %v2629 = vunpack.c.l.b16 %v630
    %v2630 = vunpack.c.h.b16 %v630
    %v2631 = vunpack.c.l.b16 %v631
    %v2632 = vunpack.c.h.b16 %v631
    %v2633 = vunpack.c.l.b16 %v632
    %v2634 = vunpack.c.h.b16 %v632
    %v2635 = vunpack.c.l.b16 %v633
    %v2636 = vunpack.c.h.b16 %v633
    %v2637 = vunpack.c.l.b16 %v634
    %v2638 = vunpack.c.h.b16 %v634
    %v2639 = vunpack.c.l.b16 %v635
    %v2640 = vunpack.c.h.b16 %v635
    %v2641 = vunpack.c.l.b16 %v636
    %v2642 = vunpack.c.h.b16 %v636
    %v2643 = vunpack.c.l.b16 %v637
    %v2644 = vunpack.c.h.b16 %v637
    %v2645 = vunpack.c.l.b16 %v638
    %v2646 = vunpack.c.h.b16 %v638
    %v2647 = vunpack.c.l.b16 %v639
    %v2648 = vunpack.c.h.b16 %v639
    %v2649 = vunpack.c.l.b16 %v640
    %v2650 = vunpack.c.h.b16 %v640
    %v2651 = vunpack.c.l.b16 %v641
    %v2652 = vunpack.c.h.b16 %v641
    %v2653 = vunpack.c.l.b16 %v642
    %v2654 = vunpack.c.h.b16 %v642
    %v2655 = vunpack.c.l.b16 %v643
    %v2656 = vunpack.c.h.b16 %v643
    %v2657 = vunpack.c.l.b16 %v644
    %v2658 = vunpack.c.h.b16 %v644
    %v2659 = vunpack.c.l.b16 %v645
    %v2660 = vunpack.c.h.b16 %v645
    %v2661 = vunpack.c.l.b16 %v646
    %v2662 = vunpack.c.h.b16 %v646
    %v2663 = vunpack.c.l.b16 %v647
    %v2664 = vunpack.c.h.b16 %v647
    %v2665 = vunpack.c.l.b16 %v648
    %v2666 = vunpack.c.h.b16 %v648
    %v2667 = vunpack.c.l.b16 %v649
    %v2668 = vunpack.c.h.b16 %v649
    %v2669 = vunpack.c.l.b16 %v650
    %v2670 = vunpack.c.h.b16 %v650
    %v2671 = vunpack.c.l.b16 %v651
    %v2672 = vunpack.c.h.b16 %v651
    %v2673 = vunpack.c.l.b16 %v652
    %v2674 = vunpack.c.h.b16 %v652
    %v2675 = vunpack.c.l.b16 %v653
    %v2676 = vunpack.c.h.b16 %v653
    %v2677 = vunpack.c.l.b16 %v654
    %v2678 = vunpack.c.h.b16 %v654
    %v2679 = vunpack.c.l.b16 %v655
    %v2680 = vunpack.c.h.b16 %v655
    %v2681 = vunpack.c.l.b16 %v656
    %v2682 = vunpack.c.h.b16 %v656
    %v2683 = vunpack.c.l.b16 %v657
    %v2684 = vunpack.c.h.b16 %v657
    %v2685 = vunpack.c.l.b16 %v658
    %v2686 = vunpack.c.h.b16 %v658
    %v2687 = vunpack.c.l.b16 %v659
    %v2688 = vunpack.c.h.b16 %v659
    %v2689 = vunpack.c.l.b16 %v660
    %v2690 = vunpack.c.h.b16 %v660
    %v2691 = vunpack.c.l.b16 %v661
    %v2692 = vunpack.c.h.b16 %v661
    %v2693 = vunpack.c.l.b16 %v662
    %v2694 = vunpack.c.h.b16 %v662
    %v2695 = vunpack.c.l.b16 %v663
    %v2696 = vunpack.c.h.b16 %v663
    %v2697 = vunpack.c.l.b16 %v664
    %v2698 = vunpack.c.h.b16 %v664
    %v2699 = vunpack.c.l.b16 %v665
    %v2700 = vunpack.c.h.b16 %v665
    %v2701 = vunpack.c.l.b16 %v666
    %v2702 = vunpack.c.h.b16 %v666
    %v2703 = vunpack.c.l.b16 %v667
    %v2704 = vunpack.c.h.b16 %v667
    %v2705 = vunpack.c.l.b16 %v668
    %v2706 = vunpack.c.h.b16 %v668
    %v2707 = vunpack.c.l.b16 %v669
    %v2708 = vunpack.c.h.b16 %v669
    %v2709 = vunpack.c.l.b16 %v670
    %v2710 = vunpack.c.h.b16 %v670
    %v2711 = vunpack.c.l.b16 %v671
    %v2712 = vunpack.c.h.b16 %v671
    %v2713 = vunpack.c.l.b16 %v672
    %v2714 = vunpack.c.h.b16 %v672
    %v2715 = vunpack.c.l.b16 %v673
    %v2716 = vunpack.c.h.b16 %v673
    %v2717 = vunpack.c.l.b16 %v674
    %v2718 = vunpack.c.h.b16 %v674
    %v2719 = vunpack.c.l.b16 %v675
    %v2720 = vunpack.c.h.b16 %v675
    %v2721 = vunpack.c.l.b16 %v676
    %v2722 = vunpack.c.h.b16 %v676
    %v2723 = vunpack.c.l.b16 %v677
    %v2724 = vunpack.c.h.b16 %v677
    %v2725 = vunpack.c.l.b16 %v678
    %v2726 = vunpack.c.h.b16 %v678
    %v2727 = vunpack.c.l.b16 %v679
    %v2728 = vunpack.c.h.b16 %v679
    %v2729 = vunpack.c.l.b16 %v680
    %v2730 = vunpack.c.h.b16 %v680
    %v2731 = vunpack.c.l.b16 %v681
    %v2732 = vunpack.c.h.b16 %v681
    %v2733 = vunpack.c.l.b16 %v682
    %v2734 = vunpack.c.h.b16 %v682
    %v2735 = vunpack.c.l.b16 %v683
    %v2736 = vunpack.c.h.b16 %v683
    %v2737 = vunpack.c.l.b16 %v684
    %v2738 = vunpack.c.h.b16 %v684
    %v2739 = vunpack.c.l.b16 %v685
    %v2740 = vunpack.c.h.b16 %v685
    %v2741 = vunpack.c.l.b16 %v686
    %v2742 = vunpack.c.h.b16 %v686
    %v2743 = vunpack.c.l.b16 %v687
    %v2744 = vunpack.c.h.b16 %v687
    %v2745 = vunpack.c.l.b16 %v688
    %v2746 = vunpack.c.h.b16 %v688
    %v2747 = vunpack.c.l.b16 %v689
    %v2748 = vunpack.c.h.b16 %v689
    %v2749 = vunpack.c.l.b16 %v690
    %v2750 = vunpack.c.h.b16 %v690
    %v2751 = vunpack.c.l.b16 %v691
    %v2752 = vunpack.c.h.b16 %v691
    %v2753 = vunpack.c.l.b16 %v692
    %v2754 = vunpack.c.h.b16 %v692
    %v2755 = vunpack.c.l.b16 %v693
    %v2756 = vunpack.c.h.b16 %v693
    %v2757 = vunpack.c.l.b16 %v694
    %v2758 = vunpack.c.h.b16 %v694
    %v2759 = vunpack.c.l.b16 %v695
    %v2760 = vunpack.c.h.b16 %v695
    %v2761 = vunpack.c.l.b16 %v696
    %v2762 = vunpack.c.h.b16 %v696
    %v2763 = vunpack.c.l.b16 %v697
    %v2764 = vunpack.c.h.b16 %v697
    %v2765 = vunpack.c.l.b16 %v698
    %v2766 = vunpack.c.h.b16 %v698
    %v2767 = vunpack.c.l.b16 %v699
    %v2768 = vunpack.c.h.b16 %v699
    %v2769 = vunpack.c.l.b16 %v700
    %v2770 = vunpack.c.h.b16 %v700
    %v2771 = vunpack.c.l.b16 %v701
    %v2772 = vunpack.c.h.b16 %v701
    %v2773 = vunpack.c.l.b16 %v702
    %v2774 = vunpack.c.h.b16 %v702
    %v2775 = vunpack.c.l.b16 %v703
    %v2776 = vunpack.c.h.b16 %v703
    %v2777 = vunpack.c.l.b16 %v704
    %v2778 = vunpack.c.h.b16 %v704
    %v2779 = vunpack.c.l.b16 %v705
    %v2780 = vunpack.c.h.b16 %v705
    %v2781 = vunpack.c.l.b16 %v706
    %v2782 = vunpack.c.h.b16 %v706
    %v2783 = vunpack.c.l.b16 %v707
    %v2784 = vunpack.c.h.b16 %v707
    %v2785 = vunpack.c.l.b16 %v708
    %v2786 = vunpack.c.h.b16 %v708
    %v2787 = vunpack.c.l.b16 %v709
    %v2788 = vunpack.c.h.b16 %v709
    %v2789 = vunpack.c.l.b16 %v710
    %v2790 = vunpack.c.h.b16 %v710
    %v2791 = vunpack.c.l.b16 %v711
    %v2792 = vunpack.c.h.b16 %v711
    %v2793 = vunpack.c.l.b16 %v712
    %v2794 = vunpack.c.h.b16 %v712
    %v2795 = vunpack.c.l.b16 %v713
    %v2796 = vunpack.c.h.b16 %v713
    %v2797 = vunpack.c.l.b16 %v714
    %v2798 = vunpack.c.h.b16 %v714
    %v2799 = vunpack.c.l.b16 %v715
    %v2800 = vunpack.c.h.b16 %v715
    %v2801 = vunpack.c.l.b16 %v716
    %v2802 = vunpack.c.h.b16 %v716
    %v2803 = vunpack.c.l.b16 %v717
    %v2804 = vunpack.c.h.b16 %v717
    %v2805 = vunpack.c.l.b16 %v718
    %v2806 = vunpack.c.h.b16 %v718
    %v2807 = vunpack.c.l.b16 %v719
    %v2808 = vunpack.c.h.b16 %v719
    %v2809 = vunpack.c.l.b16 %v720
    %v2810 = vunpack.c.h.b16 %v720
    %v2811 = vunpack.c.l.b16 %v721
    %v2812 = vunpack.c.h.b16 %v721
    %v2813 = vunpack.c.l.b16 %v722
    %v2814 = vunpack.c.h.b16 %v722
    %v2815 = vunpack.c.l.b16 %v723
    %v2816 = vunpack.c.h.b16 %v723
    %v2817 = vunpack.c.l.b16 %v724
    %v2818 = vunpack.c.h.b16 %v724
    %v2819 = vunpack.c.l.b16 %v725
    %v2820 = vunpack.c.h.b16 %v725
    %v2821 = vunpack.c.l.b16 %v726
    %v2822 = vunpack.c.h.b16 %v726
    %v2823 = vunpack.c.l.b16 %v727
    %v2824 = vunpack.c.h.b16 %v727
    %v2825 = vunpack.c.l.b16 %v728
    %v2826 = vunpack.c.h.b16 %v728
    %v2827 = vunpack.c.l.b16 %v729
    %v2828 = vunpack.c.h.b16 %v729
    %v2829 = vunpack.c.l.b16 %v730
    %v2830 = vunpack.c.h.b16 %v730
    %v2831 = vunpack.c.l.b16 %v731
    %v2832 = vunpack.c.h.b16 %v731
    %v2833 = vunpack.c.l.b16 %v732
    %v2834 = vunpack.c.h.b16 %v732
    %v2835 = vunpack.c.l.b16 %v733
    %v2836 = vunpack.c.h.b16 %v733
    %v2837 = vunpack.c.l.b16 %v734
    %v2838 = vunpack.c.h.b16 %v734
    %v2839 = vunpack.c.l.b16 %v735
    %v2840 = vunpack.c.h.b16 %v735
    %v2841 = vunpack.c.l.b16 %v736
    %v2842 = vunpack.c.h.b16 %v736
    %v2843 = vunpack.c.l.b16 %v737
    %v2844 = vunpack.c.h.b16 %v737
    %v2845 = vunpack.c.l.b16 %v738
    %v2846 = vunpack.c.h.b16 %v738
    %v2847 = vunpack.c.l.b16 %v739
    %v2848 = vunpack.c.h.b16 %v739
    %v2849 = vunpack.c.l.b16 %v740
    %v2850 = vunpack.c.h.b16 %v740
    %v2851 = vunpack.c.l.b16 %v741
    %v2852 = vunpack.c.h.b16 %v741
    %v2853 = vunpack.c.l.b16 %v742
    %v2854 = vunpack.c.h.b16 %v742
    %v2855 = vunpack.c.l.b16 %v743
    %v2856 = vunpack.c.h.b16 %v743
    %v2857 = vunpack.c.l.b16 %v744
    %v2858 = vunpack.c.h.b16 %v744
    %v2859 = vunpack.c.l.b16 %v745
    %v2860 = vunpack.c.h.b16 %v745
    %v2861 = vunpack.c.l.b16 %v746
    %v2862 = vunpack.c.h.b16 %v746
    %v2863 = vunpack.c.l.b16 %v747
    %v2864 = vunpack.c.h.b16 %v747
    %v2865 = vunpack.c.l.b16 %v748
    %v2866 = vunpack.c.h.b16 %v748
    %v2867 = vunpack.c.l.b16 %v749
    %v2868 = vunpack.c.h.b16 %v749
    %v2869 = vunpack.c.l.b16 %v750
    %v2870 = vunpack.c.h.b16 %v750
    %v2871 = vunpack.c.l.b16 %v751
    %v2872 = vunpack.c.h.b16 %v751
    %v2873 = vunpack.c.l.b16 %v752
    %v2874 = vunpack.c.h.b16 %v752
    %v2875 = vunpack.c.l.b16 %v753
    %v2876 = vunpack.c.h.b16 %v753
    %v2877 = vunpack.c.l.b16 %v754
    %v2878 = vunpack.c.h.b16 %v754
    %v2879 = vunpack.c.l.b16 %v755
    %v2880 = vunpack.c.h.b16 %v755
    %v2881 = vunpack.c.l.b16 %v756
    %v2882 = vunpack.c.h.b16 %v756
    %v2883 = vunpack.c.l.b16 %v757
    %v2884 = vunpack.c.h.b16 %v757
    %v2885 = vunpack.c.l.b16 %v758
    %v2886 = vunpack.c.h.b16 %v758
    %v2887 = vunpack.c.l.b16 %v759
    %v2888 = vunpack.c.h.b16 %v759
    %v2889 = vunpack.c.l.b16 %v760
    %v2890 = vunpack.c.h.b16 %v760
    %v2891 = vunpack.c.l.b16 %v761
    %v2892 = vunpack.c.h.b16 %v761
    %v2893 = vunpack.c.l.b16 %v762
    %v2894 = vunpack.c.h.b16 %v762
    %v2895 = vunpack.c.l.b16 %v763
    %v2896 = vunpack.c.h.b16 %v763
    %v2897 = vunpack.c.l.b16 %v764
    %v2898 = vunpack.c.h.b16 %v764
    %v2899 = vunpack.c.l.b16 %v765
    %v2900 = vunpack.c.h.b16 %v765
    %v2901 = vunpack.c.l.b16 %v766
    %v2902 = vunpack.c.h.b16 %v766
    %v2903 = vunpack.c.l.b16 %v767
    %v2904 = vunpack.c.h.b16 %v767
    %v2905 = vunpack.c.l.b16 %v768
    %v2906 = vunpack.c.h.b16 %v768
    %v2907 = vunpack.c.l.b16 %v769
    %v2908 = vunpack.c.h.b16 %v769
    %v2909 = vunpack.c.l.b16 %v770
    %v2910 = vunpack.c.h.b16 %v770
    %v2911 = vunpack.c.l.b16 %v771
    %v2912 = vunpack.c.h.b16 %v771
    %v2913 = vunpack.c.l.b16 %v772
    %v2914 = vunpack.c.h.b16 %v772
    %v2915 = vunpack.c.l.b16 %v773
    %v2916 = vunpack.c.h.b16 %v773
    %v2917 = vunpack.c.l.b16 %v774
    %v2918 = vunpack.c.h.b16 %v774
    %v2919 = vunpack.c.l.b16 %v775
    %v2920 = vunpack.c.h.b16 %v775
    %v2921 = vunpack.c.l.b16 %v776
    %v2922 = vunpack.c.h.b16 %v776
    %v2923 = vunpack.c.l.b16 %v777
    %v2924 = vunpack.c.h.b16 %v777
    %v2925 = vunpack.c.l.b16 %v778
    %v2926 = vunpack.c.h.b16 %v778
    %v2927 = vunpack.c.l.b16 %v779
    %v2928 = vunpack.c.h.b16 %v779
    %v2929 = vunpack.c.l.b16 %v780
    %v2930 = vunpack.c.h.b16 %v780
    %v2931 = vunpack.c.l.b16 %v781
    %v2932 = vunpack.c.h.b16 %v781
    %v2933 = vunpack.c.l.b16 %v782
    %v2934 = vunpack.c.h.b16 %v782
    %v2935 = vunpack.c.l.b16 %v783
    %v2936 = vunpack.c.h.b16 %v783
    %v2937 = vunpack.c.l.b16 %v784
    %v2938 = vunpack.c.h.b16 %v784
    %v2939 = vunpack.c.l.b16 %v785
    %v2940 = vunpack.c.h.b16 %v785
    %v2941 = vunpack.c.l.b16 %v786
    %v2942 = vunpack.c.h.b16 %v786
    %v2943 = vunpack.c.l.b16 %v787
    %v2944 = vunpack.c.h.b16 %v787
    %v2945 = vunpack.c.l.b16 %v788
    %v2946 = vunpack.c.h.b16 %v788
    %v2947 = vunpack.c.l.b16 %v789
    %v2948 = vunpack.c.h.b16 %v789
    %v2949 = vunpack.c.l.b16 %v790
    %v2950 = vunpack.c.h.b16 %v790
    %v2951 = vunpack.c.l.b16 %v791
    %v2952 = vunpack.c.h.b16 %v791
    %v2953 = vunpack.c.l.b16 %v792
    %v2954 = vunpack.c.h.b16 %v792
    %v2955 = vunpack.c.l.b16 %v793
    %v2956 = vunpack.c.h.b16 %v793
    %v2957 = vunpack.c.l.b16 %v794
    %v2958 = vunpack.c.h.b16 %v794
    %v2959 = vunpack.c.l.b16 %v795
    %v2960 = vunpack.c.h.b16 %v795
    %v2961 = vunpack.c.l.b16 %v796
    %v2962 = vunpack.c.h.b16 %v796
    %v2963 = vunpack.c.l.b16 %v797
    %v2964 = vunpack.c.h.b16 %v797
    %v2965 = vunpack.c.l.b16 %v798
    %v2966 = vunpack.c.h.b16 %v798
    %v2967 = vunpack.c.l.b16 %v799
    %v2968 = vunpack.c.h.b16 %v799
    %v2969 = vunpack.c.l.b16 %v800
    %v2970 = vunpack.c.h.b16 %v800
    %v2971 = vunpack.c.l.b16 %v801
    %v2972 = vunpack.c.h.b16 %v801
    %v2973 = vunpack.c.l.b16 %v802
    %v2974 = vunpack.c.h.b16 %v802
    %v2975 = vunpack.c.l.b16 %v803
    %v2976 = vunpack.c.h.b16 %v803
    %v2977 = vunpack.c.l.b16 %v804
    %v2978 = vunpack.c.h.b16 %v804
    %v2979 = vunpack.c.l.b16 %v805
    %v2980 = vunpack.c.h.b16 %v805
    %v2981 = vunpack.c.l.b16 %v806
    %v2982 = vunpack.c.h.b16 %v806
    %v2983 = vunpack.c.l.b16 %v807
    %v2984 = vunpack.c.h.b16 %v807
    %v2985 = vunpack.c.l.b16 %v808
    %v2986 = vunpack.c.h.b16 %v808
    %v2987 = vunpack.c.l.b16 %v809
    %v2988 = vunpack.c.h.b16 %v809
    %v2989 = vunpack.c.l.b16 %v810
    %v2990 = vunpack.c.h.b16 %v810
    %v2991 = vunpack.c.l.b16 %v811
    %v2992 = vunpack.c.h.b16 %v811
    %v2993 = vunpack.c.l.b16 %v812
    %v2994 = vunpack.c.h.b16 %v812
    %v2995 = vunpack.c.l.b16 %v813
    %v2996 = vunpack.c.h.b16 %v813
    %v2997 = vunpack.c.l.b16 %v814
    %v2998 = vunpack.c.h.b16 %v814
    %v2999 = vunpack.c.l.b16 %v815
    %v3000 = vunpack.c.h.b16 %v815
    %v3001 = vunpack.c.l.b16 %v816
    %v3002 = vunpack.c.h.b16 %v816
    %v3003 = vunpack.c.l.b16 %v817
    %v3004 = vunpack.c.h.b16 %v817
    %v3005 = vunpack.c.l.b16 %v818
    %v3006 = vunpack.c.h.b16 %v818
    %v3007 = vunpack.c.l.b16 %v819
    %v3008 = vunpack.c.h.b16 %v819
    %v3009 = vunpack.c.l.b16 %v820
    %v3010 = vunpack.c.h.b16 %v820
    %v3011 = vunpack.c.l.b16 %v821
    %v3012 = vunpack.c.h.b16 %v821
    %v3013 = vunpack.c.l.b16 %v822
    %v3014 = vunpack.c.h.b16 %v822
    %v3015 = vunpack.c.l.b16 %v823
    %v3016 = vunpack.c.h.b16 %v823
    %v3017 = vunpack.c.l.b16 %v824
    %v3018 = vunpack.c.h.b16 %v824
    %v3019 = vunpack.c.l.b16 %v825
    %v3020 = vunpack.c.h.b16 %v825
    %v3021 = vunpack.c.l.b16 %v826
    %v3022 = vunpack.c.h.b16 %v826
    %v3023 = vunpack.c.l.b16 %v827
    %v3024 = vunpack.c.h.b16 %v827
    %v3025 = vunpack.c.l.b16 %v828
    %v3026 = vunpack.c.h.b16 %v828
    %v3027 = vunpack.c.l.b16 %v829
    %v3028 = vunpack.c.h.b16 %v829
    %v3029 = vunpack.c.l.b16 %v830
    %v3030 = vunpack.c.h.b16 %v830
    %v3031 = vunpack.c.l.b16 %v831
    %v3032 = vunpack.c.h.b16 %v831
    %v3033 = vunpack.c.l.b16 %v832
    %v3034 = vunpack.c.h.b16 %v832
    %v3035 = vunpack.c.l.b16 %v833
    %v3036 = vunpack.c.h.b16 %v833
    %v3037 = vunpack.c.l.b16 %v834
    %v3038 = vunpack.c.h.b16 %v834
    %v3039 = vunpack.c.l.b16 %v835
    %v3040 = vunpack.c.h.b16 %v835
    %v3041 = vunpack.c.l.b16 %v836
    %v3042 = vunpack.c.h.b16 %v836
    %v3043 = vunpack.c.l.b16 %v837
    %v3044 = vunpack.c.h.b16 %v837
    %v3045 = vunpack.c.l.b16 %v838
    %v3046 = vunpack.c.h.b16 %v838
    %v3047 = vunpack.c.l.b16 %v839
    %v3048 = vunpack.c.h.b16 %v839
    %v3049 = vunpack.c.l.b16 %v840
    %v3050 = vunpack.c.h.b16 %v840
    %v3051 = vunpack.c.l.b16 %v841
    %v3052 = vunpack.c.h.b16 %v841
    %v3053 = vunpack.c.l.b16 %v842
    %v3054 = vunpack.c.h.b16 %v842
    %v3055 = vunpack.c.l.b16 %v843
    %v3056 = vunpack.c.h.b16 %v843
    %v3057 = vunpack.c.l.b16 %v844
    %v3058 = vunpack.c.h.b16 %v844
    %v3059 = vunpack.c.l.b16 %v845
    %v3060 = vunpack.c.h.b16 %v845
    %v3061 = vunpack.c.l.b16 %v846
    %v3062 = vunpack.c.h.b16 %v846
    %v3063 = vunpack.c.l.b16 %v847
    %v3064 = vunpack.c.h.b16 %v847
    %v3065 = vunpack.c.l.b16 %v848
    %v3066 = vunpack.c.h.b16 %v848
    %v3067 = vunpack.c.l.b16 %v849
    %v3068 = vunpack.c.h.b16 %v849
    %v3069 = vunpack.c.l.b16 %v850
    %v3070 = vunpack.c.h.b16 %v850
    %v3071 = vunpack.c.l.b16 %v851
    %v3072 = vunpack.c.h.b16 %v851
    %v3073 = vunpack.c.l.b16 %v852
    %v3074 = vunpack.c.h.b16 %v852
    %v3075 = vunpack.c.l.b16 %v853
    %v3076 = vunpack.c.h.b16 %v853
    %v3077 = vunpack.c.l.b16 %v854
    %v3078 = vunpack.c.h.b16 %v854
    %v3079 = vunpack.c.l.b16 %v855
    %v3080 = vunpack.c.h.b16 %v855
    %v3081 = vunpack.c.l.b16 %v856
    %v3082 = vunpack.c.h.b16 %v856
    %v3083 = vunpack.c.l.b16 %v857
    %v3084 = vunpack.c.h.b16 %v857
    %v3085 = vunpack.c.l.b16 %v858
    %v3086 = vunpack.c.h.b16 %v858
    %v3087 = vunpack.c.l.b16 %v859
    %v3088 = vunpack.c.h.b16 %v859
    %v3089 = vunpack.c.l.b16 %v860
    %v3090 = vunpack.c.h.b16 %v860
    %v3091 = vunpack.c.l.b16 %v861
    %v3092 = vunpack.c.h.b16 %v861
    %v3093 = vunpack.c.l.b16 %v862
    %v3094 = vunpack.c.h.b16 %v862
    %v3095 = vunpack.c.l.b16 %v863
    %v3096 = vunpack.c.h.b16 %v863
    %v3097 = vunpack.c.l.b16 %v864
    %v3098 = vunpack.c.h.b16 %v864
    %v3099 = vunpack.c.l.b16 %v865
    %v3100 = vunpack.c.h.b16 %v865
    %v3101 = vunpack.c.l.b16 %v866
    %v3102 = vunpack.c.h.b16 %v866
    %v3103 = vunpack.c.l.b16 %v867
    %v3104 = vunpack.c.h.b16 %v867
    %v3105 = vunpack.c.l.b16 %v868
    %v3106 = vunpack.c.h.b16 %v868
    %v3107 = vunpack.c.l.b16 %v869
    %v3108 = vunpack.c.h.b16 %v869
    %v3109 = vunpack.c.l.b16 %v870
    %v3110 = vunpack.c.h.b16 %v870
    %v3111 = vunpack.c.l.b16 %v871
    %v3112 = vunpack.c.h.b16 %v871
    %v3113 = vunpack.c.l.b16 %v872
    %v3114 = vunpack.c.h.b16 %v872
    %v3115 = vunpack.c.l.b16 %v873
    %v3116 = vunpack.c.h.b16 %v873
    %v3117 = vunpack.c.l.b16 %v874
    %v3118 = vunpack.c.h.b16 %v874
    %v3119 = vunpack.c.l.b16 %v875
    %v3120 = vunpack.c.h.b16 %v875
    %v3121 = vunpack.c.l.b16 %v876
    %v3122 = vunpack.c.h.b16 %v876
    %v3123 = vunpack.c.l.b16 %v877
    %v3124 = vunpack.c.h.b16 %v877
    %v3125 = vunpack.c.l.b16 %v878
    %v3126 = vunpack.c.h.b16 %v878
    %v3127 = vunpack.c.l.b16 %v879
    %v3128 = vunpack.c.h.b16 %v879
    %v3129 = vunpack.c.l.b16 %v880
    %v3130 = vunpack.c.h.b16 %v880
    %v3131 = vunpack.c.l.b16 %v881
    %v3132 = vunpack.c.h.b16 %v881
    %v3133 = vunpack.c.l.b16 %v882
    %v3134 = vunpack.c.h.b16 %v882
    %v3135 = vunpack.c.l.b16 %v883
    %v3136 = vunpack.c.h.b16 %v883
    %v3137 = vunpack.c.l.b16 %v884
    %v3138 = vunpack.c.h.b16 %v884
    %v3139 = vunpack.c.l.b16 %v885
    %v3140 = vunpack.c.h.b16 %v885
    %v3141 = vunpack.c.l.b16 %v886
    %v3142 = vunpack.c.h.b16 %v886
    %v3143 = vunpack.c.l.b16 %v887
    %v3144 = vunpack.c.h.b16 %v887
    %v3145 = vunpack.c.l.b16 %v888
    %v3146 = vunpack.c.h.b16 %v888
    %v3147 = vunpack.c.l.b16 %v889
    %v3148 = vunpack.c.h.b16 %v889
    %v3149 = vunpack.c.l.b16 %v890
    %v3150 = vunpack.c.h.b16 %v890
    %v3151 = vunpack.c.l.b16 %v891
    %v3152 = vunpack.c.h.b16 %v891
    %v3153 = vunpack.c.l.b16 %v892
    %v3154 = vunpack.c.h.b16 %v892
    %v3155 = vunpack.c.l.b16 %v893
    %v3156 = vunpack.c.h.b16 %v893
    %v3157 = vunpack.c.l.b16 %v894
    %v3158 = vunpack.c.h.b16 %v894
    %v3159 = vunpack.c.l.b16 %v895
    %v3160 = vunpack.c.h.b16 %v895
    %v3161 = vunpack.c.l.b16 %v896
    %v3162 = vunpack.c.h.b16 %v896
    %v3163 = vunpack.c.l.b16 %v897
    %v3164 = vunpack.c.h.b16 %v897
    %v3165 = vunpack.c.l.b16 %v898
    %v3166 = vunpack.c.h.b16 %v898
    %v3167 = vunpack.c.l.b16 %v899
    %v3168 = vunpack.c.h.b16 %v899
    %v3169 = vunpack.c.l.b16 %v900
    %v3170 = vunpack.c.h.b16 %v900
    %v3171 = vunpack.c.l.b16 %v901
    %v3172 = vunpack.c.h.b16 %v901
    %v3173 = vunpack.c.l.b16 %v902
    %v3174 = vunpack.c.h.b16 %v902
    %v3175 = vunpack.c.l.b16 %v903
    %v3176 = vunpack.c.h.b16 %v903
    %v3177 = vunpack.c.l.b16 %v904
    %v3178 = vunpack.c.h.b16 %v904
    %v3179 = vunpack.c.l.b16 %v905
    %v3180 = vunpack.c.h.b16 %v905
    %v3181 = vunpack.c.l.b16 %v906
    %v3182 = vunpack.c.h.b16 %v906
    %v3183 = vunpack.c.l.b16 %v907
    %v3184 = vunpack.c.h.b16 %v907
    %v3185 = vunpack.c.l.b16 %v908
    %v3186 = vunpack.c.h.b16 %v908
    %v3187 = vunpack.c.l.b16 %v909
    %v3188 = vunpack.c.h.b16 %v909
    %v3189 = vunpack.c.l.b16 %v910
    %v3190 = vunpack.c.h.b16 %v910
    %v3191 = vunpack.c.l.b16 %v911
    %v3192 = vunpack.c.h.b16 %v911
    %v3193 = vunpack.c.l.b16 %v912
    %v3194 = vunpack.c.h.b16 %v912
    %v3195 = vunpack.c.l.b16 %v913
    %v3196 = vunpack.c.h.b16 %v913
    %v3197 = vunpack.c.l.b16 %v914
    %v3198 = vunpack.c.h.b16 %v914
    %v3199 = vunpack.c.l.b16 %v915
    %v3200 = vunpack.c.h.b16 %v915
    %v3201 = vunpack.c.l.b16 %v916
    %v3202 = vunpack.c.h.b16 %v916
    %v3203 = vunpack.c.l.b16 %v917
    %v3204 = vunpack.c.h.b16 %v917
    %v3205 = vunpack.c.l.b16 %v918
    %v3206 = vunpack.c.h.b16 %v918
    %v3207 = vunpack.c.l.b16 %v919
    %v3208 = vunpack.c.h.b16 %v919
    %v3209 = vunpack.c.l.b16 %v920
    %v3210 = vunpack.c.h.b16 %v920
    %v3211 = vunpack.c.l.b16 %v921
    %v3212 = vunpack.c.h.b16 %v921
    %v3213 = vunpack.c.l.b16 %v922
    %v3214 = vunpack.c.h.b16 %v922
    %v3215 = vunpack.c.l.b16 %v923
    %v3216 = vunpack.c.h.b16 %v923
    %v3217 = vunpack.c.l.b16 %v924
    %v3218 = vunpack.c.h.b16 %v924
    %v3219 = vunpack.c.l.b16 %v925
    %v3220 = vunpack.c.h.b16 %v925
    %v3221 = vunpack.c.l.b16 %v926
    %v3222 = vunpack.c.h.b16 %v926
    %v3223 = vunpack.c.l.b16 %v927
    %v3224 = vunpack.c.h.b16 %v927
    %v3225 = vunpack.c.l.b16 %v928
    %v3226 = vunpack.c.h.b16 %v928
    %v3227 = vunpack.c.l.b16 %v929
    %v3228 = vunpack.c.h.b16 %v929
    %v3229 = vunpack.c.l.b16 %v930
    %v3230 = vunpack.c.h.b16 %v930
    %v3231 = vunpack.c.l.b16 %v931
    %v3232 = vunpack.c.h.b16 %v931
    %v3233 = vunpack.c.l.b16 %v932
    %v3234 = vunpack.c.h.b16 %v932
    %v3235 = vunpack.c.l.b16 %v933
    %v3236 = vunpack.c.h.b16 %v933
    %v3237 = vunpack.c.l.b16 %v934
    %v3238 = vunpack.c.h.b16 %v934
    %v3239 = vunpack.c.l.b16 %v935
    %v3240 = vunpack.c.h.b16 %v935
    %v3241 = vunpack.c.l.b16 %v936
    %v3242 = vunpack.c.h.b16 %v936
    %v3243 = vunpack.c.l.b16 %v937
    %v3244 = vunpack.c.h.b16 %v937
    %v3245 = vunpack.c.l.b16 %v938
    %v3246 = vunpack.c.h.b16 %v938
    %v3247 = vunpack.c.l.b16 %v939
    %v3248 = vunpack.c.h.b16 %v939
    %v3249 = vunpack.c.l.b16 %v940
    %v3250 = vunpack.c.h.b16 %v940
    %v3251 = vunpack.c.l.b16 %v941
    %v3252 = vunpack.c.h.b16 %v941
    %v3253 = vunpack.c.l.b16 %v942
    %v3254 = vunpack.c.h.b16 %v942
    %v3255 = vunpack.c.l.b16 %v943
    %v3256 = vunpack.c.h.b16 %v943
    %v3257 = vunpack.c.l.b16 %v944
    %v3258 = vunpack.c.h.b16 %v944
    %v3259 = vunpack.c.l.b16 %v945
    %v3260 = vunpack.c.h.b16 %v945
    %v3261 = vunpack.c.l.b16 %v946
    %v3262 = vunpack.c.h.b16 %v946
    %v3263 = vunpack.c.l.b16 %v947
    %v3264 = vunpack.c.h.b16 %v947
    %v3265 = vunpack.c.l.b16 %v948
    %v3266 = vunpack.c.h.b16 %v948
    %v3267 = vunpack.c.l.b16 %v949
    %v3268 = vunpack.c.h.b16 %v949
    %v3269 = vunpack.c.l.b16 %v950
    %v3270 = vunpack.c.h.b16 %v950
    %v3271 = vunpack.c.l.b16 %v951
    %v3272 = vunpack.c.h.b16 %v951
    %v3273 = vunpack.c.l.b16 %v952
    %v3274 = vunpack.c.h.b16 %v952
    %v3275 = vunpack.c.l.b16 %v953
    %v3276 = vunpack.c.h.b16 %v953
    %v3277 = vunpack.c.l.b16 %v954
    %v3278 = vunpack.c.h.b16 %v954
    %v3279 = vunpack.c.l.b16 %v955
    %v3280 = vunpack.c.h.b16 %v955
    %v3281 = vunpack.c.l.b16 %v956
    %v3282 = vunpack.c.h.b16 %v956
    %v3283 = vpack.c.b16 %v1751, %v1747
    %v3284 = vpack.c.b16 %v1752, %v1748
    %v3285 = vpack.c.b16 %v1753, %v1749
    %v3286 = vpack.c.b16 %v1754, %v1750
    %v3287 = vpack.c.b16 %v1759, %v1755
    %v3288 = vpack.c.b16 %v1760, %v1756
    %v3289 = vpack.c.b16 %v1761, %v1757
    %v3290 = vpack.c.b16 %v1762, %v1758
    %v3291 = vpack.c.b16 %v1767, %v1763
    %v3292 = vpack.c.b16 %v1768, %v1764
    %v3293 = vpack.c.b16 %v1769, %v1765
    %v3294 = vpack.c.b16 %v1770, %v1766
    %v3295 = vpack.c.b16 %v1775, %v1771
    %v3296 = vpack.c.b16 %v1776, %v1772
    %v3297 = vpack.c.b16 %v1777, %v1773
    %v3298 = vpack.c.b16 %v1778, %v1774
    %v3299 = vpack.c.b16 %v1783, %v1779
    %v3300 = vpack.c.b16 %v1784, %v1780
    %v3301 = vpack.c.b16 %v1785, %v1781
    %v3302 = vpack.c.b16 %v1786, %v1782
    %v3303 = vpack.c.b16 %v1791, %v1787
    %v3304 = vpack.c.b16 %v1792, %v1788
    %v3305 = vpack.c.b16 %v1793, %v1789
    %v3306 = vpack.c.b16 %v1794, %v1790
    %v3307 = vpack.c.b16 %v1799, %v1795
    %v3308 = vpack.c.b16 %v1800, %v1796
    %v3309 = vpack.c.b16 %v1801, %v1797
    %v3310 = vpack.c.b16 %v1802, %v1798
    %v3311 = vpack.c.b16 %v1807, %v1803
    %v3312 = vpack.c.b16 %v1808, %v1804
    %v3313 = vpack.c.b16 %v1809, %v1805
    %v3314 = vpack.c.b16 %v1810, %v1806
    %v3315 = vpack.c.b16 %v1815, %v1811
    %v3316 = vpack.c.b16 %v1816, %v1812
    %v3317 = vpack.c.b16 %v1817, %v1813
    %v3318 = vpack.c.b16 %v1818, %v1814
    %v3319 = vpack.c.b16 %v1823, %v1819
    %v3320 = vpack.c.b16 %v1824, %v1820
    %v3321 = vpack.c.b16 %v1825, %v1821
    %v3322 = vpack.c.b16 %v1826, %v1822
    %v3323 = vpack.c.b16 %v1831, %v1827
    %v3324 = vpack.c.b16 %v1832, %v1828
    %v3325 = vpack.c.b16 %v1833, %v1829
    %v3326 = vpack.c.b16 %v1834, %v1830
    %v3327 = vpack.c.b16 %v1839, %v1835
    %v3328 = vpack.c.b16 %v1840, %v1836
    %v3329 = vpack.c.b16 %v1841, %v1837
    %v3330 = vpack.c.b16 %v1842, %v1838
    %v3331 = vpack.c.b16 %v1847, %v1843
    %v3332 = vpack.c.b16 %v1848, %v1844
    %v3333 = vpack.c.b16 %v1849, %v1845
    %v3334 = vpack.c.b16 %v1850, %v1846
    %v3335 = vpack.c.b16 %v1855, %v1851
    %v3336 = vpack.c.b16 %v1856, %v1852
    %v3337 = vpack.c.b16 %v1857, %v1853
    %v3338 = vpack.c.b16 %v1858, %v1854
    %v3339 = vpack.c.b16 %v1863, %v1859
    %v3340 = vpack.c.b16 %v1864, %v1860
    %v3341 = vpack.c.b16 %v1865, %v1861
    %v3342 = vpack.c.b16 %v1866, %v1862
    %v3343 = vpack.c.b16 %v1871, %v1867
    %v3344 = vpack.c.b16 %v1872, %v1868
    %v3345 = vpack.c.b16 %v1873, %v1869
    %v3346 = vpack.c.b16 %v1874, %v1870
    %v3347 = vpack.c.b16 %v1879, %v1875
    %v3348 = vpack.c.b16 %v1880, %v1876
    %v3349 = vpack.c.b16 %v1881, %v1877
    %v3350 = vpack.c.b16 %v1882, %v1878
    %v3351 = vpack.c.b16 %v1887, %v1883
    %v3352 = vpack.c.b16 %v1888, %v1884
    %v3353 = vpack.c.b16 %v1889, %v1885
    %v3354 = vpack.c.b16 %v1890, %v1886
    %v3355 = vpack.c.b16 %v1895, %v1891
    %v3356 = vpack.c.b16 %v1896, %v1892
    %v3357 = vpack.c.b16 %v1897, %v1893
    %v3358 = vpack.c.b16 %v1898, %v1894
    %v3359 = vpack.c.b16 %v1903, %v1899
    %v3360 = vpack.c.b16 %v1904, %v1900
    %v3361 = vpack.c.b16 %v1905, %v1901
    %v3362 = vpack.c.b16 %v1906, %v1902
    %v3363 = vpack.c.b16 %v1911, %v1907
    %v3364 = vpack.c.b16 %v1912, %v1908
    %v3365 = vpack.c.b16 %v1913, %v1909
    %v3366 = vpack.c.b16 %v1914, %v1910
    %v3367 = vpack.c.b16 %v1919, %v1915
    %v3368 = vpack.c.b16 %v1920, %v1916
    %v3369 = vpack.c.b16 %v1921, %v1917
    %v3370 = vpack.c.b16 %v1922, %v1918
    %v3371 = vpack.c.b16 %v1927, %v1923
    %v3372 = vpack.c.b16 %v1928, %v1924
    %v3373 = vpack.c.b16 %v1929, %v1925
    %v3374 = vpack.c.b16 %v1930, %v1926
    %v3375 = vpack.c.b16 %v1935, %v1931
    %v3376 = vpack.c.b16 %v1936, %v1932
    %v3377 = vpack.c.b16 %v1937, %v1933
    %v3378 = vpack.c.b16 %v1938, %v1934
    %v3379 = vpack.c.b16 %v1943, %v1939
    %v3380 = vpack.c.b16 %v1944, %v1940
    %v3381 = vpack.c.b16 %v1945, %v1941
    %v3382 = vpack.c.b16 %v1946, %v1942
    %v3383 = vpack.c.b16 %v1951, %v1947
    %v3384 = vpack.c.b16 %v1952, %v1948
    %v3385 = vpack.c.b16 %v1953, %v1949
    %v3386 = vpack.c.b16 %v1954, %v1950
    %v3387 = vpack.c.b16 %v1959, %v1955
    %v3388 = vpack.c.b16 %v1960, %v1956
    %v3389 = vpack.c.b16 %v1961, %v1957
    %v3390 = vpack.c.b16 %v1962, %v1958
    %v3391 = vpack.c.b16 %v1967, %v1963
    %v3392 = vpack.c.b16 %v1968, %v1964
    %v3393 = vpack.c.b16 %v1969, %v1965
    %v3394 = vpack.c.b16 %v1970, %v1966
    %v3395 = vpack.c.b16 %v1975, %v1971
    %v3396 = vpack.c.b16 %v1976, %v1972
    %v3397 = vpack.c.b16 %v1977, %v1973
    %v3398 = vpack.c.b16 %v1978, %v1974
    %v3399 = vpack.c.b16 %v1983, %v1979
    %v3400 = vpack.c.b16 %v1984, %v1980
    %v3401 = vpack.c.b16 %v1985, %v1981
    %v3402 = vpack.c.b16 %v1986, %v1982
    %v3403 = vpack.c.b16 %v1991, %v1987
    %v3404 = vpack.c.b16 %v1992, %v1988
    %v3405 = vpack.c.b16 %v1993, %v1989
    %v3406 = vpack.c.b16 %v1994, %v1990
    %v3407 = vpack.c.b16 %v1999, %v1995
    %v3408 = vpack.c.b16 %v2000, %v1996
    %v3409 = vpack.c.b16 %v2001, %v1997
    %v3410 = vpack.c.b16 %v2002, %v1998
    %v3411 = vpack.c.b16 %v2007, %v2003
    %v3412 = vpack.c.b16 %v2008, %v2004
    %v3413 = vpack.c.b16 %v2009, %v2005
    %v3414 = vpack.c.b16 %v2010, %v2006
    %v3415 = vpack.c.b16 %v2015, %v2011
    %v3416 = vpack.c.b16 %v2016, %v2012
    %v3417 = vpack.c.b16 %v2017, %v2013
    %v3418 = vpack.c.b16 %v2018, %v2014
    %v3419 = vpack.c.b16 %v2023, %v2019
    %v3420 = vpack.c.b16 %v2024, %v2020
    %v3421 = vpack.c.b16 %v2025, %v2021
    %v3422 = vpack.c.b16 %v2026, %v2022
    %v3423 = vpack.c.b16 %v2031, %v2027
    %v3424 = vpack.c.b16 %v2032, %v2028
    %v3425 = vpack.c.b16 %v2033, %v2029
    %v3426 = vpack.c.b16 %v2034, %v2030
    %v3427 = vpack.c.b16 %v2039, %v2035
    %v3428 = vpack.c.b16 %v2040, %v2036
    %v3429 = vpack.c.b16 %v2041, %v2037
    %v3430 = vpack.c.b16 %v2042, %v2038
    %v3431 = vpack.c.b16 %v2047, %v2043
    %v3432 = vpack.c.b16 %v2048, %v2044
    %v3433 = vpack.c.b16 %v2049, %v2045
    %v3434 = vpack.c.b16 %v2050, %v2046
    %v3435 = vpack.c.b16 %v2055, %v2051
    %v3436 = vpack.c.b16 %v2056, %v2052
    %v3437 = vpack.c.b16 %v2057, %v2053
    %v3438 = vpack.c.b16 %v2058, %v2054
    %v3439 = vpack.c.b16 %v2063, %v2059
    %v3440 = vpack.c.b16 %v2064, %v2060
    %v3441 = vpack.c.b16 %v2065, %v2061
    %v3442 = vpack.c.b16 %v2066, %v2062
    %v3443 = vpack.c.b16 %v2071, %v2067
    %v3444 = vpack.c.b16 %v2072, %v2068
    %v3445 = vpack.c.b16 %v2073, %v2069
    %v3446 = vpack.c.b16 %v2074, %v2070
    %v3447 = vpack.c.b16 %v2079, %v2075
    %v3448 = vpack.c.b16 %v2080, %v2076
    %v3449 = vpack.c.b16 %v2081, %v2077
    %v3450 = vpack.c.b16 %v2082, %v2078
    %v3451 = vpack.c.b16 %v2087, %v2083
    %v3452 = vpack.c.b16 %v2088, %v2084
    %v3453 = vpack.c.b16 %v2089, %v2085
    %v3454 = vpack.c.b16 %v2090, %v2086
    %v3455 = vpack.c.b16 %v2095, %v2091
    %v3456 = vpack.c.b16 %v2096, %v2092
    %v3457 = vpack.c.b16 %v2097, %v2093
    %v3458 = vpack.c.b16 %v2098, %v2094
    %v3459 = vpack.c.b16 %v2103, %v2099
    %v3460 = vpack.c.b16 %v2104, %v2100
    %v3461 = vpack.c.b16 %v2105, %v2101
    %v3462 = vpack.c.b16 %v2106, %v2102
    %v3463 = vpack.c.b16 %v2111, %v2107
    %v3464 = vpack.c.b16 %v2112, %v2108
    %v3465 = vpack.c.b16 %v2113, %v2109
    %v3466 = vpack.c.b16 %v2114, %v2110
    %v3467 = vpack.c.b16 %v2119, %v2115
    %v3468 = vpack.c.b16 %v2120, %v2116
    %v3469 = vpack.c.b16 %v2121, %v2117
    %v3470 = vpack.c.b16 %v2122, %v2118
    %v3471 = vpack.c.b16 %v2127, %v2123
    %v3472 = vpack.c.b16 %v2128, %v2124
    %v3473 = vpack.c.b16 %v2129, %v2125
    %v3474 = vpack.c.b16 %v2130, %v2126
    %v3475 = vpack.c.b16 %v2135, %v2131
    %v3476 = vpack.c.b16 %v2136, %v2132
    %v3477 = vpack.c.b16 %v2137, %v2133
    %v3478 = vpack.c.b16 %v2138, %v2134
    %v3479 = vpack.c.b16 %v2143, %v2139
    %v3480 = vpack.c.b16 %v2144, %v2140
    %v3481 = vpack.c.b16 %v2145, %v2141
    %v3482 = vpack.c.b16 %v2146, %v2142
    %v3483 = vpack.c.b16 %v2151, %v2147
    %v3484 = vpack.c.b16 %v2152, %v2148
    %v3485 = vpack.c.b16 %v2153, %v2149
    %v3486 = vpack.c.b16 %v2154, %v2150
    %v3487 = vpack.c.b16 %v2159, %v2155
    %v3488 = vpack.c.b16 %v2160, %v2156
    %v3489 = vpack.c.b16 %v2161, %v2157
    %v3490 = vpack.c.b16 %v2162, %v2158
    %v3491 = vpack.c.b16 %v2167, %v2163
    %v3492 = vpack.c.b16 %v2168, %v2164
    %v3493 = vpack.c.b16 %v2169, %v2165
    %v3494 = vpack.c.b16 %v2170, %v2166
    %v3495 = vpack.c.b16 %v2175, %v2171
    %v3496 = vpack.c.b16 %v2176, %v2172
    %v3497 = vpack.c.b16 %v2177, %v2173
    %v3498 = vpack.c.b16 %v2178, %v2174
    %v3499 = vpack.c.b16 %v2183, %v2179
    %v3500 = vpack.c.b16 %v2184, %v2180
    %v3501 = vpack.c.b16 %v2185, %v2181
    %v3502 = vpack.c.b16 %v2186, %v2182
    %v3503 = vpack.c.b16 %v2191, %v2187
    %v3504 = vpack.c.b16 %v2192, %v2188
    %v3505 = vpack.c.b16 %v2193, %v2189
    %v3506 = vpack.c.b16 %v2194, %v2190
    %v3507 = vpack.c.b16 %v2199, %v2195
    %v3508 = vpack.c.b16 %v2200, %v2196
    %v3509 = vpack.c.b16 %v2201, %v2197
    %v3510 = vpack.c.b16 %v2202, %v2198
    %v3511 = vpack.c.b16 %v2207, %v2203
    %v3512 = vpack.c.b16 %v2208, %v2204
    %v3513 = vpack.c.b16 %v2209, %v2205
    %v3514 = vpack.c.b16 %v2210, %v2206
    %v3515 = vpack.c.b16 %v2215, %v2211
    %v3516 = vpack.c.b16 %v2216, %v2212
    %v3517 = vpack.c.b16 %v2217, %v2213
    %v3518 = vpack.c.b16 %v2218, %v2214
    %v3519 = vpack.c.b16 %v2223, %v2219
    %v3520 = vpack.c.b16 %v2224, %v2220
    %v3521 = vpack.c.b16 %v2225, %v2221
    %v3522 = vpack.c.b16 %v2226, %v2222
    %v3523 = vpack.c.b16 %v2231, %v2227
    %v3524 = vpack.c.b16 %v2232, %v2228
    %v3525 = vpack.c.b16 %v2233, %v2229
    %v3526 = vpack.c.b16 %v2234, %v2230
    %v3527 = vpack.c.b16 %v2239, %v2235
    %v3528 = vpack.c.b16 %v2240, %v2236
    %v3529 = vpack.c.b16 %v2241, %v2237
    %v3530 = vpack.c.b16 %v2242, %v2238
    %v3531 = vpack.c.b16 %v2247, %v2243
    %v3532 = vpack.c.b16 %v2248, %v2244
    %v3533 = vpack.c.b16 %v2249, %v2245
    %v3534 = vpack.c.b16 %v2250, %v2246
    %v3535 = vpack.c.b16 %v2255, %v2251
    %v3536 = vpack.c.b16 %v2256, %v2252
    %v3537 = vpack.c.b16 %v2257, %v2253
    %v3538 = vpack.c.b16 %v2258, %v2254
    %v3539 = vpack.c.b16 %v2263, %v2259
    %v3540 = vpack.c.b16 %v2264, %v2260
    %v3541 = vpack.c.b16 %v2265, %v2261
    %v3542 = vpack.c.b16 %v2266, %v2262
    %v3543 = vpack.c.b16 %v2271, %v2267
    %v3544 = vpack.c.b16 %v2272, %v2268
    %v3545 = vpack.c.b16 %v2273, %v2269
    %v3546 = vpack.c.b16 %v2274, %v2270
    %v3547 = vpack.c.b16 %v2279, %v2275
    %v3548 = vpack.c.b16 %v2280, %v2276
    %v3549 = vpack.c.b16 %v2281, %v2277
    %v3550 = vpack.c.b16 %v2282, %v2278
    %v3551 = vpack.c.b16 %v2287, %v2283
    %v3552 = vpack.c.b16 %v2288, %v2284
    %v3553 = vpack.c.b16 %v2289, %v2285
    %v3554 = vpack.c.b16 %v2290, %v2286
    %v3555 = vpack.c.b16 %v2295, %v2291
    %v3556 = vpack.c.b16 %v2296, %v2292
    %v3557 = vpack.c.b16 %v2297, %v2293
    %v3558 = vpack.c.b16 %v2298, %v2294
    %v3559 = vpack.c.b16 %v2303, %v2299
    %v3560 = vpack.c.b16 %v2304, %v2300
    %v3561 = vpack.c.b16 %v2305, %v2301
    %v3562 = vpack.c.b16 %v2306, %v2302
    %v3563 = vpack.c.b16 %v2311, %v2307
    %v3564 = vpack.c.b16 %v2312, %v2308
    %v3565 = vpack.c.b16 %v2313, %v2309
    %v3566 = vpack.c.b16 %v2314, %v2310
    %v3567 = vpack.c.b16 %v2319, %v2315
    %v3568 = vpack.c.b16 %v2320, %v2316
    %v3569 = vpack.c.b16 %v2321, %v2317
    %v3570 = vpack.c.b16 %v2322, %v2318
    %v3571 = vpack.c.b16 %v2327, %v2323
    %v3572 = vpack.c.b16 %v2328, %v2324
    %v3573 = vpack.c.b16 %v2329, %v2325
    %v3574 = vpack.c.b16 %v2330, %v2326
    %v3575 = vpack.c.b16 %v2335, %v2331
    %v3576 = vpack.c.b16 %v2336, %v2332
    %v3577 = vpack.c.b16 %v2337, %v2333
    %v3578 = vpack.c.b16 %v2338, %v2334
    %v3579 = vpack.c.b16 %v2343, %v2339
    %v3580 = vpack.c.b16 %v2344, %v2340
    %v3581 = vpack.c.b16 %v2345, %v2341
    %v3582 = vpack.c.b16 %v2346, %v2342
    %v3583 = vpack.c.b16 %v2351, %v2347
    %v3584 = vpack.c.b16 %v2352, %v2348
    %v3585 = vpack.c.b16 %v2353, %v2349
    %v3586 = vpack.c.b16 %v2354, %v2350
    %v3587 = vpack.c.b16 %v2359, %v2355
    %v3588 = vpack.c.b16 %v2360, %v2356
    %v3589 = vpack.c.b16 %v2361, %v2357
    %v3590 = vpack.c.b16 %v2362, %v2358
    %v3591 = vpack.c.b16 %v2367, %v2363
    %v3592 = vpack.c.b16 %v2368, %v2364
    %v3593 = vpack.c.b16 %v2369, %v2365
    %v3594 = vpack.c.b16 %v2370, %v2366
    %v3595 = vpack.c.b16 %v2375, %v2371
    %v3596 = vpack.c.b16 %v2376, %v2372
    %v3597 = vpack.c.b16 %v2377, %v2373
    %v3598 = vpack.c.b16 %v2378, %v2374
    %v3599 = vpack.c.b16 %v2383, %v2379
    %v3600 = vpack.c.b16 %v2384, %v2380
    %v3601 = vpack.c.b16 %v2385, %v2381
    %v3602 = vpack.c.b16 %v2386, %v2382
    %v3603 = vpack.c.b16 %v2391, %v2387
    %v3604 = vpack.c.b16 %v2392, %v2388
    %v3605 = vpack.c.b16 %v2393, %v2389
    %v3606 = vpack.c.b16 %v2394, %v2390
    %v3607 = vpack.c.b16 %v2399, %v2395
    %v3608 = vpack.c.b16 %v2400, %v2396
    %v3609 = vpack.c.b16 %v2401, %v2397
    %v3610 = vpack.c.b16 %v2402, %v2398
    %v3611 = vpack.c.b16 %v2407, %v2403
    %v3612 = vpack.c.b16 %v2408, %v2404
    %v3613 = vpack.c.b16 %v2409, %v2405
    %v3614 = vpack.c.b16 %v2410, %v2406
    %v3615 = vpack.c.b16 %v2415, %v2411
    %v3616 = vpack.c.b16 %v2416, %v2412
    %v3617 = vpack.c.b16 %v2417, %v2413
    %v3618 = vpack.c.b16 %v2418, %v2414
    %v3619 = vpack.c.b16 %v2423, %v2419
    %v3620 = vpack.c.b16 %v2424, %v2420
    %v3621 = vpack.c.b16 %v2425, %v2421
    %v3622 = vpack.c.b16 %v2426, %v2422
    %v3623 = vpack.c.b16 %v2431, %v2427
    %v3624 = vpack.c.b16 %v2432, %v2428
    %v3625 = vpack.c.b16 %v2433, %v2429
    %v3626 = vpack.c.b16 %v2434, %v2430
    %v3627 = vpack.c.b16 %v2439, %v2435
    %v3628 = vpack.c.b16 %v2440, %v2436
    %v3629 = vpack.c.b16 %v2441, %v2437
    %v3630 = vpack.c.b16 %v2442, %v2438
    %v3631 = vpack.c.b16 %v2447, %v2443
    %v3632 = vpack.c.b16 %v2448, %v2444
    %v3633 = vpack.c.b16 %v2449, %v2445
    %v3634 = vpack.c.b16 %v2450, %v2446
    %v3635 = vpack.c.b16 %v2455, %v2451
    %v3636 = vpack.c.b16 %v2456, %v2452
    %v3637 = vpack.c.b16 %v2457, %v2453
    %v3638 = vpack.c.b16 %v2458, %v2454
    %v3639 = vpack.c.b16 %v2463, %v2459
    %v3640 = vpack.c.b16 %v2464, %v2460
    %v3641 = vpack.c.b16 %v2465, %v2461
    %v3642 = vpack.c.b16 %v2466, %v2462
    %v3643 = vpack.c.b16 %v2471, %v2467
    %v3644 = vpack.c.b16 %v2472, %v2468
    %v3645 = vpack.c.b16 %v2473, %v2469
    %v3646 = vpack.c.b16 %v2474, %v2470
    %v3647 = vpack.c.b16 %v2479, %v2475
    %v3648 = vpack.c.b16 %v2480, %v2476
    %v3649 = vpack.c.b16 %v2481, %v2477
    %v3650 = vpack.c.b16 %v2482, %v2478
    %v3651 = vpack.c.b16 %v2487, %v2483
    %v3652 = vpack.c.b16 %v2488, %v2484
    %v3653 = vpack.c.b16 %v2489, %v2485
    %v3654 = vpack.c.b16 %v2490, %v2486
    %v3655 = vpack.c.b16 %v2495, %v2491
    %v3656 = vpack.c.b16 %v2496, %v2492
    %v3657 = vpack.c.b16 %v2497, %v2493
    %v3658 = vpack.c.b16 %v2498, %v2494
    %v3659 = vpack.c.b16 %v2503, %v2499
    %v3660 = vpack.c.b16 %v2504, %v2500
    %v3661 = vpack.c.b16 %v2505, %v2501
    %v3662 = vpack.c.b16 %v2506, %v2502
    %v3663 = vpack.c.b16 %v2511, %v2507
    %v3664 = vpack.c.b16 %v2512, %v2508
    %v3665 = vpack.c.b16 %v2513, %v2509
    %v3666 = vpack.c.b16 %v2514, %v2510
    %v3667 = vpack.c.b16 %v2519, %v2515
    %v3668 = vpack.c.b16 %v2520, %v2516
    %v3669 = vpack.c.b16 %v2521, %v2517
    %v3670 = vpack.c.b16 %v2522, %v2518
    %v3671 = vpack.c.b16 %v2527, %v2523
    %v3672 = vpack.c.b16 %v2528, %v2524
    %v3673 = vpack.c.b16 %v2529, %v2525
    %v3674 = vpack.c.b16 %v2530, %v2526
    %v3675 = vpack.c.b16 %v2535, %v2531
    %v3676 = vpack.c.b16 %v2536, %v2532
    %v3677 = vpack.c.b16 %v2537, %v2533
    %v3678 = vpack.c.b16 %v2538, %v2534
    %v3679 = vpack.c.b16 %v2543, %v2539
    %v3680 = vpack.c.b16 %v2544, %v2540
    %v3681 = vpack.c.b16 %v2545, %v2541
    %v3682 = vpack.c.b16 %v2546, %v2542
    %v3683 = vpack.c.b16 %v2551, %v2547
    %v3684 = vpack.c.b16 %v2552, %v2548
    %v3685 = vpack.c.b16 %v2553, %v2549
    %v3686 = vpack.c.b16 %v2554, %v2550
    %v3687 = vpack.c.b16 %v2559, %v2555
    %v3688 = vpack.c.b16 %v2560, %v2556
    %v3689 = vpack.c.b16 %v2561, %v2557
    %v3690 = vpack.c.b16 %v2562, %v2558
    %v3691 = vpack.c.b16 %v2567, %v2563
    %v3692 = vpack.c.b16 %v2568, %v2564
    %v3693 = vpack.c.b16 %v2569, %v2565
    %v3694 = vpack.c.b16 %v2570, %v2566
    %v3695 = vpack.c.b16 %v2575, %v2571
    %v3696 = vpack.c.b16 %v2576, %v2572
    %v3697 = vpack.c.b16 %v2577, %v2573
    %v3698 = vpack.c.b16 %v2578, %v2574
    %v3699 = vpack.c.b16 %v2583, %v2579
    %v3700 = vpack.c.b16 %v2584, %v2580
    %v3701 = vpack.c.b16 %v2585, %v2581
    %v3702 = vpack.c.b16 %v2586, %v2582
    %v3703 = vpack.c.b16 %v2591, %v2587
    %v3704 = vpack.c.b16 %v2592, %v2588
    %v3705 = vpack.c.b16 %v2593, %v2589
    %v3706 = vpack.c.b16 %v2594, %v2590
    %v3707 = vpack.c.b16 %v2599, %v2595
    %v3708 = vpack.c.b16 %v2600, %v2596
    %v3709 = vpack.c.b16 %v2601, %v2597
    %v3710 = vpack.c.b16 %v2602, %v2598
    %v3711 = vpack.c.b16 %v2607, %v2603
    %v3712 = vpack.c.b16 %v2608, %v2604
    %v3713 = vpack.c.b16 %v2609, %v2605
    %v3714 = vpack.c.b16 %v2610, %v2606
    %v3715 = vpack.c.b16 %v2615, %v2611
    %v3716 = vpack.c.b16 %v2616, %v2612
    %v3717 = vpack.c.b16 %v2617, %v2613
    %v3718 = vpack.c.b16 %v2618, %v2614
    %v3719 = vpack.c.b16 %v2623, %v2619
    %v3720 = vpack.c.b16 %v2624, %v2620
    %v3721 = vpack.c.b16 %v2625, %v2621
    %v3722 = vpack.c.b16 %v2626, %v2622
    %v3723 = vpack.c.b16 %v2631, %v2627
    %v3724 = vpack.c.b16 %v2632, %v2628
    %v3725 = vpack.c.b16 %v2633, %v2629
    %v3726 = vpack.c.b16 %v2634, %v2630
    %v3727 = vpack.c.b16 %v2639, %v2635
    %v3728 = vpack.c.b16 %v2640, %v2636
    %v3729 = vpack.c.b16 %v2641, %v2637
    %v3730 = vpack.c.b16 %v2642, %v2638
    %v3731 = vpack.c.b16 %v2647, %v2643
    %v3732 = vpack.c.b16 %v2648, %v2644
    %v3733 = vpack.c.b16 %v2649, %v2645
    %v3734 = vpack.c.b16 %v2650, %v2646
    %v3735 = vpack.c.b16 %v2655, %v2651
    %v3736 = vpack.c.b16 %v2656, %v2652
    %v3737 = vpack.c.b16 %v2657, %v2653
    %v3738 = vpack.c.b16 %v2658, %v2654
    %v3739 = vpack.c.b16 %v2663, %v2659
    %v3740 = vpack.c.b16 %v2664, %v2660
    %v3741 = vpack.c.b16 %v2665, %v2661
    %v3742 = vpack.c.b16 %v2666, %v2662
    %v3743 = vpack.c.b16 %v2671, %v2667
    %v3744 = vpack.c.b16 %v2672, %v2668
    %v3745 = vpack.c.b16 %v2673, %v2669
    %v3746 = vpack.c.b16 %v2674, %v2670
    %v3747 = vpack.c.b16 %v2679, %v2675
    %v3748 = vpack.c.b16 %v2680, %v2676
    %v3749 = vpack.c.b16 %v2681, %v2677
    %v3750 = vpack.c.b16 %v2682, %v2678
    %v3751 = vpack.c.b16 %v2687, %v2683
    %v3752 = vpack.c.b16 %v2688, %v2684
    %v3753 = vpack.c.b16 %v2689, %v2685
    %v3754 = vpack.c.b16 %v2690, %v2686
    %v3755 = vpack.c.b16 %v2695, %v2691
    %v3756 = vpack.c.b16 %v2696, %v2692
    %v3757 = vpack.c.b16 %v2697, %v2693
    %v3758 = vpack.c.b16 %v2698, %v2694
    %v3759 = vpack.c.b16 %v2703, %v2699
    %v3760 = vpack.c.b16 %v2704, %v2700
    %v3761 = vpack.c.b16 %v2705, %v2701
    %v3762 = vpack.c.b16 %v2706, %v2702
    %v3763 = vpack.c.b16 %v2711, %v2707
    %v3764 = vpack.c.b16 %v2712, %v2708
    %v3765 = vpack.c.b16 %v2713, %v2709
    %v3766 = vpack.c.b16 %v2714, %v2710
    %v3767 = vpack.c.b16 %v2719, %v2715
    %v3768 = vpack.c.b16 %v2720, %v2716
    %v3769 = vpack.c.b16 %v2721, %v2717
    %v3770 = vpack.c.b16 %v2722, %v2718
    %v3771 = vpack.c.b16 %v2727, %v2723
    %v3772 = vpack.c.b16 %v2728, %v2724
    %v3773 = vpack.c.b16 %v2729, %v2725
    %v3774 = vpack.c.b16 %v2730, %v2726
    %v3775 = vpack.c.b16 %v2735, %v2731
    %v3776 = vpack.c.b16 %v2736, %v2732
    %v3777 = vpack.c.b16 %v2737, %v2733
    %v3778 = vpack.c.b16 %v2738, %v2734
    %v3779 = vpack.c.b16 %v2743, %v2739
    %v3780 = vpack.c.b16 %v2744, %v2740
    %v3781 = vpack.c.b16 %v2745, %v2741
    %v3782 = vpack.c.b16 %v2746, %v2742
    %v3783 = vpack.c.b16 %v2751, %v2747
    %v3784 = vpack.c.b16 %v2752, %v2748
    %v3785 = vpack.c.b16 %v2753, %v2749
    %v3786 = vpack.c.b16 %v2754, %v2750
    %v3787 = vpack.c.b16 %v2759, %v2755
    %v3788 = vpack.c.b16 %v2760, %v2756
    %v3789 = vpack.c.b16 %v2761, %v2757
    %v3790 = vpack.c.b16 %v2762, %v2758
    %v3791 = vpack.c.b16 %v2767, %v2763
    %v3792 = vpack.c.b16 %v2768, %v2764
    %v3793 = vpack.c.b16 %v2769, %v2765
    %v3794 = vpack.c.b16 %v2770, %v2766
    %v3795 = vpack.c.b16 %v2775, %v2771
    %v3796 = vpack.c.b16 %v2776, %v2772
    %v3797 = vpack.c.b16 %v2777, %v2773
    %v3798 = vpack.c.b16 %v2778, %v2774
    %v3799 = vpack.c.b16 %v2783, %v2779
    %v3800 = vpack.c.b16 %v2784, %v2780
    %v3801 = vpack.c.b16 %v2785, %v2781
    %v3802 = vpack.c.b16 %v2786, %v2782
    %v3803 = vpack.c.b16 %v2791, %v2787
    %v3804 = vpack.c.b16 %v2792, %v2788
    %v3805 = vpack.c.b16 %v2793, %v2789
    %v3806 = vpack.c.b16 %v2794, %v2790
    %v3807 = vpack.c.b16 %v2799, %v2795
    %v3808 = vpack.c.b16 %v2800, %v2796
    %v3809 = vpack.c.b16 %v2801, %v2797
    %v3810 = vpack.c.b16 %v2802, %v2798
    %v3811 = vpack.c.b16 %v2807, %v2803
    %v3812 = vpack.c.b16 %v2808, %v2804
    %v3813 = vpack.c.b16 %v2809, %v2805
    %v3814 = vpack.c.b16 %v2810, %v2806
    %v3815 = vpack.c.b16 %v2815, %v2811
    %v3816 = vpack.c.b16 %v2816, %v2812
    %v3817 = vpack.c.b16 %v2817, %v2813
    %v3818 = vpack.c.b16 %v2818, %v2814
    %v3819 = vpack.c.b16 %v2823, %v2819
    %v3820 = vpack.c.b16 %v2824, %v2820
    %v3821 = vpack.c.b16 %v2825, %v2821
    %v3822 = vpack.c.b16 %v2826, %v2822
    %v3823 = vpack.c.b16 %v2831, %v2827
    %v3824 = vpack.c.b16 %v2832, %v2828
    %v3825 = vpack.c.b16 %v2833, %v2829
    %v3826 = vpack.c.b16 %v2834, %v2830
    %v3827 = vpack.c.b16 %v2839, %v2835
    %v3828 = vpack.c.b16 %v2840, %v2836
    %v3829 = vpack.c.b16 %v2841, %v2837
    %v3830 = vpack.c.b16 %v2842, %v2838
    %v3831 = vpack.c.b16 %v2847, %v2843
    %v3832 = vpack.c.b16 %v2848, %v2844
    %v3833 = vpack.c.b16 %v2849, %v2845
    %v3834 = vpack.c.b16 %v2850, %v2846
    %v3835 = vpack.c.b16 %v2855, %v2851
    %v3836 = vpack.c.b16 %v2856, %v2852
    %v3837 = vpack.c.b16 %v2857, %v2853
    %v3838 = vpack.c.b16 %v2858, %v2854
    %v3839 = vpack.c.b16 %v2863, %v2859
    %v3840 = vpack.c.b16 %v2864, %v2860
    %v3841 = vpack.c.b16 %v2865, %v2861
    %v3842 = vpack.c.b16 %v2866, %v2862
    %v3843 = vpack.c.b16 %v2871, %v2867
    %v3844 = vpack.c.b16 %v2872, %v2868
    %v3845 = vpack.c.b16 %v2873, %v2869
    %v3846 = vpack.c.b16 %v2874, %v2870
    %v3847 = vpack.c.b16 %v2879, %v2875
    %v3848 = vpack.c.b16 %v2880, %v2876
    %v3849 = vpack.c.b16 %v2881, %v2877
    %v3850 = vpack.c.b16 %v2882, %v2878
    %v3851 = vpack.c.b16 %v2887, %v2883
    %v3852 = vpack.c.b16 %v2888, %v2884
    %v3853 = vpack.c.b16 %v2889, %v2885
    %v3854 = vpack.c.b16 %v2890, %v2886
    %v3855 = vpack.c.b16 %v2895, %v2891
    %v3856 = vpack.c.b16 %v2896, %v2892
    %v3857 = vpack.c.b16 %v2897, %v2893
    %v3858 = vpack.c.b16 %v2898, %v2894
    %v3859 = vpack.c.b16 %v2903, %v2899
    %v3860 = vpack.c.b16 %v2904, %v2900
    %v3861 = vpack.c.b16 %v2905, %v2901
    %v3862 = vpack.c.b16 %v2906, %v2902
    %v3863 = vpack.c.b16 %v2911, %v2907
    %v3864 = vpack.c.b16 %v2912, %v2908
    %v3865 = vpack.c.b16 %v2913, %v2909
    %v3866 = vpack.c.b16 %v2914, %v2910
    %v3867 = vpack.c.b16 %v2919, %v2915
    %v3868 = vpack.c.b16 %v2920, %v2916
    %v3869 = vpack.c.b16 %v2921, %v2917
    %v3870 = vpack.c.b16 %v2922, %v2918
    %v3871 = vpack.c.b16 %v2927, %v2923
    %v3872 = vpack.c.b16 %v2928, %v2924
    %v3873 = vpack.c.b16 %v2929, %v2925
    %v3874 = vpack.c.b16 %v2930, %v2926
    %v3875 = vpack.c.b16 %v2935, %v2931
    %v3876 = vpack.c.b16 %v2936, %v2932
    %v3877 = vpack.c.b16 %v2937, %v2933
    %v3878 = vpack.c.b16 %v2938, %v2934
    %v3879 = vpack.c.b16 %v2943, %v2939
    %v3880 = vpack.c.b16 %v2944, %v2940
    %v3881 = vpack.c.b16 %v2945, %v2941
    %v3882 = vpack.c.b16 %v2946, %v2942
    %v3883 = vpack.c.b16 %v2951, %v2947
    %v3884 = vpack.c.b16 %v2952, %v2948
    %v3885 = vpack.c.b16 %v2953, %v2949
    %v3886 = vpack.c.b16 %v2954, %v2950
    %v3887 = vpack.c.b16 %v2959, %v2955
    %v3888 = vpack.c.b16 %v2960, %v2956
    %v3889 = vpack.c.b16 %v2961, %v2957
    %v3890 = vpack.c.b16 %v2962, %v2958
    %v3891 = vpack.c.b16 %v2967, %v2963
    %v3892 = vpack.c.b16 %v2968, %v2964
    %v3893 = vpack.c.b16 %v2969, %v2965
    %v3894 = vpack.c.b16 %v2970, %v2966
    %v3895 = vpack.c.b16 %v2975, %v2971
    %v3896 = vpack.c.b16 %v2976, %v2972
    %v3897 = vpack.c.b16 %v2977, %v2973
    %v3898 = vpack.c.b16 %v2978, %v2974
    %v3899 = vpack.c.b16 %v2983, %v2979
    %v3900 = vpack.c.b16 %v2984, %v2980
    %v3901 = vpack.c.b16 %v2985, %v2981
    %v3902 = vpack.c.b16 %v2986, %v2982
    %v3903 = vpack.c.b16 %v2991, %v2987
    %v3904 = vpack.c.b16 %v2992, %v2988
    %v3905 = vpack.c.b16 %v2993, %v2989
    %v3906 = vpack.c.b16 %v2994, %v2990
    %v3907 = vpack.c.b16 %v2999, %v2995
    %v3908 = vpack.c.b16 %v3000, %v2996
    %v3909 = vpack.c.b16 %v3001, %v2997
    %v3910 = vpack.c.b16 %v3002, %v2998
    %v3911 = vpack.c.b16 %v3007, %v3003
    %v3912 = vpack.c.b16 %v3008, %v3004
    %v3913 = vpack.c.b16 %v3009, %v3005
    %v3914 = vpack.c.b16 %v3010, %v3006
    %v3915 = vpack.c.b16 %v3015, %v3011
    %v3916 = vpack.c.b16 %v3016, %v3012
    %v3917 = vpack.c.b16 %v3017, %v3013
    %v3918 = vpack.c.b16 %v3018, %v3014
    %v3919 = vpack.c.b16 %v3023, %v3019
    %v3920 = vpack.c.b16 %v3024, %v3020
    %v3921 = vpack.c.b16 %v3025, %v3021
    %v3922 = vpack.c.b16 %v3026, %v3022
    %v3923 = vpack.c.b16 %v3031, %v3027
    %v3924 = vpack.c.b16 %v3032, %v3028
    %v3925 = vpack.c.b16 %v3033, %v3029
    %v3926 = vpack.c.b16 %v3034, %v3030
    %v3927 = vpack.c.b16 %v3039, %v3035
    %v3928 = vpack.c.b16 %v3040, %v3036
    %v3929 = vpack.c.b16 %v3041, %v3037
    %v3930 = vpack.c.b16 %v3042, %v3038
    %v3931 = vpack.c.b16 %v3047, %v3043
    %v3932 = vpack.c.b16 %v3048, %v3044
    %v3933 = vpack.c.b16 %v3049, %v3045
    %v3934 = vpack.c.b16 %v3050, %v3046
    %v3935 = vpack.c.b16 %v3055, %v3051
    %v3936 = vpack.c.b16 %v3056, %v3052
    %v3937 = vpack.c.b16 %v3057, %v3053
    %v3938 = vpack.c.b16 %v3058, %v3054
    %v3939 = vpack.c.b16 %v3063, %v3059
    %v3940 = vpack.c.b16 %v3064, %v3060
    %v3941 = vpack.c.b16 %v3065, %v3061
    %v3942 = vpack.c.b16 %v3066, %v3062
    %v3943 = vpack.c.b16 %v3071, %v3067
    %v3944 = vpack.c.b16 %v3072, %v3068
    %v3945 = vpack.c.b16 %v3073, %v3069
    %v3946 = vpack.c.b16 %v3074, %v3070
    %v3947 = vpack.c.b16 %v3079, %v3075
    %v3948 = vpack.c.b16 %v3080, %v3076
    %v3949 = vpack.c.b16 %v3081, %v3077
    %v3950 = vpack.c.b16 %v3082, %v3078
    %v3951 = vpack.c.b16 %v3087, %v3083
    %v3952 = vpack.c.b16 %v3088, %v3084
    %v3953 = vpack.c.b16 %v3089, %v3085
    %v3954 = vpack.c.b16 %v3090, %v3086
    %v3955 = vpack.c.b16 %v3095, %v3091
    %v3956 = vpack.c.b16 %v3096, %v3092
    %v3957 = vpack.c.b16 %v3097, %v3093
    %v3958 = vpack.c.b16 %v3098, %v3094
    %v3959 = vpack.c.b16 %v3103, %v3099
    %v3960 = vpack.c.b16 %v3104, %v3100
    %v3961 = vpack.c.b16 %v3105, %v3101
    %v3962 = vpack.c.b16 %v3106, %v3102
    %v3963 = vpack.c.b16 %v3111, %v3107
    %v3964 = vpack.c.b16 %v3112, %v3108
    %v3965 = vpack.c.b16 %v3113, %v3109
    %v3966 = vpack.c.b16 %v3114, %v3110
    %v3967 = vpack.c.b16 %v3119, %v3115
    %v3968 = vpack.c.b16 %v3120, %v3116
    %v3969 = vpack.c.b16 %v3121, %v3117
    %v3970 = vpack.c.b16 %v3122, %v3118
    %v3971 = vpack.c.b16 %v3127, %v3123
    %v3972 = vpack.c.b16 %v3128, %v3124
    %v3973 = vpack.c.b16 %v3129, %v3125
    %v3974 = vpack.c.b16 %v3130, %v3126
    %v3975 = vpack.c.b16 %v3135, %v3131
    %v3976 = vpack.c.b16 %v3136, %v3132
    %v3977 = vpack.c.b16 %v3137, %v3133
    %v3978 = vpack.c.b16 %v3138, %v3134
    %v3979 = vpack.c.b16 %v3143, %v3139
    %v3980 = vpack.c.b16 %v3144, %v3140
    %v3981 = vpack.c.b16 %v3145, %v3141
    %v3982 = vpack.c.b16 %v3146, %v3142
    %v3983 = vpack.c.b16 %v3151, %v3147
    %v3984 = vpack.c.b16 %v3152, %v3148
    %v3985 = vpack.c.b16 %v3153, %v3149
    %v3986 = vpack.c.b16 %v3154, %v3150
    %v3987 = vpack.c.b16 %v3159, %v3155
    %v3988 = vpack.c.b16 %v3160, %v3156
    %v3989 = vpack.c.b16 %v3161, %v3157
    %v3990 = vpack.c.b16 %v3162, %v3158
    %v3991 = vpack.c.b16 %v3167, %v3163
    %v3992 = vpack.c.b16 %v3168, %v3164
    %v3993 = vpack.c.b16 %v3169, %v3165
    %v3994 = vpack.c.b16 %v3170, %v3166
    %v3995 = vpack.c.b16 %v3175, %v3171
    %v3996 = vpack.c.b16 %v3176, %v3172
    %v3997 = vpack.c.b16 %v3177, %v3173
    %v3998 = vpack.c.b16 %v3178, %v3174
    %v3999 = vpack.c.b16 %v3183, %v3179
    %v4000 = vpack.c.b16 %v3184, %v3180
    %v4001 = vpack.c.b16 %v3185, %v3181
    %v4002 = vpack.c.b16 %v3186, %v3182
    %v4003 = vpack.c.b16 %v3191, %v3187
    %v4004 = vpack.c.b16 %v3192, %v3188
    %v4005 = vpack.c.b16 %v3193, %v3189
    %v4006 = vpack.c.b16 %v3194, %v3190
    %v4007 = vpack.c.b16 %v3199, %v3195
    %v4008 = vpack.c.b16 %v3200, %v3196
    %v4009 = vpack.c.b16 %v3201, %v3197
    %v4010 = vpack.c.b16 %v3202, %v3198
    %v4011 = vpack.c.b16 %v3207, %v3203
    %v4012 = vpack.c.b16 %v3208, %v3204
    %v4013 = vpack.c.b16 %v3209, %v3205
    %v4014 = vpack.c.b16 %v3210, %v3206
    %v4015 = vpack.c.b16 %v3215, %v3211
    %v4016 = vpack.c.b16 %v3216, %v3212
    %v4017 = vpack.c.b16 %v3217, %v3213
    %v4018 = vpack.c.b16 %v3218, %v3214
    %v4019 = vpack.c.b16 %v3223, %v3219
    %v4020 = vpack.c.b16 %v3224, %v3220
    %v4021 = vpack.c.b16 %v3225, %v3221
    %v4022 = vpack.c.b16 %v3226, %v3222
    %v4023 = vpack.c.b16 %v3231, %v3227
    %v4024 = vpack.c.b16 %v3232, %v3228
    %v4025 = vpack.c.b16 %v3233, %v3229
    %v4026 = vpack.c.b16 %v3234, %v3230
    %v4027 = vpack.c.b16 %v3239, %v3235
    %v4028 = vpack.c.b16 %v3240, %v3236
    %v4029 = vpack.c.b16 %v3241, %v3237
    %v4030 = vpack.c.b16 %v3242, %v3238
    %v4031 = vpack.c.b16 %v3247, %v3243
    %v4032 = vpack.c.b16 %v3248, %v3244
    %v4033 = vpack.c.b16 %v3249, %v3245
    %v4034 = vpack.c.b16 %v3250, %v3246
    %v4035 = vpack.c.b16 %v3255, %v3251
    %v4036 = vpack.c.b16 %v3256, %v3252
    %v4037 = vpack.c.b16 %v3257, %v3253
    %v4038 = vpack.c.b16 %v3258, %v3254
    %v4039 = vpack.c.b16 %v3263, %v3259
    %v4040 = vpack.c.b16 %v3264, %v3260
    %v4041 = vpack.c.b16 %v3265, %v3261
    %v4042 = vpack.c.b16 %v3266, %v3262
    %v4043 = vpack.c.b16 %v3271, %v3267
    %v4044 = vpack.c.b16 %v3272, %v3268
    %v4045 = vpack.c.b16 %v3273, %v3269
    %v4046 = vpack.c.b16 %v3274, %v3270
    %v4047 = vpack.c.b16 %v3279, %v3275
    %v4048 = vpack.c.b16 %v3280, %v3276
    %v4049 = vpack.c.b16 %v3281, %v3277
    %v4050 = vpack.c.b16 %v3282, %v3278
    %4819 = vmatprep.subr.bf16.mxu0 %v3284
    %4820 = vmatpush1.bf16.msra.mxu0 %v3283
    %4821 = vmatprep.subr.bf16.mxu0 %v3288
    %4822 = vmatpush1.bf16.msra.mxu0 %v3287
    %4823 = vmatprep.subr.bf16.mxu0 %v3292
    %4824 = vmatpush1.bf16.msra.mxu0 %v3291
    %4825 = vmatprep.subr.bf16.mxu0 %v3296
    %4826 = vmatpush1.bf16.msra.mxu0 %v3295
    %4827 = vmatprep.subr.bf16.mxu0 %v3300
    %4828 = vmatpush1.bf16.msra.mxu0 %v3299
    %4829 = vmatprep.subr.bf16.mxu0 %v3304
    %4830 = vmatpush1.bf16.msra.mxu0 %v3303
    %4831 = vmatprep.subr.bf16.mxu0 %v3308
    %4832 = vmatpush1.bf16.msra.mxu0 %v3307
    %4833 = vmatprep.subr.bf16.mxu0 %v3312
    %4834 = vmatpush1.bf16.msra.mxu0 %v3311
    %4835 = vmatprep.subr.bf16.mxu0 %v3316
    %4836 = vmatpush1.bf16.msra.mxu0 %v3315
    %4837 = vmatprep.subr.bf16.mxu0 %v3320
    %4838 = vmatpush1.bf16.msra.mxu0 %v3319
    %4839 = vmatprep.subr.bf16.mxu0 %v3324
    %4840 = vmatpush1.bf16.msra.mxu0 %v3323
    %4841 = vmatprep.subr.bf16.mxu0 %v3328
    %4842 = vmatpush1.bf16.msra.mxu0 %v3327
    %4843 = vmatprep.subr.bf16.mxu0 %v3332
    %4844 = vmatpush1.bf16.msra.mxu0 %v3331
    %4845 = vmatprep.subr.bf16.mxu0 %v3336
    %4846 = vmatpush1.bf16.msra.mxu0 %v3335
    %4847 = vmatprep.subr.bf16.mxu0 %v3340
    %4848 = vmatpush1.bf16.msra.mxu0 %v3339
    %4849 = vmatprep.subr.bf16.mxu0 %v3344
    %4850 = vmatpush1.bf16.msra.mxu0 %v3343
    %4851 = vmatprep.mubr.bf16.mxu0 %v166
    %4852 = vmatmul.mubr.bf16.gmra.mrb[0].mxu0 %v165
    %v4853 = vpop.f32.mrb[0].mxu0
    %v4854 = vadd.f32 %v962, %v4853
    %v4855 = vpop.f32.mrb[0].mxu0
    %v4856 = vadd.f32 %v966, %v4855
    %v4857 = vpop.f32.mrb[0].mxu0
    %v4858 = vadd.f32 %v962, %v4857
    %v4859 = vpop.f32.mrb[0].mxu0
    %v4860 = vadd.f32 %v966, %v4859
    %4861 = vdwg.mxu0
    %4862 = vmatprep.subr.bf16.mxu0 %v3348
    %4863 = vmatpush1.bf16.msra.mxu0 %v3347
    %4864 = vmatprep.subr.bf16.mxu0 %v3352
    %4865 = vmatpush1.bf16.msra.mxu0 %v3351
    %4866 = vmatprep.subr.bf16.mxu0 %v3356
    %4867 = vmatpush1.bf16.msra.mxu0 %v3355
    %4868 = vmatprep.subr.bf16.mxu0 %v3360
    %4869 = vmatpush1.bf16.msra.mxu0 %v3359
    %4870 = vmatprep.subr.bf16.mxu0 %v3364
    %4871 = vmatpush1.bf16.msra.mxu0 %v3363
    %4872 = vmatprep.subr.bf16.mxu0 %v3368
    %4873 = vmatpush1.bf16.msra.mxu0 %v3367
    %4874 = vmatprep.subr.bf16.mxu0 %v3372
    %4875 = vmatpush1.bf16.msra.mxu0 %v3371
    %4876 = vmatprep.subr.bf16.mxu0 %v3376
    %4877 = vmatpush1.bf16.msra.mxu0 %v3375
    %4878 = vmatprep.subr.bf16.mxu0 %v3380
    %4879 = vmatpush1.bf16.msra.mxu0 %v3379
    %4880 = vmatprep.subr.bf16.mxu0 %v3384
    %4881 = vmatpush1.bf16.msra.mxu0 %v3383
    %4882 = vmatprep.subr.bf16.mxu0 %v3388
    %4883 = vmatpush1.bf16.msra.mxu0 %v3387
    %4884 = vmatprep.subr.bf16.mxu0 %v3392
    %4885 = vmatpush1.bf16.msra.mxu0 %v3391
    %4886 = vmatprep.subr.bf16.mxu0 %v3396
    %4887 = vmatpush1.bf16.msra.mxu0 %v3395
    %4888 = vmatprep.subr.bf16.mxu0 %v3400
    %4889 = vmatpush1.bf16.msra.mxu0 %v3399
    %4890 = vmatprep.subr.bf16.mxu0 %v3404
    %4891 = vmatpush1.bf16.msra.mxu0 %v3403
    %4892 = vmatprep.subr.bf16.mxu0 %v3408
    %4893 = vmatpush1.bf16.msra.mxu0 %v3407
    %4894 = vmatprep.mubr.bf16.mxu0 %v168
    %4895 = vmatmul.mubr.bf16.gmra.mrb[0].mxu0 %v167
    %v4896 = vpop.f32.mrb[0].mxu0
    %v4897 = vadd.f32 %v4854, %v4896
    %v4898 = vpop.f32.mrb[0].mxu0
    %v4899 = vadd.f32 %v4856, %v4898
    %v4900 = vpop.f32.mrb[0].mxu0
    %v4901 = vadd.f32 %v4858, %v4900
    %v4902 = vpop.f32.mrb[0].mxu0
    %v4903 = vadd.f32 %v4860, %v4902
    %4904 = vdwg.mxu0
    %4905 = vmatprep.subr.bf16.mxu0 %v3412
    %4906 = vmatpush1.bf16.msra.mxu0 %v3411
    %4907 = vmatprep.subr.bf16.mxu0 %v3416
    %4908 = vmatpush1.bf16.msra.mxu0 %v3415
    %4909 = vmatprep.subr.bf16.mxu0 %v3420
    %4910 = vmatpush1.bf16.msra.mxu0 %v3419
    %4911 = vmatprep.subr.bf16.mxu0 %v3424
    %4912 = vmatpush1.bf16.msra.mxu0 %v3423
    %4913 = vmatprep.subr.bf16.mxu0 %v3428
    %4914 = vmatpush1.bf16.msra.mxu0 %v3427
    %4915 = vmatprep.subr.bf16.mxu0 %v3432
    %4916 = vmatpush1.bf16.msra.mxu0 %v3431
    %4917 = vmatprep.subr.bf16.mxu0 %v3436
    %4918 = vmatpush1.bf16.msra.mxu0 %v3435
    %4919 = vmatprep.subr.bf16.mxu0 %v3440
    %4920 = vmatpush1.bf16.msra.mxu0 %v3439
    %4921 = vmatprep.subr.bf16.mxu0 %v3444
    %4922 = vmatpush1.bf16.msra.mxu0 %v3443
    %4923 = vmatprep.subr.bf16.mxu0 %v3448
    %4924 = vmatpush1.bf16.msra.mxu0 %v3447
    %4925 = vmatprep.subr.bf16.mxu0 %v3452
    %4926 = vmatpush1.bf16.msra.mxu0 %v3451
    %4927 = vmatprep.subr.bf16.mxu0 %v3456
    %4928 = vmatpush1.bf16.msra.mxu0 %v3455
    %4929 = vmatprep.subr.bf16.mxu0 %v3460
    %4930 = vmatpush1.bf16.msra.mxu0 %v3459
    %4931 = vmatprep.subr.bf16.mxu0 %v3464
    %4932 = vmatpush1.bf16.msra.mxu0 %v3463
    %4933 = vmatprep.subr.bf16.mxu0 %v3468
    %4934 = vmatpush1.bf16.msra.mxu0 %v3467
    %4935 = vmatprep.subr.bf16.mxu0 %v3472
    %4936 = vmatpush1.bf16.msra.mxu0 %v3471
    %4937 = vmatprep.mubr.bf16.mxu0 %v170
    %4938 = vmatmul.mubr.bf16.gmra.mrb[0].mxu0 %v169
    %v4939 = vpop.f32.mrb[0].mxu0
    %v4940 = vadd.f32 %v4897, %v4939
    %v4941 = vpop.f32.mrb[0].mxu0
    %v4942 = vadd.f32 %v4899, %v4941
    %v4943 = vpop.f32.mrb[0].mxu0
    %v4944 = vadd.f32 %v4901, %v4943
    %v4945 = vpop.f32.mrb[0].mxu0
    %v4946 = vadd.f32 %v4903, %v4945
    %4947 = vdwg.mxu0
    %4948 = vmatprep.subr.bf16.mxu0 %v3476
    %4949 = vmatpush1.bf16.msra.mxu0 %v3475
    %4950 = vmatprep.subr.bf16.mxu0 %v3480
    %4951 = vmatpush1.bf16.msra.mxu0 %v3479
    %4952 = vmatprep.subr.bf16.mxu0 %v3484
    %4953 = vmatpush1.bf16.msra.mxu0 %v3483
    %4954 = vmatprep.subr.bf16.mxu0 %v3488
    %4955 = vmatpush1.bf16.msra.mxu0 %v3487
    %4956 = vmatprep.subr.bf16.mxu0 %v3492
    %4957 = vmatpush1.bf16.msra.mxu0 %v3491
    %4958 = vmatprep.subr.bf16.mxu0 %v3496
    %4959 = vmatpush1.bf16.msra.mxu0 %v3495
    %4960 = vmatprep.subr.bf16.mxu0 %v3500
    %4961 = vmatpush1.bf16.msra.mxu0 %v3499
    %4962 = vmatprep.subr.bf16.mxu0 %v3504
    %4963 = vmatpush1.bf16.msra.mxu0 %v3503
    %4964 = vmatprep.subr.bf16.mxu0 %v3508
    %4965 = vmatpush1.bf16.msra.mxu0 %v3507
    %4966 = vmatprep.subr.bf16.mxu0 %v3512
    %4967 = vmatpush1.bf16.msra.mxu0 %v3511
    %4968 = vmatprep.subr.bf16.mxu0 %v3516
    %4969 = vmatpush1.bf16.msra.mxu0 %v3515
    %4970 = vmatprep.subr.bf16.mxu0 %v3520
    %4971 = vmatpush1.bf16.msra.mxu0 %v3519
    %4972 = vmatprep.subr.bf16.mxu0 %v3524
    %4973 = vmatpush1.bf16.msra.mxu0 %v3523
    %4974 = vmatprep.subr.bf16.mxu0 %v3528
    %4975 = vmatpush1.bf16.msra.mxu0 %v3527
    %4976 = vmatprep.subr.bf16.mxu0 %v3532
    %4977 = vmatpush1.bf16.msra.mxu0 %v3531
    %4978 = vmatprep.subr.bf16.mxu0 %v3536
    %4979 = vmatpush1.bf16.msra.mxu0 %v3535
    %4980 = vmatprep.mubr.bf16.mxu0 %v172
    %4981 = vmatmul.mubr.bf16.gmra.mrb[0].mxu0 %v171
    %v4982 = vpop.f32.mrb[0].mxu0
    %v4983 = vadd.f32 %v4940, %v4982
    %v4984 = vpop.f32.mrb[0].mxu0
    %v4985 = vadd.f32 %v4942, %v4984
    %v4986 = vpop.f32.mrb[0].mxu0
    %v4987 = vadd.f32 %v4944, %v4986
    %v4988 = vpop.f32.mrb[0].mxu0
    %v4989 = vadd.f32 %v4946, %v4988
    %4990 = vdwg.mxu0
    %4991 = vmatprep.subr.bf16.mxu0 %v3540
    %4992 = vmatpush1.bf16.msra.mxu0 %v3539
    %4993 = vmatprep.subr.bf16.mxu0 %v3544
    %4994 = vmatpush1.bf16.msra.mxu0 %v3543
    %4995 = vmatprep.subr.bf16.mxu0 %v3548
    %4996 = vmatpush1.bf16.msra.mxu0 %v3547
    %4997 = vmatprep.subr.bf16.mxu0 %v3552
    %4998 = vmatpush1.bf16.msra.mxu0 %v3551
    %4999 = vmatprep.subr.bf16.mxu0 %v3556
    %5000 = vmatpush1.bf16.msra.mxu0 %v3555
    %5001 = vmatprep.subr.bf16.mxu0 %v3560
    %5002 = vmatpush1.bf16.msra.mxu0 %v3559
    %5003 = vmatprep.subr.bf16.mxu0 %v3564
    %5004 = vmatpush1.bf16.msra.mxu0 %v3563
    %5005 = vmatprep.subr.bf16.mxu0 %v3568
    %5006 = vmatpush1.bf16.msra.mxu0 %v3567
    %5007 = vmatprep.subr.bf16.mxu0 %v3572
    %5008 = vmatpush1.bf16.msra.mxu0 %v3571
    %5009 = vmatprep.subr.bf16.mxu0 %v3576
    %5010 = vmatpush1.bf16.msra.mxu0 %v3575
    %5011 = vmatprep.subr.bf16.mxu0 %v3580
    %5012 = vmatpush1.bf16.msra.mxu0 %v3579
    %5013 = vmatprep.subr.bf16.mxu0 %v3584
    %5014 = vmatpush1.bf16.msra.mxu0 %v3583
    %5015 = vmatprep.subr.bf16.mxu0 %v3588
    %5016 = vmatpush1.bf16.msra.mxu0 %v3587
    %5017 = vmatprep.subr.bf16.mxu0 %v3592
    %5018 = vmatpush1.bf16.msra.mxu0 %v3591
    %5019 = vmatprep.subr.bf16.mxu0 %v3596
    %5020 = vmatpush1.bf16.msra.mxu0 %v3595
    %5021 = vmatprep.subr.bf16.mxu0 %v3600
    %5022 = vmatpush1.bf16.msra.mxu0 %v3599
    %5023 = vmatprep.mubr.bf16.mxu0 %v174
    %5024 = vmatmul.mubr.bf16.gmra.mrb[0].mxu0 %v173
    %v5025 = vpop.f32.mrb[0].mxu0
    %v5026 = vadd.f32 %v4983, %v5025
    %v5027 = vpop.f32.mrb[0].mxu0
    %v5028 = vadd.f32 %v4985, %v5027
    %v5029 = vpop.f32.mrb[0].mxu0
    %v5030 = vadd.f32 %v4987, %v5029
    %v5031 = vpop.f32.mrb[0].mxu0
    %v5032 = vadd.f32 %v4989, %v5031
    %5033 = vdwg.mxu0
    %5034 = vmatprep.subr.bf16.mxu0 %v3604
    %5035 = vmatpush1.bf16.msra.mxu0 %v3603
    %5036 = vmatprep.subr.bf16.mxu0 %v3608
    %5037 = vmatpush1.bf16.msra.mxu0 %v3607
    %5038 = vmatprep.subr.bf16.mxu0 %v3612
    %5039 = vmatpush1.bf16.msra.mxu0 %v3611
    %5040 = vmatprep.subr.bf16.mxu0 %v3616
    %5041 = vmatpush1.bf16.msra.mxu0 %v3615
    %5042 = vmatprep.subr.bf16.mxu0 %v3620
    %5043 = vmatpush1.bf16.msra.mxu0 %v3619
    %5044 = vmatprep.subr.bf16.mxu0 %v3624
    %5045 = vmatpush1.bf16.msra.mxu0 %v3623
    %5046 = vmatprep.subr.bf16.mxu0 %v3628
    %5047 = vmatpush1.bf16.msra.mxu0 %v3627
    %5048 = vmatprep.subr.bf16.mxu0 %v3632
    %5049 = vmatpush1.bf16.msra.mxu0 %v3631
    %5050 = vmatprep.subr.bf16.mxu0 %v3636
    %5051 = vmatpush1.bf16.msra.mxu0 %v3635
    %5052 = vmatprep.subr.bf16.mxu0 %v3640
    %5053 = vmatpush1.bf16.msra.mxu0 %v3639
    %5054 = vmatprep.subr.bf16.mxu0 %v3644
    %5055 = vmatpush1.bf16.msra.mxu0 %v3643
    %5056 = vmatprep.subr.bf16.mxu0 %v3648
    %5057 = vmatpush1.bf16.msra.mxu0 %v3647
    %5058 = vmatprep.subr.bf16.mxu0 %v3652
    %5059 = vmatpush1.bf16.msra.mxu0 %v3651
    %5060 = vmatprep.subr.bf16.mxu0 %v3656
    %5061 = vmatpush1.bf16.msra.mxu0 %v3655
    %5062 = vmatprep.subr.bf16.mxu0 %v3660
    %5063 = vmatpush1.bf16.msra.mxu0 %v3659
    %5064 = vmatprep.subr.bf16.mxu0 %v3664
    %5065 = vmatpush1.bf16.msra.mxu0 %v3663
    %5066 = vmatprep.mubr.bf16.mxu0 %v176
    %5067 = vmatmul.mubr.bf16.gmra.mrb[0].mxu0 %v175
    %v5068 = vpop.f32.mrb[0].mxu0
    %v5069 = vadd.f32 %v5026, %v5068
    %v5070 = vpop.f32.mrb[0].mxu0
    %v5071 = vadd.f32 %v5028, %v5070
    %v5072 = vpop.f32.mrb[0].mxu0
    %v5073 = vadd.f32 %v5030, %v5072
    %v5074 = vpop.f32.mrb[0].mxu0
    %v5075 = vadd.f32 %v5032, %v5074
    %5076 = vdwg.mxu0
    %5077 = vmatprep.subr.bf16.mxu0 %v3668
    %5078 = vmatpush1.bf16.msra.mxu0 %v3667
    %5079 = vmatprep.subr.bf16.mxu0 %v3672
    %5080 = vmatpush1.bf16.msra.mxu0 %v3671
    %5081 = vmatprep.subr.bf16.mxu0 %v3676
    %5082 = vmatpush1.bf16.msra.mxu0 %v3675
    %5083 = vmatprep.subr.bf16.mxu0 %v3680
    %5084 = vmatpush1.bf16.msra.mxu0 %v3679
    %5085 = vmatprep.subr.bf16.mxu0 %v3684
    %5086 = vmatpush1.bf16.msra.mxu0 %v3683
    %5087 = vmatprep.subr.bf16.mxu0 %v3688
    %5088 = vmatpush1.bf16.msra.mxu0 %v3687
    %5089 = vmatprep.subr.bf16.mxu0 %v3692
    %5090 = vmatpush1.bf16.msra.mxu0 %v3691
    %5091 = vmatprep.subr.bf16.mxu0 %v3696
    %5092 = vmatpush1.bf16.msra.mxu0 %v3695
    %5093 = vmatprep.subr.bf16.mxu0 %v3700
    %5094 = vmatpush1.bf16.msra.mxu0 %v3699
    %5095 = vmatprep.subr.bf16.mxu0 %v3704
    %5096 = vmatpush1.bf16.msra.mxu0 %v3703
    %5097 = vmatprep.subr.bf16.mxu0 %v3708
    %5098 = vmatpush1.bf16.msra.mxu0 %v3707
    %5099 = vmatprep.subr.bf16.mxu0 %v3712
    %5100 = vmatpush1.bf16.msra.mxu0 %v3711
    %5101 = vmatprep.subr.bf16.mxu0 %v3716
    %5102 = vmatpush1.bf16.msra.mxu0 %v3715
    %5103 = vmatprep.subr.bf16.mxu0 %v3720
    %5104 = vmatpush1.bf16.msra.mxu0 %v3719
    %5105 = vmatprep.subr.bf16.mxu0 %v3724
    %5106 = vmatpush1.bf16.msra.mxu0 %v3723
    %5107 = vmatprep.subr.bf16.mxu0 %v3728
    %5108 = vmatpush1.bf16.msra.mxu0 %v3727
    %5109 = vmatprep.mubr.bf16.mxu0 %v178
    %5110 = vmatmul.mubr.bf16.gmra.mrb[0].mxu0 %v177
    %v5111 = vpop.f32.mrb[0].mxu0
    %v5112 = vadd.f32 %v5069, %v5111
    %v5113 = vpop.f32.mrb[0].mxu0
    %v5114 = vadd.f32 %v5071, %v5113
    %v5115 = vpop.f32.mrb[0].mxu0
    %v5116 = vadd.f32 %v5073, %v5115
    %v5117 = vpop.f32.mrb[0].mxu0
    %v5118 = vadd.f32 %v5075, %v5117
    %5119 = vdwg.mxu0
    %5120 = vmatprep.subr.bf16.mxu0 %v3732
    %5121 = vmatpush1.bf16.msra.mxu0 %v3731
    %5122 = vmatprep.subr.bf16.mxu0 %v3736
    %5123 = vmatpush1.bf16.msra.mxu0 %v3735
    %5124 = vmatprep.subr.bf16.mxu0 %v3740
    %5125 = vmatpush1.bf16.msra.mxu0 %v3739
    %5126 = vmatprep.subr.bf16.mxu0 %v3744
    %5127 = vmatpush1.bf16.msra.mxu0 %v3743
    %5128 = vmatprep.subr.bf16.mxu0 %v3748
    %5129 = vmatpush1.bf16.msra.mxu0 %v3747
    %5130 = vmatprep.subr.bf16.mxu0 %v3752
    %5131 = vmatpush1.bf16.msra.mxu0 %v3751
    %5132 = vmatprep.subr.bf16.mxu0 %v3756
    %5133 = vmatpush1.bf16.msra.mxu0 %v3755
    %5134 = vmatprep.subr.bf16.mxu0 %v3760
    %5135 = vmatpush1.bf16.msra.mxu0 %v3759
    %5136 = vmatprep.subr.bf16.mxu0 %v3764
    %5137 = vmatpush1.bf16.msra.mxu0 %v3763
    %5138 = vmatprep.subr.bf16.mxu0 %v3768
    %5139 = vmatpush1.bf16.msra.mxu0 %v3767
    %5140 = vmatprep.subr.bf16.mxu0 %v3772
    %5141 = vmatpush1.bf16.msra.mxu0 %v3771
    %5142 = vmatprep.subr.bf16.mxu0 %v3776
    %5143 = vmatpush1.bf16.msra.mxu0 %v3775
    %5144 = vmatprep.subr.bf16.mxu0 %v3780
    %5145 = vmatpush1.bf16.msra.mxu0 %v3779
    %5146 = vmatprep.subr.bf16.mxu0 %v3784
    %5147 = vmatpush1.bf16.msra.mxu0 %v3783
    %5148 = vmatprep.subr.bf16.mxu0 %v3788
    %5149 = vmatpush1.bf16.msra.mxu0 %v3787
    %5150 = vmatprep.subr.bf16.mxu0 %v3792
    %5151 = vmatpush1.bf16.msra.mxu0 %v3791
    %5152 = vmatprep.mubr.bf16.mxu0 %v180
    %5153 = vmatmul.mubr.bf16.gmra.mrb[0].mxu0 %v179
    %v5154 = vpop.f32.mrb[0].mxu0
    %v5155 = vadd.f32 %v5112, %v5154
    %v5156 = vpop.f32.mrb[0].mxu0
    %v5157 = vadd.f32 %v5114, %v5156
    %v5158 = vpop.f32.mrb[0].mxu0
    %v5159 = vadd.f32 %v5116, %v5158
    %v5160 = vpop.f32.mrb[0].mxu0
    %v5161 = vadd.f32 %v5118, %v5160
    %5162 = vdwg.mxu0
    %5163 = vmatprep.subr.bf16.mxu0 %v3796
    %5164 = vmatpush1.bf16.msra.mxu0 %v3795
    %5165 = vmatprep.subr.bf16.mxu0 %v3800
    %5166 = vmatpush1.bf16.msra.mxu0 %v3799
    %5167 = vmatprep.subr.bf16.mxu0 %v3804
    %5168 = vmatpush1.bf16.msra.mxu0 %v3803
    %5169 = vmatprep.subr.bf16.mxu0 %v3808
    %5170 = vmatpush1.bf16.msra.mxu0 %v3807
    %5171 = vmatprep.subr.bf16.mxu0 %v3812
    %5172 = vmatpush1.bf16.msra.mxu0 %v3811
    %5173 = vmatprep.subr.bf16.mxu0 %v3816
    %5174 = vmatpush1.bf16.msra.mxu0 %v3815
    %5175 = vmatprep.subr.bf16.mxu0 %v3820
    %5176 = vmatpush1.bf16.msra.mxu0 %v3819
    %5177 = vmatprep.subr.bf16.mxu0 %v3824
    %5178 = vmatpush1.bf16.msra.mxu0 %v3823
    %5179 = vmatprep.subr.bf16.mxu0 %v3828
    %5180 = vmatpush1.bf16.msra.mxu0 %v3827
    %5181 = vmatprep.subr.bf16.mxu0 %v3832
    %5182 = vmatpush1.bf16.msra.mxu0 %v3831
    %5183 = vmatprep.subr.bf16.mxu0 %v3836
    %5184 = vmatpush1.bf16.msra.mxu0 %v3835
    %5185 = vmatprep.subr.bf16.mxu0 %v3840
    %5186 = vmatpush1.bf16.msra.mxu0 %v3839
    %5187 = vmatprep.subr.bf16.mxu0 %v3844
    %5188 = vmatpush1.bf16.msra.mxu0 %v3843
    %5189 = vmatprep.subr.bf16.mxu0 %v3848
    %5190 = vmatpush1.bf16.msra.mxu0 %v3847
    %5191 = vmatprep.subr.bf16.mxu0 %v3852
    %5192 = vmatpush1.bf16.msra.mxu0 %v3851
    %5193 = vmatprep.subr.bf16.mxu0 %v3856
    %5194 = vmatpush1.bf16.msra.mxu0 %v3855
    %5195 = vmatprep.mubr.bf16.mxu0 %v182
    %5196 = vmatmul.mubr.bf16.gmra.mrb[0].mxu0 %v181
    %v5197 = vpop.f32.mrb[0].mxu0
    %v5198 = vadd.f32 %v5155, %v5197
    %v5199 = vpop.f32.mrb[0].mxu0
    %v5200 = vadd.f32 %v5157, %v5199
    %v5201 = vpop.f32.mrb[0].mxu0
    %v5202 = vadd.f32 %v5159, %v5201
    %v5203 = vpop.f32.mrb[0].mxu0
    %v5204 = vadd.f32 %v5161, %v5203
    %5205 = vdwg.mxu0
    %5206 = vmatprep.subr.bf16.mxu0 %v3860
    %5207 = vmatpush1.bf16.msra.mxu0 %v3859
    %5208 = vmatprep.subr.bf16.mxu0 %v3864
    %5209 = vmatpush1.bf16.msra.mxu0 %v3863
    %5210 = vmatprep.subr.bf16.mxu0 %v3868
    %5211 = vmatpush1.bf16.msra.mxu0 %v3867
    %5212 = vmatprep.subr.bf16.mxu0 %v3872
    %5213 = vmatpush1.bf16.msra.mxu0 %v3871
    %5214 = vmatprep.subr.bf16.mxu0 %v3876
    %5215 = vmatpush1.bf16.msra.mxu0 %v3875
    %5216 = vmatprep.subr.bf16.mxu0 %v3880
    %5217 = vmatpush1.bf16.msra.mxu0 %v3879
    %5218 = vmatprep.subr.bf16.mxu0 %v3884
    %5219 = vmatpush1.bf16.msra.mxu0 %v3883
    %5220 = vmatprep.subr.bf16.mxu0 %v3888
    %5221 = vmatpush1.bf16.msra.mxu0 %v3887
    %5222 = vmatprep.subr.bf16.mxu0 %v3892
    %5223 = vmatpush1.bf16.msra.mxu0 %v3891
    %5224 = vmatprep.subr.bf16.mxu0 %v3896
    %5225 = vmatpush1.bf16.msra.mxu0 %v3895
    %5226 = vmatprep.subr.bf16.mxu0 %v3900
    %5227 = vmatpush1.bf16.msra.mxu0 %v3899
    %5228 = vmatprep.subr.bf16.mxu0 %v3904
    %5229 = vmatpush1.bf16.msra.mxu0 %v3903
    %5230 = vmatprep.subr.bf16.mxu0 %v3908
    %5231 = vmatpush1.bf16.msra.mxu0 %v3907
    %5232 = vmatprep.subr.bf16.mxu0 %v3912
    %5233 = vmatpush1.bf16.msra.mxu0 %v3911
    %5234 = vmatprep.subr.bf16.mxu0 %v3916
    %5235 = vmatpush1.bf16.msra.mxu0 %v3915
    %5236 = vmatprep.subr.bf16.mxu0 %v3920
    %5237 = vmatpush1.bf16.msra.mxu0 %v3919
    %5238 = vmatprep.mubr.bf16.mxu0 %v184
    %5239 = vmatmul.mubr.bf16.gmra.mrb[0].mxu0 %v183
    %v5240 = vpop.f32.mrb[0].mxu0
    %v5241 = vadd.f32 %v5198, %v5240
    %v5242 = vpop.f32.mrb[0].mxu0
    %v5243 = vadd.f32 %v5200, %v5242
    %v5244 = vpop.f32.mrb[0].mxu0
    %v5245 = vadd.f32 %v5202, %v5244
    %v5246 = vpop.f32.mrb[0].mxu0
    %v5247 = vadd.f32 %v5204, %v5246
    %5248 = vdwg.mxu0
    %5249 = vmatprep.subr.bf16.mxu0 %v3924
    %5250 = vmatpush1.bf16.msra.mxu0 %v3923
    %5251 = vmatprep.subr.bf16.mxu0 %v3928
    %5252 = vmatpush1.bf16.msra.mxu0 %v3927
    %5253 = vmatprep.subr.bf16.mxu0 %v3932
    %5254 = vmatpush1.bf16.msra.mxu0 %v3931
    %5255 = vmatprep.subr.bf16.mxu0 %v3936
    %5256 = vmatpush1.bf16.msra.mxu0 %v3935
    %5257 = vmatprep.subr.bf16.mxu0 %v3940
    %5258 = vmatpush1.bf16.msra.mxu0 %v3939
    %5259 = vmatprep.subr.bf16.mxu0 %v3944
    %5260 = vmatpush1.bf16.msra.mxu0 %v3943
    %5261 = vmatprep.subr.bf16.mxu0 %v3948
    %5262 = vmatpush1.bf16.msra.mxu0 %v3947
    %5263 = vmatprep.subr.bf16.mxu0 %v3952
    %5264 = vmatpush1.bf16.msra.mxu0 %v3951
    %5265 = vmatprep.subr.bf16.mxu0 %v3956
    %5266 = vmatpush1.bf16.msra.mxu0 %v3955
    %5267 = vmatprep.subr.bf16.mxu0 %v3960
    %5268 = vmatpush1.bf16.msra.mxu0 %v3959
    %5269 = vmatprep.subr.bf16.mxu0 %v3964
    %5270 = vmatpush1.bf16.msra.mxu0 %v3963
    %5271 = vmatprep.subr.bf16.mxu0 %v3968
    %5272 = vmatpush1.bf16.msra.mxu0 %v3967
    %5273 = vmatprep.subr.bf16.mxu0 %v3972
    %5274 = vmatpush1.bf16.msra.mxu0 %v3971
    %5275 = vmatprep.subr.bf16.mxu0 %v3976
    %5276 = vmatpush1.bf16.msra.mxu0 %v3975
    %5277 = vmatprep.subr.bf16.mxu0 %v3980
    %5278 = vmatpush1.bf16.msra.mxu0 %v3979
    %5279 = vmatprep.subr.bf16.mxu0 %v3984
    %5280 = vmatpush1.bf16.msra.mxu0 %v3983
    %5281 = vmatprep.mubr.bf16.mxu0 %v186
    %5282 = vmatmul.mubr.bf16.gmra.mrb[0].mxu0 %v185
    %v5283 = vpop.f32.mrb[0].mxu0
    %v5284 = vadd.f32 %v5241, %v5283
    %v5285 = vpop.f32.mrb[0].mxu0
    %v5286 = vadd.f32 %v5243, %v5285
    %v5287 = vpop.f32.mrb[0].mxu0
    %v5288 = vadd.f32 %v5245, %v5287
    %v5289 = vpop.f32.mrb[0].mxu0
    %v5290 = vadd.f32 %v5247, %v5289
    %5291 = vdwg.mxu0
    %5292 = vmatprep.subr.bf16.mxu0 %v3988
    %5293 = vmatpush1.bf16.msra.mxu0 %v3987
    %5294 = vmatprep.subr.bf16.mxu0 %v3992
    %5295 = vmatpush1.bf16.msra.mxu0 %v3991
    %5296 = vmatprep.subr.bf16.mxu0 %v3996
    %5297 = vmatpush1.bf16.msra.mxu0 %v3995
    %5298 = vmatprep.subr.bf16.mxu0 %v4000
    %5299 = vmatpush1.bf16.msra.mxu0 %v3999
    %5300 = vmatprep.subr.bf16.mxu0 %v4004
    %5301 = vmatpush1.bf16.msra.mxu0 %v4003
    %5302 = vmatprep.subr.bf16.mxu0 %v4008
    %5303 = vmatpush1.bf16.msra.mxu0 %v4007
    %5304 = vmatprep.subr.bf16.mxu0 %v4012
    %5305 = vmatpush1.bf16.msra.mxu0 %v4011
    %5306 = vmatprep.subr.bf16.mxu0 %v4016
    %5307 = vmatpush1.bf16.msra.mxu0 %v4015
    %5308 = vmatprep.subr.bf16.mxu0 %v4020
    %5309 = vmatpush1.bf16.msra.mxu0 %v4019
    %5310 = vmatprep.subr.bf16.mxu0 %v4024
    %5311 = vmatpush1.bf16.msra.mxu0 %v4023
    %5312 = vmatprep.subr.bf16.mxu0 %v4028
    %5313 = vmatpush1.bf16.msra.mxu0 %v4027
    %5314 = vmatprep.subr.bf16.mxu0 %v4032
    %5315 = vmatpush1.bf16.msra.mxu0 %v4031
    %5316 = vmatprep.subr.bf16.mxu0 %v4036
    %5317 = vmatpush1.bf16.msra.mxu0 %v4035
    %5318 = vmatprep.subr.bf16.mxu0 %v4040
    %5319 = vmatpush1.bf16.msra.mxu0 %v4039
    %5320 = vmatprep.subr.bf16.mxu0 %v4044
    %5321 = vmatpush1.bf16.msra.mxu0 %v4043
    %5322 = vmatprep.subr.bf16.mxu0 %v4048
    %5323 = vmatpush1.bf16.msra.mxu0 %v4047
    %5324 = vmatprep.mubr.bf16.mxu0 %v188
    %5325 = vmatmul.mubr.bf16.gmra.mrb[0].mxu0 %v187
    %v5326 = vpop.f32.mrb[0].mxu0
    %v5327 = vadd.f32 %v5284, %v5326
    %v5328 = vpop.f32.mrb[0].mxu0
    %v5329 = vadd.f32 %v5286, %v5328
    %v5330 = vpop.f32.mrb[0].mxu0
    %v5331 = vadd.f32 %v5288, %v5330
    %v5332 = vpop.f32.mrb[0].mxu0
    %v5333 = vadd.f32 %v5290, %v5332
    %5334 = vdwg.mxu0
    %5335 = vmatprep.subr.bf16.mxu0 %v3286
    %5336 = vmatpush1.bf16.msra.mxu0 %v3285
    %5337 = vmatprep.subr.bf16.mxu0 %v3290
    %5338 = vmatpush1.bf16.msra.mxu0 %v3289
    %5339 = vmatprep.subr.bf16.mxu0 %v3294
    %5340 = vmatpush1.bf16.msra.mxu0 %v3293
    %5341 = vmatprep.subr.bf16.mxu0 %v3298
    %5342 = vmatpush1.bf16.msra.mxu0 %v3297
    %5343 = vmatprep.subr.bf16.mxu0 %v3302
    %5344 = vmatpush1.bf16.msra.mxu0 %v3301
    %5345 = vmatprep.subr.bf16.mxu0 %v3306
    %5346 = vmatpush1.bf16.msra.mxu0 %v3305
    %5347 = vmatprep.subr.bf16.mxu0 %v3310
    %5348 = vmatpush1.bf16.msra.mxu0 %v3309
    %5349 = vmatprep.subr.bf16.mxu0 %v3314
    %5350 = vmatpush1.bf16.msra.mxu0 %v3313
    %5351 = vmatprep.subr.bf16.mxu0 %v3318
    %5352 = vmatpush1.bf16.msra.mxu0 %v3317
    %5353 = vmatprep.subr.bf16.mxu0 %v3322
    %5354 = vmatpush1.bf16.msra.mxu0 %v3321
    %5355 = vmatprep.subr.bf16.mxu0 %v3326
    %5356 = vmatpush1.bf16.msra.mxu0 %v3325
    %5357 = vmatprep.subr.bf16.mxu0 %v3330
    %5358 = vmatpush1.bf16.msra.mxu0 %v3329
    %5359 = vmatprep.subr.bf16.mxu0 %v3334
    %5360 = vmatpush1.bf16.msra.mxu0 %v3333
    %5361 = vmatprep.subr.bf16.mxu0 %v3338
    %5362 = vmatpush1.bf16.msra.mxu0 %v3337
    %5363 = vmatprep.subr.bf16.mxu0 %v3342
    %5364 = vmatpush1.bf16.msra.mxu0 %v3341
    %5365 = vmatprep.subr.bf16.mxu0 %v3346
    %5366 = vmatpush1.bf16.msra.mxu0 %v3345
    %5367 = vmatprep.mubr.bf16.mxu0 %v166
    %5368 = vmatmul.mubr.bf16.gmra.mrb[0].mxu0 %v165
    %v5369 = vpop.f32.mrb[0].mxu0
    %v5370 = vadd.f32 %v970, %v5369
    %v5371 = vpop.f32.mrb[0].mxu0
    %v5372 = vadd.f32 %v974, %v5371
    %v5373 = vpop.f32.mrb[0].mxu0
    %v5374 = vadd.f32 %v970, %v5373
    %v5375 = vpop.f32.mrb[0].mxu0
    %v5376 = vadd.f32 %v974, %v5375
    %5377 = vdwg.mxu0
    %5378 = vmatprep.subr.bf16.mxu0 %v3350
    %5379 = vmatpush1.bf16.msra.mxu0 %v3349
    %5380 = vmatprep.subr.bf16.mxu0 %v3354
    %5381 = vmatpush1.bf16.msra.mxu0 %v3353
    %5382 = vmatprep.subr.bf16.mxu0 %v3358
    %5383 = vmatpush1.bf16.msra.mxu0 %v3357
    %5384 = vmatprep.subr.bf16.mxu0 %v3362
    %5385 = vmatpush1.bf16.msra.mxu0 %v3361
    %5386 = vmatprep.subr.bf16.mxu0 %v3366
    %5387 = vmatpush1.bf16.msra.mxu0 %v3365
    %5388 = vmatprep.subr.bf16.mxu0 %v3370
    %5389 = vmatpush1.bf16.msra.mxu0 %v3369
    %5390 = vmatprep.subr.bf16.mxu0 %v3374
    %5391 = vmatpush1.bf16.msra.mxu0 %v3373
    %5392 = vmatprep.subr.bf16.mxu0 %v3378
    %5393 = vmatpush1.bf16.msra.mxu0 %v3377
    %5394 = vmatprep.subr.bf16.mxu0 %v3382
    %5395 = vmatpush1.bf16.msra.mxu0 %v3381
    %5396 = vmatprep.subr.bf16.mxu0 %v3386
    %5397 = vmatpush1.bf16.msra.mxu0 %v3385
    %5398 = vmatprep.subr.bf16.mxu0 %v3390
    %5399 = vmatpush1.bf16.msra.mxu0 %v3389
    %5400 = vmatprep.subr.bf16.mxu0 %v3394
    %5401 = vmatpush1.bf16.msra.mxu0 %v3393
    %5402 = vmatprep.subr.bf16.mxu0 %v3398
    %5403 = vmatpush1.bf16.msra.mxu0 %v3397
    %5404 = vmatprep.subr.bf16.mxu0 %v3402
    %5405 = vmatpush1.bf16.msra.mxu0 %v3401
    %5406 = vmatprep.subr.bf16.mxu0 %v3406
    %5407 = vmatpush1.bf16.msra.mxu0 %v3405
    %5408 = vmatprep.subr.bf16.mxu0 %v3410
    %5409 = vmatpush1.bf16.msra.mxu0 %v3409
    %5410 = vmatprep.mubr.bf16.mxu0 %v168
    %5411 = vmatmul.mubr.bf16.gmra.mrb[0].mxu0 %v167
    %v5412 = vpop.f32.mrb[0].mxu0
    %v5413 = vadd.f32 %v5370, %v5412
    %v5414 = vpop.f32.mrb[0].mxu0
    %v5415 = vadd.f32 %v5372, %v5414
    %v5416 = vpop.f32.mrb[0].mxu0
    %v5417 = vadd.f32 %v5374, %v5416
    %v5418 = vpop.f32.mrb[0].mxu0
    %v5419 = vadd.f32 %v5376, %v5418
    %5420 = vdwg.mxu0
    %5421 = vmatprep.subr.bf16.mxu0 %v3414
    %5422 = vmatpush1.bf16.msra.mxu0 %v3413
    %5423 = vmatprep.subr.bf16.mxu0 %v3418
    %5424 = vmatpush1.bf16.msra.mxu0 %v3417
    %5425 = vmatprep.subr.bf16.mxu0 %v3422
    %5426 = vmatpush1.bf16.msra.mxu0 %v3421
    %5427 = vmatprep.subr.bf16.mxu0 %v3426
    %5428 = vmatpush1.bf16.msra.mxu0 %v3425
    %5429 = vmatprep.subr.bf16.mxu0 %v3430
    %5430 = vmatpush1.bf16.msra.mxu0 %v3429
    %5431 = vmatprep.subr.bf16.mxu0 %v3434
    %5432 = vmatpush1.bf16.msra.mxu0 %v3433
    %5433 = vmatprep.subr.bf16.mxu0 %v3438
    %5434 = vmatpush1.bf16.msra.mxu0 %v3437
    %5435 = vmatprep.subr.bf16.mxu0 %v3442
    %5436 = vmatpush1.bf16.msra.mxu0 %v3441
    %5437 = vmatprep.subr.bf16.mxu0 %v3446
    %5438 = vmatpush1.bf16.msra.mxu0 %v3445
    %5439 = vmatprep.subr.bf16.mxu0 %v3450
    %5440 = vmatpush1.bf16.msra.mxu0 %v3449
    %5441 = vmatprep.subr.bf16.mxu0 %v3454
    %5442 = vmatpush1.bf16.msra.mxu0 %v3453
    %5443 = vmatprep.subr.bf16.mxu0 %v3458
    %5444 = vmatpush1.bf16.msra.mxu0 %v3457
    %5445 = vmatprep.subr.bf16.mxu0 %v3462
    %5446 = vmatpush1.bf16.msra.mxu0 %v3461
    %5447 = vmatprep.subr.bf16.mxu0 %v3466
    %5448 = vmatpush1.bf16.msra.mxu0 %v3465
    %5449 = vmatprep.subr.bf16.mxu0 %v3470
    %5450 = vmatpush1.bf16.msra.mxu0 %v3469
    %5451 = vmatprep.subr.bf16.mxu0 %v3474
    %5452 = vmatpush1.bf16.msra.mxu0 %v3473
    %5453 = vmatprep.mubr.bf16.mxu0 %v170
    %5454 = vmatmul.mubr.bf16.gmra.mrb[0].mxu0 %v169
    %v5455 = vpop.f32.mrb[0].mxu0
    %v5456 = vadd.f32 %v5413, %v5455
    %v5457 = vpop.f32.mrb[0].mxu0
    %v5458 = vadd.f32 %v5415, %v5457
    %v5459 = vpop.f32.mrb[0].mxu0
    %v5460 = vadd.f32 %v5417, %v5459
    %v5461 = vpop.f32.mrb[0].mxu0
    %v5462 = vadd.f32 %v5419, %v5461
    %5463 = vdwg.mxu0
    %5464 = vmatprep.subr.bf16.mxu0 %v3478
    %5465 = vmatpush1.bf16.msra.mxu0 %v3477
    %5466 = vmatprep.subr.bf16.mxu0 %v3482
    %5467 = vmatpush1.bf16.msra.mxu0 %v3481
    %5468 = vmatprep.subr.bf16.mxu0 %v3486
    %5469 = vmatpush1.bf16.msra.mxu0 %v3485
    %5470 = vmatprep.subr.bf16.mxu0 %v3490
    %5471 = vmatpush1.bf16.msra.mxu0 %v3489
    %5472 = vmatprep.subr.bf16.mxu0 %v3494
    %5473 = vmatpush1.bf16.msra.mxu0 %v3493
    %5474 = vmatprep.subr.bf16.mxu0 %v3498
    %5475 = vmatpush1.bf16.msra.mxu0 %v3497
    %5476 = vmatprep.subr.bf16.mxu0 %v3502
    %5477 = vmatpush1.bf16.msra.mxu0 %v3501
    %5478 = vmatprep.subr.bf16.mxu0 %v3506
    %5479 = vmatpush1.bf16.msra.mxu0 %v3505
    %5480 = vmatprep.subr.bf16.mxu0 %v3510
    %5481 = vmatpush1.bf16.msra.mxu0 %v3509
    %5482 = vmatprep.subr.bf16.mxu0 %v3514
    %5483 = vmatpush1.bf16.msra.mxu0 %v3513
    %5484 = vmatprep.subr.bf16.mxu0 %v3518
    %5485 = vmatpush1.bf16.msra.mxu0 %v3517
    %5486 = vmatprep.subr.bf16.mxu0 %v3522
    %5487 = vmatpush1.bf16.msra.mxu0 %v3521
    %5488 = vmatprep.subr.bf16.mxu0 %v3526
    %5489 = vmatpush1.bf16.msra.mxu0 %v3525
    %5490 = vmatprep.subr.bf16.mxu0 %v3530
    %5491 = vmatpush1.bf16.msra.mxu0 %v3529
    %5492 = vmatprep.subr.bf16.mxu0 %v3534
    %5493 = vmatpush1.bf16.msra.mxu0 %v3533
    %5494 = vmatprep.subr.bf16.mxu0 %v3538
    %5495 = vmatpush1.bf16.msra.mxu0 %v3537
    %5496 = vmatprep.mubr.bf16.mxu0 %v172
    %5497 = vmatmul.mubr.bf16.gmra.mrb[0].mxu0 %v171
    %v5498 = vpop.f32.mrb[0].mxu0
    %v5499 = vadd.f32 %v5456, %v5498
    %v5500 = vpop.f32.mrb[0].mxu0
    %v5501 = vadd.f32 %v5458, %v5500
    %v5502 = vpop.f32.mrb[0].mxu0
    %v5503 = vadd.f32 %v5460, %v5502
    %v5504 = vpop.f32.mrb[0].mxu0
    %v5505 = vadd.f32 %v5462, %v5504
    %5506 = vdwg.mxu0
    %5507 = vmatprep.subr.bf16.mxu0 %v3542
    %5508 = vmatpush1.bf16.msra.mxu0 %v3541
    %5509 = vmatprep.subr.bf16.mxu0 %v3546
    %5510 = vmatpush1.bf16.msra.mxu0 %v3545
    %5511 = vmatprep.subr.bf16.mxu0 %v3550
    %5512 = vmatpush1.bf16.msra.mxu0 %v3549
    %5513 = vmatprep.subr.bf16.mxu0 %v3554
    %5514 = vmatpush1.bf16.msra.mxu0 %v3553
    %5515 = vmatprep.subr.bf16.mxu0 %v3558
    %5516 = vmatpush1.bf16.msra.mxu0 %v3557
    %5517 = vmatprep.subr.bf16.mxu0 %v3562
    %5518 = vmatpush1.bf16.msra.mxu0 %v3561
    %5519 = vmatprep.subr.bf16.mxu0 %v3566
    %5520 = vmatpush1.bf16.msra.mxu0 %v3565
    %5521 = vmatprep.subr.bf16.mxu0 %v3570
    %5522 = vmatpush1.bf16.msra.mxu0 %v3569
    %5523 = vmatprep.subr.bf16.mxu0 %v3574
    %5524 = vmatpush1.bf16.msra.mxu0 %v3573
    %5525 = vmatprep.subr.bf16.mxu0 %v3578
    %5526 = vmatpush1.bf16.msra.mxu0 %v3577
    %5527 = vmatprep.subr.bf16.mxu0 %v3582
    %5528 = vmatpush1.bf16.msra.mxu0 %v3581
    %5529 = vmatprep.subr.bf16.mxu0 %v3586
    %5530 = vmatpush1.bf16.msra.mxu0 %v3585
    %5531 = vmatprep.subr.bf16.mxu0 %v3590
    %5532 = vmatpush1.bf16.msra.mxu0 %v3589
    %5533 = vmatprep.subr.bf16.mxu0 %v3594
    %5534 = vmatpush1.bf16.msra.mxu0 %v3593
    %5535 = vmatprep.subr.bf16.mxu0 %v3598
    %5536 = vmatpush1.bf16.msra.mxu0 %v3597
    %5537 = vmatprep.subr.bf16.mxu0 %v3602
    %5538 = vmatpush1.bf16.msra.mxu0 %v3601
    %5539 = vmatprep.mubr.bf16.mxu0 %v174
    %5540 = vmatmul.mubr.bf16.gmra.mrb[0].mxu0 %v173
    %v5541 = vpop.f32.mrb[0].mxu0
    %v5542 = vadd.f32 %v5499, %v5541
    %v5543 = vpop.f32.mrb[0].mxu0
    %v5544 = vadd.f32 %v5501, %v5543
    %v5545 = vpop.f32.mrb[0].mxu0
    %v5546 = vadd.f32 %v5503, %v5545
    %v5547 = vpop.f32.mrb[0].mxu0
    %v5548 = vadd.f32 %v5505, %v5547
    %5549 = vdwg.mxu0
    %5550 = vmatprep.subr.bf16.mxu0 %v3606
    %5551 = vmatpush1.bf16.msra.mxu0 %v3605
    %5552 = vmatprep.subr.bf16.mxu0 %v3610
    %5553 = vmatpush1.bf16.msra.mxu0 %v3609
    %5554 = vmatprep.subr.bf16.mxu0 %v3614
    %5555 = vmatpush1.bf16.msra.mxu0 %v3613
    %5556 = vmatprep.subr.bf16.mxu0 %v3618
    %5557 = vmatpush1.bf16.msra.mxu0 %v3617
    %5558 = vmatprep.subr.bf16.mxu0 %v3622
    %5559 = vmatpush1.bf16.msra.mxu0 %v3621
    %5560 = vmatprep.subr.bf16.mxu0 %v3626
    %5561 = vmatpush1.bf16.msra.mxu0 %v3625
    %5562 = vmatprep.subr.bf16.mxu0 %v3630
    %5563 = vmatpush1.bf16.msra.mxu0 %v3629
    %5564 = vmatprep.subr.bf16.mxu0 %v3634
    %5565 = vmatpush1.bf16.msra.mxu0 %v3633
    %5566 = vmatprep.subr.bf16.mxu0 %v3638
    %5567 = vmatpush1.bf16.msra.mxu0 %v3637
    %5568 = vmatprep.subr.bf16.mxu0 %v3642
    %5569 = vmatpush1.bf16.msra.mxu0 %v3641
    %5570 = vmatprep.subr.bf16.mxu0 %v3646
    %5571 = vmatpush1.bf16.msra.mxu0 %v3645
    %5572 = vmatprep.subr.bf16.mxu0 %v3650
    %5573 = vmatpush1.bf16.msra.mxu0 %v3649
    %5574 = vmatprep.subr.bf16.mxu0 %v3654
    %5575 = vmatpush1.bf16.msra.mxu0 %v3653
    %5576 = vmatprep.subr.bf16.mxu0 %v3658
    %5577 = vmatpush1.bf16.msra.mxu0 %v3657
    %5578 = vmatprep.subr.bf16.mxu0 %v3662
    %5579 = vmatpush1.bf16.msra.mxu0 %v3661
    %5580 = vmatprep.subr.bf16.mxu0 %v3666
    %5581 = vmatpush1.bf16.msra.mxu0 %v3665
    %5582 = vmatprep.mubr.bf16.mxu0 %v176
    %5583 = vmatmul.mubr.bf16.gmra.mrb[0].mxu0 %v175
    %v5584 = vpop.f32.mrb[0].mxu0
    %v5585 = vadd.f32 %v5542, %v5584
    %v5586 = vpop.f32.mrb[0].mxu0
    %v5587 = vadd.f32 %v5544, %v5586
    %v5588 = vpop.f32.mrb[0].mxu0
    %v5589 = vadd.f32 %v5546, %v5588
    %v5590 = vpop.f32.mrb[0].mxu0
    %v5591 = vadd.f32 %v5548, %v5590
    %5592 = vdwg.mxu0
    %5593 = vmatprep.subr.bf16.mxu0 %v3670
    %5594 = vmatpush1.bf16.msra.mxu0 %v3669
    %5595 = vmatprep.subr.bf16.mxu0 %v3674
    %5596 = vmatpush1.bf16.msra.mxu0 %v3673
    %5597 = vmatprep.subr.bf16.mxu0 %v3678
    %5598 = vmatpush1.bf16.msra.mxu0 %v3677
    %5599 = vmatprep.subr.bf16.mxu0 %v3682
    %5600 = vmatpush1.bf16.msra.mxu0 %v3681
    %5601 = vmatprep.subr.bf16.mxu0 %v3686
    %5602 = vmatpush1.bf16.msra.mxu0 %v3685
    %5603 = vmatprep.subr.bf16.mxu0 %v3690
    %5604 = vmatpush1.bf16.msra.mxu0 %v3689
    %5605 = vmatprep.subr.bf16.mxu0 %v3694
    %5606 = vmatpush1.bf16.msra.mxu0 %v3693
    %5607 = vmatprep.subr.bf16.mxu0 %v3698
    %5608 = vmatpush1.bf16.msra.mxu0 %v3697
    %5609 = vmatprep.subr.bf16.mxu0 %v3702
    %5610 = vmatpush1.bf16.msra.mxu0 %v3701
    %5611 = vmatprep.subr.bf16.mxu0 %v3706
    %5612 = vmatpush1.bf16.msra.mxu0 %v3705
    %5613 = vmatprep.subr.bf16.mxu0 %v3710
    %5614 = vmatpush1.bf16.msra.mxu0 %v3709
    %5615 = vmatprep.subr.bf16.mxu0 %v3714
    %5616 = vmatpush1.bf16.msra.mxu0 %v3713
    %5617 = vmatprep.subr.bf16.mxu0 %v3718
    %5618 = vmatpush1.bf16.msra.mxu0 %v3717
    %5619 = vmatprep.subr.bf16.mxu0 %v3722
    %5620 = vmatpush1.bf16.msra.mxu0 %v3721
    %5621 = vmatprep.subr.bf16.mxu0 %v3726
    %5622 = vmatpush1.bf16.msra.mxu0 %v3725
    %5623 = vmatprep.subr.bf16.mxu0 %v3730
    %5624 = vmatpush1.bf16.msra.mxu0 %v3729
    %5625 = vmatprep.mubr.bf16.mxu0 %v178
    %5626 = vmatmul.mubr.bf16.gmra.mrb[0].mxu0 %v177
    %v5627 = vpop.f32.mrb[0].mxu0
    %v5628 = vadd.f32 %v5585, %v5627
    %v5629 = vpop.f32.mrb[0].mxu0
    %v5630 = vadd.f32 %v5587, %v5629
    %v5631 = vpop.f32.mrb[0].mxu0
    %v5632 = vadd.f32 %v5589, %v5631
    %v5633 = vpop.f32.mrb[0].mxu0
    %v5634 = vadd.f32 %v5591, %v5633
    %5635 = vdwg.mxu0
    %5636 = vmatprep.subr.bf16.mxu0 %v3734
    %5637 = vmatpush1.bf16.msra.mxu0 %v3733
    %5638 = vmatprep.subr.bf16.mxu0 %v3738
    %5639 = vmatpush1.bf16.msra.mxu0 %v3737
    %5640 = vmatprep.subr.bf16.mxu0 %v3742
    %5641 = vmatpush1.bf16.msra.mxu0 %v3741
    %5642 = vmatprep.subr.bf16.mxu0 %v3746
    %5643 = vmatpush1.bf16.msra.mxu0 %v3745
    %5644 = vmatprep.subr.bf16.mxu0 %v3750
    %5645 = vmatpush1.bf16.msra.mxu0 %v3749
    %5646 = vmatprep.subr.bf16.mxu0 %v3754
    %5647 = vmatpush1.bf16.msra.mxu0 %v3753
    %5648 = vmatprep.subr.bf16.mxu0 %v3758
    %5649 = vmatpush1.bf16.msra.mxu0 %v3757
    %5650 = vmatprep.subr.bf16.mxu0 %v3762
    %5651 = vmatpush1.bf16.msra.mxu0 %v3761
    %5652 = vmatprep.subr.bf16.mxu0 %v3766
    %5653 = vmatpush1.bf16.msra.mxu0 %v3765
    %5654 = vmatprep.subr.bf16.mxu0 %v3770
    %5655 = vmatpush1.bf16.msra.mxu0 %v3769
    %5656 = vmatprep.subr.bf16.mxu0 %v3774
    %5657 = vmatpush1.bf16.msra.mxu0 %v3773
    %5658 = vmatprep.subr.bf16.mxu0 %v3778
    %5659 = vmatpush1.bf16.msra.mxu0 %v3777
    %5660 = vmatprep.subr.bf16.mxu0 %v3782
    %5661 = vmatpush1.bf16.msra.mxu0 %v3781
    %5662 = vmatprep.subr.bf16.mxu0 %v3786
    %5663 = vmatpush1.bf16.msra.mxu0 %v3785
    %5664 = vmatprep.subr.bf16.mxu0 %v3790
    %5665 = vmatpush1.bf16.msra.mxu0 %v3789
    %5666 = vmatprep.subr.bf16.mxu0 %v3794
    %5667 = vmatpush1.bf16.msra.mxu0 %v3793
    %5668 = vmatprep.mubr.bf16.mxu0 %v180
    %5669 = vmatmul.mubr.bf16.gmra.mrb[0].mxu0 %v179
    %v5670 = vpop.f32.mrb[0].mxu0
    %v5671 = vadd.f32 %v5628, %v5670
    %v5672 = vpop.f32.mrb[0].mxu0
    %v5673 = vadd.f32 %v5630, %v5672
    %v5674 = vpop.f32.mrb[0].mxu0
    %v5675 = vadd.f32 %v5632, %v5674
    %v5676 = vpop.f32.mrb[0].mxu0
    %v5677 = vadd.f32 %v5634, %v5676
    %5678 = vdwg.mxu0
    %5679 = vmatprep.subr.bf16.mxu0 %v3798
    %5680 = vmatpush1.bf16.msra.mxu0 %v3797
    %5681 = vmatprep.subr.bf16.mxu0 %v3802
    %5682 = vmatpush1.bf16.msra.mxu0 %v3801
    %5683 = vmatprep.subr.bf16.mxu0 %v3806
    %5684 = vmatpush1.bf16.msra.mxu0 %v3805
    %5685 = vmatprep.subr.bf16.mxu0 %v3810
    %5686 = vmatpush1.bf16.msra.mxu0 %v3809
    %5687 = vmatprep.subr.bf16.mxu0 %v3814
    %5688 = vmatpush1.bf16.msra.mxu0 %v3813
    %5689 = vmatprep.subr.bf16.mxu0 %v3818
    %5690 = vmatpush1.bf16.msra.mxu0 %v3817
    %5691 = vmatprep.subr.bf16.mxu0 %v3822
    %5692 = vmatpush1.bf16.msra.mxu0 %v3821
    %5693 = vmatprep.subr.bf16.mxu0 %v3826
    %5694 = vmatpush1.bf16.msra.mxu0 %v3825
    %5695 = vmatprep.subr.bf16.mxu0 %v3830
    %5696 = vmatpush1.bf16.msra.mxu0 %v3829
    %5697 = vmatprep.subr.bf16.mxu0 %v3834
    %5698 = vmatpush1.bf16.msra.mxu0 %v3833
    %5699 = vmatprep.subr.bf16.mxu0 %v3838
    %5700 = vmatpush1.bf16.msra.mxu0 %v3837
    %5701 = vmatprep.subr.bf16.mxu0 %v3842
    %5702 = vmatpush1.bf16.msra.mxu0 %v3841
    %5703 = vmatprep.subr.bf16.mxu0 %v3846
    %5704 = vmatpush1.bf16.msra.mxu0 %v3845
    %5705 = vmatprep.subr.bf16.mxu0 %v3850
    %5706 = vmatpush1.bf16.msra.mxu0 %v3849
    %5707 = vmatprep.subr.bf16.mxu0 %v3854
    %5708 = vmatpush1.bf16.msra.mxu0 %v3853
    %5709 = vmatprep.subr.bf16.mxu0 %v3858
    %5710 = vmatpush1.bf16.msra.mxu0 %v3857
    %5711 = vmatprep.mubr.bf16.mxu0 %v182
    %5712 = vmatmul.mubr.bf16.gmra.mrb[0].mxu0 %v181
    %v5713 = vpop.f32.mrb[0].mxu0
    %v5714 = vadd.f32 %v5671, %v5713
    %v5715 = vpop.f32.mrb[0].mxu0
    %v5716 = vadd.f32 %v5673, %v5715
    %v5717 = vpop.f32.mrb[0].mxu0
    %v5718 = vadd.f32 %v5675, %v5717
    %v5719 = vpop.f32.mrb[0].mxu0
    %v5720 = vadd.f32 %v5677, %v5719
    %5721 = vdwg.mxu0
    %5722 = vmatprep.subr.bf16.mxu0 %v3862
    %5723 = vmatpush1.bf16.msra.mxu0 %v3861
    %5724 = vmatprep.subr.bf16.mxu0 %v3866
    %5725 = vmatpush1.bf16.msra.mxu0 %v3865
    %5726 = vmatprep.subr.bf16.mxu0 %v3870
    %5727 = vmatpush1.bf16.msra.mxu0 %v3869
    %5728 = vmatprep.subr.bf16.mxu0 %v3874
    %5729 = vmatpush1.bf16.msra.mxu0 %v3873
    %5730 = vmatprep.subr.bf16.mxu0 %v3878
    %5731 = vmatpush1.bf16.msra.mxu0 %v3877
    %5732 = vmatprep.subr.bf16.mxu0 %v3882
    %5733 = vmatpush1.bf16.msra.mxu0 %v3881
    %5734 = vmatprep.subr.bf16.mxu0 %v3886
    %5735 = vmatpush1.bf16.msra.mxu0 %v3885
    %5736 = vmatprep.subr.bf16.mxu0 %v3890
    %5737 = vmatpush1.bf16.msra.mxu0 %v3889
    %5738 = vmatprep.subr.bf16.mxu0 %v3894
    %5739 = vmatpush1.bf16.msra.mxu0 %v3893
    %5740 = vmatprep.subr.bf16.mxu0 %v3898
    %5741 = vmatpush1.bf16.msra.mxu0 %v3897
    %5742 = vmatprep.subr.bf16.mxu0 %v3902
    %5743 = vmatpush1.bf16.msra.mxu0 %v3901
    %5744 = vmatprep.subr.bf16.mxu0 %v3906
    %5745 = vmatpush1.bf16.msra.mxu0 %v3905
    %5746 = vmatprep.subr.bf16.mxu0 %v3910
    %5747 = vmatpush1.bf16.msra.mxu0 %v3909
    %5748 = vmatprep.subr.bf16.mxu0 %v3914
    %5749 = vmatpush1.bf16.msra.mxu0 %v3913
    %5750 = vmatprep.subr.bf16.mxu0 %v3918
    %5751 = vmatpush1.bf16.msra.mxu0 %v3917
    %5752 = vmatprep.subr.bf16.mxu0 %v3922
    %5753 = vmatpush1.bf16.msra.mxu0 %v3921
    %5754 = vmatprep.mubr.bf16.mxu0 %v184
    %5755 = vmatmul.mubr.bf16.gmra.mrb[0].mxu0 %v183
    %v5756 = vpop.f32.mrb[0].mxu0
    %v5757 = vadd.f32 %v5714, %v5756
    %v5758 = vpop.f32.mrb[0].mxu0
    %v5759 = vadd.f32 %v5716, %v5758
    %v5760 = vpop.f32.mrb[0].mxu0
    %v5761 = vadd.f32 %v5718, %v5760
    %v5762 = vpop.f32.mrb[0].mxu0
    %v5763 = vadd.f32 %v5720, %v5762
    %5764 = vdwg.mxu0
    %5765 = vmatprep.subr.bf16.mxu0 %v3926
    %5766 = vmatpush1.bf16.msra.mxu0 %v3925
    %5767 = vmatprep.subr.bf16.mxu0 %v3930
    %5768 = vmatpush1.bf16.msra.mxu0 %v3929
    %5769 = vmatprep.subr.bf16.mxu0 %v3934
    %5770 = vmatpush1.bf16.msra.mxu0 %v3933
    %5771 = vmatprep.subr.bf16.mxu0 %v3938
    %5772 = vmatpush1.bf16.msra.mxu0 %v3937
    %5773 = vmatprep.subr.bf16.mxu0 %v3942
    %5774 = vmatpush1.bf16.msra.mxu0 %v3941
    %5775 = vmatprep.subr.bf16.mxu0 %v3946
    %5776 = vmatpush1.bf16.msra.mxu0 %v3945
    %5777 = vmatprep.subr.bf16.mxu0 %v3950
    %5778 = vmatpush1.bf16.msra.mxu0 %v3949
    %5779 = vmatprep.subr.bf16.mxu0 %v3954
    %5780 = vmatpush1.bf16.msra.mxu0 %v3953
    %5781 = vmatprep.subr.bf16.mxu0 %v3958
    %5782 = vmatpush1.bf16.msra.mxu0 %v3957
    %5783 = vmatprep.subr.bf16.mxu0 %v3962
    %5784 = vmatpush1.bf16.msra.mxu0 %v3961
    %5785 = vmatprep.subr.bf16.mxu0 %v3966
    %5786 = vmatpush1.bf16.msra.mxu0 %v3965
    %5787 = vmatprep.subr.bf16.mxu0 %v3970
    %5788 = vmatpush1.bf16.msra.mxu0 %v3969
    %5789 = vmatprep.subr.bf16.mxu0 %v3974
    %5790 = vmatpush1.bf16.msra.mxu0 %v3973
    %5791 = vmatprep.subr.bf16.mxu0 %v3978
    %5792 = vmatpush1.bf16.msra.mxu0 %v3977
    %5793 = vmatprep.subr.bf16.mxu0 %v3982
    %5794 = vmatpush1.bf16.msra.mxu0 %v3981
    %5795 = vmatprep.subr.bf16.mxu0 %v3986
    %5796 = vmatpush1.bf16.msra.mxu0 %v3985
    %5797 = vmatprep.mubr.bf16.mxu0 %v186
    %5798 = vmatmul.mubr.bf16.gmra.mrb[0].mxu0 %v185
    %v5799 = vpop.f32.mrb[0].mxu0
    %v5800 = vadd.f32 %v5757, %v5799
    %v5801 = vpop.f32.mrb[0].mxu0
    %v5802 = vadd.f32 %v5759, %v5801
    %v5803 = vpop.f32.mrb[0].mxu0
    %v5804 = vadd.f32 %v5761, %v5803
    %v5805 = vpop.f32.mrb[0].mxu0
    %v5806 = vadd.f32 %v5763, %v5805
    %5807 = vdwg.mxu0
    %5808 = vmatprep.subr.bf16.mxu0 %v3990
    %5809 = vmatpush1.bf16.msra.mxu0 %v3989
    %5810 = vmatprep.subr.bf16.mxu0 %v3994
    %5811 = vmatpush1.bf16.msra.mxu0 %v3993
    %5812 = vmatprep.subr.bf16.mxu0 %v3998
    %5813 = vmatpush1.bf16.msra.mxu0 %v3997
    %5814 = vmatprep.subr.bf16.mxu0 %v4002
    %5815 = vmatpush1.bf16.msra.mxu0 %v4001
    %5816 = vmatprep.subr.bf16.mxu0 %v4006
    %5817 = vmatpush1.bf16.msra.mxu0 %v4005
    %5818 = vmatprep.subr.bf16.mxu0 %v4010
    %5819 = vmatpush1.bf16.msra.mxu0 %v4009
    %5820 = vmatprep.subr.bf16.mxu0 %v4014
    %5821 = vmatpush1.bf16.msra.mxu0 %v4013
    %5822 = vmatprep.subr.bf16.mxu0 %v4018
    %5823 = vmatpush1.bf16.msra.mxu0 %v4017
    %5824 = vmatprep.subr.bf16.mxu0 %v4022
    %5825 = vmatpush1.bf16.msra.mxu0 %v4021
    %5826 = vmatprep.subr.bf16.mxu0 %v4026
    %5827 = vmatpush1.bf16.msra.mxu0 %v4025
    %5828 = vmatprep.subr.bf16.mxu0 %v4030
    %5829 = vmatpush1.bf16.msra.mxu0 %v4029
    %5830 = vmatprep.subr.bf16.mxu0 %v4034
    %5831 = vmatpush1.bf16.msra.mxu0 %v4033
    %5832 = vmatprep.subr.bf16.mxu0 %v4038
    %5833 = vmatpush1.bf16.msra.mxu0 %v4037
    %5834 = vmatprep.subr.bf16.mxu0 %v4042
    %5835 = vmatpush1.bf16.msra.mxu0 %v4041
    %5836 = vmatprep.subr.bf16.mxu0 %v4046
    %5837 = vmatpush1.bf16.msra.mxu0 %v4045
    %5838 = vmatprep.subr.bf16.mxu0 %v4050
    %5839 = vmatpush1.bf16.msra.mxu0 %v4049
    %5840 = vmatprep.mubr.bf16.mxu0 %v188
    %5841 = vmatmul.mubr.bf16.gmra.mrb[0].mxu0 %v187
    %v5842 = vpop.f32.mrb[0].mxu0
    %v5843 = vadd.f32 %v5800, %v5842
    %v5844 = vpop.f32.mrb[0].mxu0
    %v5845 = vadd.f32 %v5802, %v5844
    %v5846 = vpop.f32.mrb[0].mxu0
    %v5847 = vadd.f32 %v5804, %v5846
    %v5848 = vpop.f32.mrb[0].mxu0
    %v5849 = vadd.f32 %v5806, %v5848
    %5850 = vdwg.mxu0
    %v5851 = vmax.f32 %v5327, 0.0
    %v5852 = vmax.f32 %v5329, 0.0
    %v5853 = vmax.f32 %v5843, 0.0
    %v5854 = vmax.f32 %v5845, 0.0
    %v5855 = vmax.f32 %v5331, 0.0
    %v5856 = vmax.f32 %v5333, 0.0
    %v5857 = vmax.f32 %v5847, 0.0
    %v5858 = vmax.f32 %v5849, 0.0
    %v5859 = vpack.c.bf16 %v5855, %v5851
    %v5860 = vpack.c.bf16 %v5856, %v5852
    %v5861 = vpack.c.bf16 %v5857, %v5853
    %v5862 = vpack.c.bf16 %v5858, %v5854
    %v5863 = vld [vmem:[#allocation8] sm:$0xf]
    %v5864 = vld [vmem:[#allocation8 + $0x4] sm:$0xf]
    %v5865 = vld [vmem:[#allocation8 + $0x8] sm:$0xf]
    %v5866 = vld [vmem:[#allocation8 + $0xc] sm:$0xf]
    %v5867 = vld [vmem:[#allocation8 + $0x10] sm:$0xf]
    %v5868 = vld [vmem:[#allocation8 + $0x14] sm:$0xf]
    %v5869 = vld [vmem:[#allocation8 + $0x18] sm:$0xf]
    %v5870 = vld [vmem:[#allocation8 + $0x1c] sm:$0xf]
    %v5871 = vld [vmem:[#allocation8 + $0x20] sm:$0xf]
    %v5872 = vld [vmem:[#allocation8 + $0x24] sm:$0xf]
    %v5873 = vld [vmem:[#allocation8 + $0x28] sm:$0xf]
    %v5874 = vld [vmem:[#allocation8 + $0x2c] sm:$0xf]
    %v5875 = vld [vmem:[#allocation8 + $0x30] sm:$0xf]
    %v5876 = vld [vmem:[#allocation8 + $0x34] sm:$0xf]
    %v5877 = vld [vmem:[#allocation8 + $0x38] sm:$0xf]
    %v5878 = vld [vmem:[#allocation8 + $0x3c] sm:$0xf]
    %v5879 = vld [vmem:[#allocation8 + $0x40] sm:$0xf]
    %v5880 = vld [vmem:[#allocation8 + $0x44] sm:$0xf]
    %v5881 = vld [vmem:[#allocation8 + $0x48] sm:$0xf]
    %v5882 = vld [vmem:[#allocation8 + $0x4c] sm:$0xf]
    %v5883 = vld [vmem:[#allocation8 + $0x50] sm:$0xf]
    %v5884 = vld [vmem:[#allocation8 + $0x54] sm:$0xf]
    %v5885 = vld [vmem:[#allocation8 + $0x58] sm:$0xf]
    %v5886 = vld [vmem:[#allocation8 + $0x5c] sm:$0xf]
    %v5887 = vld [vmem:[#allocation8 + $0x60] sm:$0xf]
    %v5888 = vld [vmem:[#allocation8 + $0x64] sm:$0xf]
    %v5889 = vld [vmem:[#allocation8 + $0x68] sm:$0xf]
    %v5890 = vld [vmem:[#allocation8 + $0x6c] sm:$0xf]
    %v5891 = vld [vmem:[#allocation8 + $0x70] sm:$0xf]
    %v5892 = vld [vmem:[#allocation8 + $0x74] sm:$0xf]
    %v5893 = vld [vmem:[#allocation8 + $0x78] sm:$0xf]
    %v5894 = vld [vmem:[#allocation8 + $0x7c] sm:$0xf]
    %v5895 = vld [vmem:[#allocation8 + $0x80] sm:$0xf]
    %v5896 = vld [vmem:[#allocation8 + $0x84] sm:$0xf]
    %v5897 = vld [vmem:[#allocation8 + $0x88] sm:$0xf]
    %v5898 = vld [vmem:[#allocation8 + $0x8c] sm:$0xf]
    %v5899 = vld [vmem:[#allocation8 + $0x90] sm:$0xf]
    %v5900 = vld [vmem:[#allocation8 + $0x94] sm:$0xf]
    %v5901 = vld [vmem:[#allocation8 + $0x98] sm:$0xf]
    %v5902 = vld [vmem:[#allocation8 + $0x9c] sm:$0xf]
    %v5903 = vld [vmem:[#allocation8 + $0xa0] sm:$0xf]
    %v5904 = vld [vmem:[#allocation8 + $0xa4] sm:$0xf]
    %v5905 = vld [vmem:[#allocation8 + $0xa8] sm:$0xf]
    %v5906 = vld [vmem:[#allocation8 + $0xac] sm:$0xf]
    %v5907 = vld [vmem:[#allocation8 + $0xb0] sm:$0xf]
    %v5908 = vld [vmem:[#allocation8 + $0xb4] sm:$0xf]
    %v5909 = vld [vmem:[#allocation8 + $0xb8] sm:$0xf]
    %v5910 = vld [vmem:[#allocation8 + $0xbc] sm:$0xf]
    %v5911 = vld [vmem:[#allocation8 + $0xc0] sm:$0xf]
    %v5912 = vld [vmem:[#allocation8 + $0xc4] sm:$0xf]
    %v5913 = vld [vmem:[#allocation8 + $0xc8] sm:$0xf]
    %v5914 = vld [vmem:[#allocation8 + $0xcc] sm:$0xf]
    %v5915 = vld [vmem:[#allocation8 + $0xd0] sm:$0xf]
    %v5916 = vld [vmem:[#allocation8 + $0xd4] sm:$0xf]
    %v5917 = vld [vmem:[#allocation8 + $0xd8] sm:$0xf]
    %v5918 = vld [vmem:[#allocation8 + $0xdc] sm:$0xf]
    %v5919 = vld [vmem:[#allocation8 + $0xe0] sm:$0xf]
    %v5920 = vld [vmem:[#allocation8 + $0xe4] sm:$0xf]
    %v5921 = vld [vmem:[#allocation8 + $0xe8] sm:$0xf]
    %v5922 = vld [vmem:[#allocation8 + $0xec] sm:$0xf]
    %v5923 = vld [vmem:[#allocation8 + $0xf0] sm:$0xf]
    %v5924 = vld [vmem:[#allocation8 + $0xf4] sm:$0xf]
    %v5925 = vld [vmem:[#allocation8 + $0xf8] sm:$0xf]
    %v5926 = vld [vmem:[#allocation8 + $0xfc] sm:$0xf]
    %v5927 = vld [vmem:[#allocation10] sm:$0x1]
    %v5929 = vlaneseq
    %v5930 = vshrl.u32 %v5929, 7
    %v5931 = vsub.s32 0, %v5930
    %v5932 = vrot.slane %v5927, %v5931
    %v5998 = vunpack.c.l.b16 %v5863
    %v5999 = vunpack.c.l.b16 %v5864
    %v6000 = vunpack.c.l.b16 %v5865
    %v6001 = vunpack.c.l.b16 %v5866
    %v6002 = vunpack.c.l.b16 %v5867
    %v6003 = vunpack.c.l.b16 %v5868
    %v6004 = vunpack.c.l.b16 %v5869
    %v6005 = vunpack.c.l.b16 %v5870
    %v6006 = vunpack.c.l.b16 %v5871
    %v6007 = vunpack.c.l.b16 %v5872
    %v6008 = vunpack.c.l.b16 %v5873
    %v6009 = vunpack.c.l.b16 %v5874
    %v6010 = vunpack.c.l.b16 %v5875
    %v6011 = vunpack.c.l.b16 %v5876
    %v6012 = vunpack.c.l.b16 %v5877
    %v6013 = vunpack.c.l.b16 %v5878
    %v6014 = vunpack.c.l.b16 %v5879
    %v6015 = vunpack.c.l.b16 %v5880
    %v6016 = vunpack.c.l.b16 %v5881
    %v6017 = vunpack.c.l.b16 %v5882
    %v6018 = vunpack.c.l.b16 %v5883
    %v6019 = vunpack.c.l.b16 %v5884
    %v6020 = vunpack.c.l.b16 %v5885
    %v6021 = vunpack.c.l.b16 %v5886
    %v6022 = vunpack.c.l.b16 %v5887
    %v6023 = vunpack.c.l.b16 %v5888
    %v6024 = vunpack.c.l.b16 %v5889
    %v6025 = vunpack.c.l.b16 %v5890
    %v6026 = vunpack.c.l.b16 %v5891
    %v6027 = vunpack.c.l.b16 %v5892
    %v6028 = vunpack.c.l.b16 %v5893
    %v6029 = vunpack.c.l.b16 %v5894
    %v6030 = vunpack.c.l.b16 %v5895
    %v6031 = vunpack.c.l.b16 %v5896
    %v6032 = vunpack.c.l.b16 %v5897
    %v6033 = vunpack.c.l.b16 %v5898
    %v6034 = vunpack.c.l.b16 %v5899
    %v6035 = vunpack.c.l.b16 %v5900
    %v6036 = vunpack.c.l.b16 %v5901
    %v6037 = vunpack.c.l.b16 %v5902
    %v6038 = vunpack.c.l.b16 %v5903
    %v6039 = vunpack.c.l.b16 %v5904
    %v6040 = vunpack.c.l.b16 %v5905
    %v6041 = vunpack.c.l.b16 %v5906
    %v6042 = vunpack.c.l.b16 %v5907
    %v6043 = vunpack.c.l.b16 %v5908
    %v6044 = vunpack.c.l.b16 %v5909
    %v6045 = vunpack.c.l.b16 %v5910
    %v6046 = vunpack.c.l.b16 %v5911
    %v6047 = vunpack.c.l.b16 %v5912
    %v6048 = vunpack.c.l.b16 %v5913
    %v6049 = vunpack.c.l.b16 %v5914
    %v6050 = vunpack.c.l.b16 %v5915
    %v6051 = vunpack.c.l.b16 %v5916
    %v6052 = vunpack.c.l.b16 %v5917
    %v6053 = vunpack.c.l.b16 %v5918
    %v6054 = vunpack.c.l.b16 %v5919
    %v6055 = vunpack.c.l.b16 %v5920
    %v6056 = vunpack.c.l.b16 %v5921
    %v6057 = vunpack.c.l.b16 %v5922
    %v6058 = vunpack.c.l.b16 %v5923
    %v6059 = vunpack.c.l.b16 %v5924
    %v6060 = vunpack.c.l.b16 %v5925
    %v6061 = vunpack.c.l.b16 %v5926
    %v6062 = vpack.c.b16 %v5999, %v5998
    %v6063 = vpack.c.b16 %v6001, %v6000
    %v6064 = vpack.c.b16 %v6003, %v6002
    %v6065 = vpack.c.b16 %v6005, %v6004
    %v6066 = vpack.c.b16 %v6007, %v6006
    %v6067 = vpack.c.b16 %v6009, %v6008
    %v6068 = vpack.c.b16 %v6011, %v6010
    %v6069 = vpack.c.b16 %v6013, %v6012
    %v6070 = vpack.c.b16 %v6015, %v6014
    %v6071 = vpack.c.b16 %v6017, %v6016
    %v6072 = vpack.c.b16 %v6019, %v6018
    %v6073 = vpack.c.b16 %v6021, %v6020
    %v6074 = vpack.c.b16 %v6023, %v6022
    %v6075 = vpack.c.b16 %v6025, %v6024
    %v6076 = vpack.c.b16 %v6027, %v6026
    %v6077 = vpack.c.b16 %v6029, %v6028
    %v6078 = vpack.c.b16 %v6031, %v6030
    %v6079 = vpack.c.b16 %v6033, %v6032
    %v6080 = vpack.c.b16 %v6035, %v6034
    %v6081 = vpack.c.b16 %v6037, %v6036
    %v6082 = vpack.c.b16 %v6039, %v6038
    %v6083 = vpack.c.b16 %v6041, %v6040
    %v6084 = vpack.c.b16 %v6043, %v6042
    %v6085 = vpack.c.b16 %v6045, %v6044
    %v6086 = vpack.c.b16 %v6047, %v6046
    %v6087 = vpack.c.b16 %v6049, %v6048
    %v6088 = vpack.c.b16 %v6051, %v6050
    %v6089 = vpack.c.b16 %v6053, %v6052
    %v6090 = vpack.c.b16 %v6055, %v6054
    %v6091 = vpack.c.b16 %v6057, %v6056
    %v6092 = vpack.c.b16 %v6059, %v6058
    %v6093 = vpack.c.b16 %v6061, %v6060
    %6126 = vmatprep.subr.bf16.mxu0 0
    %6127 = vmatpush1.bf16.msra.mxu0 %v6062
    %6128 = vmatprep.subr.bf16.mxu0 0
    %6129 = vmatpush1.bf16.msra.mxu0 %v6063
    %6130 = vmatprep.subr.bf16.mxu0 0
    %6131 = vmatpush1.bf16.msra.mxu0 %v6064
    %6132 = vmatprep.subr.bf16.mxu0 0
    %6133 = vmatpush1.bf16.msra.mxu0 %v6065
    %6134 = vmatprep.subr.bf16.mxu0 0
    %6135 = vmatpush1.bf16.msra.mxu0 %v6066
    %6136 = vmatprep.subr.bf16.mxu0 0
    %6137 = vmatpush1.bf16.msra.mxu0 %v6067
    %6138 = vmatprep.subr.bf16.mxu0 0
    %6139 = vmatpush1.bf16.msra.mxu0 %v6068
    %6140 = vmatprep.subr.bf16.mxu0 0
    %6141 = vmatpush1.bf16.msra.mxu0 %v6069
    %6142 = vmatprep.subr.bf16.mxu0 0
    %6143 = vmatpush1.bf16.msra.mxu0 %v6070
    %6144 = vmatprep.subr.bf16.mxu0 0
    %6145 = vmatpush1.bf16.msra.mxu0 %v6071
    %6146 = vmatprep.subr.bf16.mxu0 0
    %6147 = vmatpush1.bf16.msra.mxu0 %v6072
    %6148 = vmatprep.subr.bf16.mxu0 0
    %6149 = vmatpush1.bf16.msra.mxu0 %v6073
    %6150 = vmatprep.subr.bf16.mxu0 0
    %6151 = vmatpush1.bf16.msra.mxu0 %v6074
    %6152 = vmatprep.subr.bf16.mxu0 0
    %6153 = vmatpush1.bf16.msra.mxu0 %v6075
    %6154 = vmatprep.subr.bf16.mxu0 0
    %6155 = vmatpush1.bf16.msra.mxu0 %v6076
    %6156 = vmatprep.subr.bf16.mxu0 0
    %6157 = vmatpush1.bf16.msra.mxu0 %v6077
    %6158 = vmatprep.mubr.bf16.mxu0 %v5860
    %6159 = vmatmul.mubr.bf16.gmra.mrb[0].mxu0 %v5859
    %v6160 = vpop.f32.mrb[0].mxu0
    %v6161 = vadd.f32 %v5932, %v6160
    %v6162 = vpop.f32.mrb[0].mxu0
    %v6163 = vpop.f32.mrb[0].mxu0
    %v6164 = vadd.f32 %v5932, %v6163
    %v6165 = vpop.f32.mrb[0].mxu0
    %6166 = vdwg.mxu0
    %6167 = vmatprep.subr.bf16.mxu0 0
    %6168 = vmatpush1.bf16.msra.mxu0 %v6078
    %6169 = vmatprep.subr.bf16.mxu0 0
    %6170 = vmatpush1.bf16.msra.mxu0 %v6079
    %6171 = vmatprep.subr.bf16.mxu0 0
    %6172 = vmatpush1.bf16.msra.mxu0 %v6080
    %6173 = vmatprep.subr.bf16.mxu0 0
    %6174 = vmatpush1.bf16.msra.mxu0 %v6081
    %6175 = vmatprep.subr.bf16.mxu0 0
    %6176 = vmatpush1.bf16.msra.mxu0 %v6082
    %6177 = vmatprep.subr.bf16.mxu0 0
    %6178 = vmatpush1.bf16.msra.mxu0 %v6083
    %6179 = vmatprep.subr.bf16.mxu0 0
    %6180 = vmatpush1.bf16.msra.mxu0 %v6084
    %6181 = vmatprep.subr.bf16.mxu0 0
    %6182 = vmatpush1.bf16.msra.mxu0 %v6085
    %6183 = vmatprep.subr.bf16.mxu0 0
    %6184 = vmatpush1.bf16.msra.mxu0 %v6086
    %6185 = vmatprep.subr.bf16.mxu0 0
    %6186 = vmatpush1.bf16.msra.mxu0 %v6087
    %6187 = vmatprep.subr.bf16.mxu0 0
    %6188 = vmatpush1.bf16.msra.mxu0 %v6088
    %6189 = vmatprep.subr.bf16.mxu0 0
    %6190 = vmatpush1.bf16.msra.mxu0 %v6089
    %6191 = vmatprep.subr.bf16.mxu0 0
    %6192 = vmatpush1.bf16.msra.mxu0 %v6090
    %6193 = vmatprep.subr.bf16.mxu0 0
    %6194 = vmatpush1.bf16.msra.mxu0 %v6091
    %6195 = vmatprep.subr.bf16.mxu0 0
    %6196 = vmatpush1.bf16.msra.mxu0 %v6092
    %6197 = vmatprep.subr.bf16.mxu0 0
    %6198 = vmatpush1.bf16.msra.mxu0 %v6093
    %6199 = vmatprep.mubr.bf16.mxu0 %v5862
    %6200 = vmatmul.mubr.bf16.gmra.mrb[0].mxu0 %v5861
    %v6201 = vpop.f32.mrb[0].mxu0
    %v6202 = vadd.f32 %v6161, %v6201
    %v6203 = vpop.f32.mrb[0].mxu0
    %v6204 = vpop.f32.mrb[0].mxu0
    %v6205 = vadd.f32 %v6164, %v6204
    %v6206 = vpop.f32.mrb[0].mxu0
    %6207 = vdwg.mxu0
    %v6208 = vmax.f32 %v6202, 0.0
    %v6209 = vmax.f32 %v6205, 0.0
    %v6210 = vpack.c.bf16 %v6209, %v6208
    %v6211 = vld [vmem:[#allocation11] sm:$0xf]
    %v6212 = vld [vmem:[#allocation11 + $0x4] sm:$0xf]
    %v6213 = vld [vmem:[#allocation11 + $0x8] sm:$0xf]
    %v6214 = vld [vmem:[#allocation11 + $0xc] sm:$0xf]
    %v6215 = vld [vmem:[#allocation11 + $0x10] sm:$0xf]
    %v6216 = vld [vmem:[#allocation11 + $0x14] sm:$0xf]
    %v6217 = vld [vmem:[#allocation11 + $0x18] sm:$0xf]
    %v6218 = vld [vmem:[#allocation11 + $0x1c] sm:$0xf]
    %v6219 = vld [vmem:[#allocation11 + $0x20] sm:$0xf]
    %v6220 = vld [vmem:[#allocation11 + $0x24] sm:$0xf]
    %v6221 = vld [vmem:[#allocation11 + $0x28] sm:$0xf]
    %v6222 = vld [vmem:[#allocation11 + $0x2c] sm:$0xf]
    %v6223 = vld [vmem:[#allocation11 + $0x30] sm:$0xf]
    %v6224 = vld [vmem:[#allocation11 + $0x34] sm:$0xf]
    %v6225 = vld [vmem:[#allocation11 + $0x38] sm:$0xf]
    %v6226 = vld [vmem:[#allocation11 + $0x3c] sm:$0xf]
    %v6227 = vld [vmem:[#allocation13] sm:$0x1]
    %v6229 = vlaneseq
    %v6230 = vshrl.u32 %v6229, 7
    %v6231 = vsub.s32 0, %v6230
    %v6232 = vrot.slane %v6227, %v6231
    %v6250 = vunpack.c.l.b16 %v6211
    %v6251 = vunpack.c.l.b16 %v6212
    %v6252 = vunpack.c.l.b16 %v6213
    %v6253 = vunpack.c.l.b16 %v6214
    %v6254 = vunpack.c.l.b16 %v6215
    %v6255 = vunpack.c.l.b16 %v6216
    %v6256 = vunpack.c.l.b16 %v6217
    %v6257 = vunpack.c.l.b16 %v6218
    %v6258 = vunpack.c.l.b16 %v6219
    %v6259 = vunpack.c.l.b16 %v6220
    %v6260 = vunpack.c.l.b16 %v6221
    %v6261 = vunpack.c.l.b16 %v6222
    %v6262 = vunpack.c.l.b16 %v6223
    %v6263 = vunpack.c.l.b16 %v6224
    %v6264 = vunpack.c.l.b16 %v6225
    %v6265 = vunpack.c.l.b16 %v6226
    %v6266 = vpack.c.b16 %v6251, %v6250
    %v6267 = vpack.c.b16 %v6253, %v6252
    %v6268 = vpack.c.b16 %v6255, %v6254
    %v6269 = vpack.c.b16 %v6257, %v6256
    %v6270 = vpack.c.b16 %v6259, %v6258
    %v6271 = vpack.c.b16 %v6261, %v6260
    %v6272 = vpack.c.b16 %v6263, %v6262
    %v6273 = vpack.c.b16 %v6265, %v6264
    %6282 = vmatprep.subr.bf16.mxu0 0
    %6283 = vmatpush1.bf16.msra.mxu0 %v6266
    %6284 = vmatprep.subr.bf16.mxu0 0
    %6285 = vmatpush1.bf16.msra.mxu0 %v6267
    %6286 = vmatprep.subr.bf16.mxu0 0
    %6287 = vmatpush1.bf16.msra.mxu0 %v6268
    %6288 = vmatprep.subr.bf16.mxu0 0
    %6289 = vmatpush1.bf16.msra.mxu0 %v6269
    %6290 = vmatprep.subr.bf16.mxu0 0
    %6291 = vmatpush1.bf16.msra.mxu0 %v6270
    %6292 = vmatprep.subr.bf16.mxu0 0
    %6293 = vmatpush1.bf16.msra.mxu0 %v6271
    %6294 = vmatprep.subr.bf16.mxu0 0
    %6295 = vmatpush1.bf16.msra.mxu0 %v6272
    %6296 = vmatprep.subr.bf16.mxu0 0
    %6297 = vmatpush1.bf16.msra.mxu0 %v6273
    %6298 = vmatprep.subr.bf16.mxu0 0
    %6299 = vmatpush1.bf16.msra.mxu0 0
    %6300 = vmatprep.subr.bf16.mxu0 0
    %6301 = vmatpush1.bf16.msra.mxu0 0
    %6302 = vmatprep.subr.bf16.mxu0 0
    %6303 = vmatpush1.bf16.msra.mxu0 0
    %6304 = vmatprep.subr.bf16.mxu0 0
    %6305 = vmatpush1.bf16.msra.mxu0 0
    %6306 = vmatprep.subr.bf16.mxu0 0
    %6307 = vmatpush1.bf16.msra.mxu0 0
    %6308 = vmatprep.subr.bf16.mxu0 0
    %6309 = vmatpush1.bf16.msra.mxu0 0
    %6310 = vmatprep.subr.bf16.mxu0 0
    %6311 = vmatpush1.bf16.msra.mxu0 0
    %6312 = vmatprep.subr.bf16.mxu0 0
    %6313 = vmatpush1.bf16.msra.mxu0 0
    %6314 = vmatprep.mubr.bf16.mxu0 0
    %6315 = vmatmul.mubr.bf16.gmra.mrb[0].mxu0 %v6210
    %v6316 = vpop.f32.mrb[0].mxu0
    %v6317 = vadd.f32 %v6232, %v6316
    %v6318 = vpop.f32.mrb[0].mxu0
    %v6319 = vpop.f32.mrb[0].mxu0
    %v6320 = vadd.f32 %v6232, %v6319
    %v6321 = vpop.f32.mrb[0].mxu0
    %6322 = vdwg.mxu0
    %v6323 = vpack.c.bf16 %v6320, %v6317
    %v6325 = vunpack.c.l.b16 %v6323
    %v6326 = vunpack.c.h.b16 %v6323
    %v6327 = vpack.c.b16 %v6325, %v6325
    %v6328 = vpack.c.b16 %v6326, %v6326
    %6331 = vst [vmem:[#allocation14] sm:$0xf] %v6327
    %6332 = vst [vmem:[#allocation14 + $0x4] sm:$0xf] %v6328
    // Predicated region
    $region58: #{tpu_custom_call.1} parent=1 // pred_check
      _
    $region59: #{tpu_custom_call.1} parent=1 // pred_check_branch
      %6334 = sbr.rel (0) target = $region61
    $region60: #{tpu_custom_call.1} parent=1 // pred_region
      %s6336 = ssub.s32 128, 128
      %6337 = vsyncadd [#allocation4], %s6336
      %s6338 = sshll.u32 [#allocation14], 4
      %s6339 = int_to_ptr.vmem [resolvable:$true] %s6338
      %6344 = dma.vmem_to_hbm [thread:$0]  %s6339, 128, %s7, [#allocation4], 64, 64, 4
    $region61: #{tpu_custom_call.1} parent=1 // pred_fallthru
      _
    // Predicated region
    $region62: #{tpu_custom_call.1} parent=1 // pred_check
      _
    $region63: #{tpu_custom_call.1} parent=1 // pred_check_branch
      %6346 = sbr.rel (0) target = $region65
    $region64: #{tpu_custom_call.1} parent=1 // pred_region
      %6347 = dma.done [#allocation4], 128
    $region65: #{tpu_custom_call.1} parent=1 // pred_fallthru
      _
    %6348 = vsyncpa [#allocation3], 1
    %6349 = vsyncpa [#allocation6], 1
    %6350 = vsyncpa [#allocation9], 1
    %6351 = vsyncpa [#allocation12], 1
    %6352 = vsyncpa [#allocation4], 1

</llo_original>
